<compile_context>
chip_gen: v7x
topology: tpu7x:2x2x1
jax: 0.10.0
libtpu: 0.0.40
codegen_flags: <defaults>
</compile_context>

<pallas_src>
import jax
import jax.numpy as jnp
from jax.experimental import pallas as pl
from jax.experimental.pallas import tpu as pltpu

EPS = 1e-6


def ln_linear_kernel(x_ref, g_ref, b_ref, w_ref, bias_ref, o_ref):
    # x_ref:    (M, C)  f32 rows (constant block index -> DMA'd once, reused).
    # w_ref:    (C, TN) bf16 column slab of the pre-transposed (C, N) weight.
    # bias_ref: (1, TN) f32; o_ref: (M, TN) f32.
    x = x_ref[...]                                      # already f32
    mean = jnp.mean(x, axis=-1, keepdims=True)
    centered = x - mean
    var = jnp.mean(centered * centered, axis=-1, keepdims=True)
    xn = centered * jax.lax.rsqrt(var + EPS)
    y = xn * g_ref[...] + b_ref[...]                    # LN affine in f32

    # bf16 x bf16 -> f32 accumulate on the MXU. Weight is (C, TN): contract
    # dim 1 of y with dim 0 of w (canonical K-major RHS, no transpose emitted).
    out = jax.lax.dot_general(
        y.astype(jnp.bfloat16), w_ref[...],
        dimension_numbers=(((1,), (0,)), ((), ())),
        preferred_element_type=jnp.float32)
    o_ref[...] = (out + bias_ref[...]).astype(o_ref.dtype)


def layernorm_linear(x, gamma, beta, weight_t_bf16, bias, *, tn=1536):
    """x: (B, H, W, C) f32; weight_t_bf16: (C, N) bf16 — the PyTorch (N, C)
    Linear weight transposed + cast ONCE at parameter-prep time; bias: (N,)."""
    B, H, W, C = x.shape
    Cw, N = weight_t_bf16.shape
    assert Cw == C
    M = B * H * W

    x2d = x.reshape(M, C)
    g2d = gamma.reshape(1, C)
    b2d = beta.reshape(1, C)
    bias2d = bias.reshape(1, N)

    assert N % tn == 0
    grid = (N // tn,)   # tn=1536 -> grid=(2,): one step per TC on v7x,
                        # 2 big steps on v5e/v6e (HBM-bound, fewer steps = less
                        # fixed per-step overhead).

    # Advisory cost hint so XLA schedules neighbors around this tiny call.
    cost = pl.CostEstimate(
        flops=2 * M * C * N,
        transcendentals=M,                       # one rsqrt per row
        bytes_accessed=(M * C * 4               # x
                        + C * N * 2             # bf16 weight
                        + M * N * 4             # f32 output
                        + 2 * C * 4 + N * 4))   # gamma/beta/bias

    out2d = pl.pallas_call(
        ln_linear_kernel,
        out_shape=jax.ShapeDtypeStruct((M, N), x.dtype),
        grid_spec=pl.GridSpec(
            grid=grid,
            in_specs=[
                pl.BlockSpec((M, C), lambda j: (0, 0)),     # x rows (full)
                pl.BlockSpec((1, C), lambda j: (0, 0)),     # gamma
                pl.BlockSpec((1, C), lambda j: (0, 0)),     # beta
                pl.BlockSpec((C, tn), lambda j: (0, j)),    # weight (C, N) slab
                pl.BlockSpec((1, tn), lambda j: (0, j)),    # bias tile
            ],
            out_specs=pl.BlockSpec((M, tn), lambda j: (0, j)),
        ),
        compiler_params=pltpu.CompilerParams(
            dimension_semantics=("parallel",)),
        cost_estimate=cost,
    )(x2d, g2d, b2d, weight_t_bf16, bias2d)

    return out2d.reshape(B, H, W, N)


def reference(x, gamma, beta, weight, bias):
    xf = x.astype(jnp.float32)
    mean = jnp.mean(xf, axis=-1, keepdims=True)
    var = jnp.mean((xf - mean) ** 2, axis=-1, keepdims=True)
    xn = (xf - mean) * jax.lax.rsqrt(var + EPS)
    y = xn * gamma + beta
    return y @ weight.T.astype(jnp.float32) + bias


if __name__ == "__main__":
    key = jax.random.PRNGKey(0)
    kx, kg, kb, kw, kbi = jax.random.split(key, 5)

    B, H, W, C, N = 1, 7, 7, 768, 3072

    x = jax.random.normal(kx, (B, H, W, C), dtype=jnp.float32)
    gamma = jnp.ones((C,), jnp.float32) + 0.01 * jax.random.normal(kg, (C,), jnp.float32)
    beta = 0.01 * jax.random.normal(kb, (C,), jnp.float32)
    weight = jax.random.normal(kw, (N, C), jnp.float32) * (1.0 / jnp.sqrt(C))
    bias = 0.01 * jax.random.normal(kbi, (N,), jnp.float32)

    # One-time parameter prep (offline, outside the per-call path):
    # transpose to (C, N) and cast to bf16 — canonical MXU RHS layout,
    # half the HBM bytes, no in-kernel transpose.
    weight_t_bf16 = weight.T.astype(jnp.bfloat16)

    out = layernorm_linear(x, gamma, beta, weight_t_bf16, bias)
    out = jax.block_until_ready(out)

    ref = reference(x, gamma, beta, weight, bias)
    assert out.shape == (B, H, W, N), out.shape
    # bf16 activation/weight feed with f32 accumulation over K=768:
    # expect ~1e-2-scale deviation from the pure-f32 reference.
    assert jnp.allclose(out, ref, atol=5e-2, rtol=5e-2), float(
        jnp.max(jnp.abs(out - ref)))

    print("KERNEL_OK")
</pallas_src>

<mosaic_0001>
module attributes {stable_mosaic.version = 11 : i64} {
  func.func @ln_linear_kernel(%arg0: i32, %arg1: memref<49x768xf32, #tpu.memory_space<vmem>>, %arg2: memref<1x768xf32, #tpu.memory_space<vmem>>, %arg3: memref<1x768xf32, #tpu.memory_space<vmem>>, %arg4: memref<768x1536xbf16, #tpu.memory_space<vmem>>, %arg5: memref<1x1536xf32, #tpu.memory_space<vmem>>, %arg6: memref<49x1536xf32, #tpu.memory_space<vmem>>) attributes {dimension_semantics = [#tpu.dimension_semantics<parallel>], iteration_bounds = array<i64: 2>, scalar_prefetch = 0 : i64, scratch_operands = 0 : i64, tpu.core_type = #tpu.core_type<tc>, window_params = [{pipeline_mode = #tpu.pipeline_mode<synchronous>, transform_indices = @transform_0, window_bounds = array<i64: 49, 768>}, {pipeline_mode = #tpu.pipeline_mode<synchronous>, transform_indices = @transform_1, window_bounds = array<i64: 1, 768>}, {pipeline_mode = #tpu.pipeline_mode<synchronous>, transform_indices = @transform_2, window_bounds = array<i64: 1, 768>}, {transform_indices = @transform_3, window_bounds = array<i64: 768, 1536>}, {transform_indices = @transform_4, window_bounds = array<i64: 1, 1536>}, {transform_indices = @transform_5, window_bounds = array<i64: 49, 1536>}]} {
    %c0 = arith.constant 0 : index
    %c0_0 = arith.constant 0 : index
    %0 = vector.load %arg1[%c0, %c0_0] : memref<49x768xf32, #tpu.memory_space<vmem>>, vector<49x768xf32>
    %cst = arith.constant dense<0.000000e+00> : vector<49xf32>
    %1 = vector.multi_reduction <add>, %0, %cst [1] : vector<49x768xf32> to vector<49xf32>
    %2 = vector.shape_cast %1 : vector<49xf32> to vector<49x1xf32>
    %cst_1 = arith.constant 7.680000e+02 : f32
    %3 = vector.broadcast %cst_1 : f32 to vector<49x1xf32>
    %4 = arith.divf %2, %3 : vector<49x1xf32>
    %5 = vector.broadcast %4 : vector<49x1xf32> to vector<49x768xf32>
    %6 = arith.subf %0, %5 : vector<49x768xf32>
    %7 = arith.mulf %6, %6 : vector<49x768xf32>
    %cst_2 = arith.constant dense<0.000000e+00> : vector<49xf32>
    %8 = vector.multi_reduction <add>, %7, %cst_2 [1] : vector<49x768xf32> to vector<49xf32>
    %9 = vector.shape_cast %8 : vector<49xf32> to vector<49x1xf32>
    %cst_3 = arith.constant 7.680000e+02 : f32
    %10 = vector.broadcast %cst_3 : f32 to vector<49x1xf32>
    %11 = arith.divf %9, %10 : vector<49x1xf32>
    %cst_4 = arith.constant 9.99999997E-7 : f32
    %12 = vector.broadcast %cst_4 : f32 to vector<49x1xf32>
    %13 = arith.addf %11, %12 : vector<49x1xf32>
    %14 = math.rsqrt %13 : vector<49x1xf32>
    %15 = vector.broadcast %14 : vector<49x1xf32> to vector<49x768xf32>
    %16 = arith.mulf %6, %15 : vector<49x768xf32>
    %c0_5 = arith.constant 0 : index
    %c0_6 = arith.constant 0 : index
    %17 = vector.load %arg2[%c0_5, %c0_6] : memref<1x768xf32, #tpu.memory_space<vmem>>, vector<1x768xf32>
    %18 = vector.broadcast %17 : vector<1x768xf32> to vector<49x768xf32>
    %19 = arith.mulf %16, %18 : vector<49x768xf32>
    %c0_7 = arith.constant 0 : index
    %c0_8 = arith.constant 0 : index
    %20 = vector.load %arg3[%c0_7, %c0_8] : memref<1x768xf32, #tpu.memory_space<vmem>>, vector<1x768xf32>
    %21 = vector.broadcast %20 : vector<1x768xf32> to vector<49x768xf32>
    %22 = arith.addf %19, %21 : vector<49x768xf32>
    %23 = arith.truncf %22 : vector<49x768xf32> to vector<49x768xbf16>
    %c0_9 = arith.constant 0 : index
    %c0_10 = arith.constant 0 : index
    %24 = vector.load %arg4[%c0_9, %c0_10] : memref<768x1536xbf16, #tpu.memory_space<vmem>>, vector<768x1536xbf16>
    %cst_11 = arith.constant dense<0.000000e+00> : vector<49x1536xf32>
    %25 = tpu.matmul %23, %24, %cst_11 {dimension_numbers = #tpu.dot_dimension_numbers<[1], [0], [0], [1], [0, 0, 1, 1], [], []>} : vector<49x768xbf16>, vector<768x1536xbf16>, vector<49x1536xf32> -> vector<49x1536xf32>
    %c0_12 = arith.constant 0 : index
    %c0_13 = arith.constant 0 : index
    %26 = vector.load %arg5[%c0_12, %c0_13] : memref<1x1536xf32, #tpu.memory_space<vmem>>, vector<1x1536xf32>
    %27 = vector.broadcast %26 : vector<1x1536xf32> to vector<49x1536xf32>
    %28 = arith.addf %25, %27 : vector<49x1536xf32>
    %c0_14 = arith.constant 0 : index
    %c0_15 = arith.constant 0 : index
    %29 = vector.load %arg6[%c0_14, %c0_15] : memref<49x1536xf32, #tpu.memory_space<vmem>>, vector<49x1536xf32>
    tpu.vector_store %arg6[%c0_14, %c0_15], %28 {strides = array<i32>} : memref<49x1536xf32, #tpu.memory_space<vmem>>, vector<49x1536xf32>,
    return
  }
  func.func @transform_0(%arg0: i32) -> (i32, i32) {
    %c0_i32 = arith.constant 0 : i32
    %c0_i32_0 = arith.constant 0 : i32
    %c0_i32_1 = arith.constant 0 : i32
    return %c0_i32, %c0_i32_0 : i32, i32
  }
  func.func @transform_1(%arg0: i32) -> (i32, i32) {
    %c0_i32 = arith.constant 0 : i32
    %c0_i32_0 = arith.constant 0 : i32
    %c0_i32_1 = arith.constant 0 : i32
    return %c0_i32, %c0_i32_0 : i32, i32
  }
  func.func @transform_2(%arg0: i32) -> (i32, i32) {
    %c0_i32 = arith.constant 0 : i32
    %c0_i32_0 = arith.constant 0 : i32
    %c0_i32_1 = arith.constant 0 : i32
    return %c0_i32, %c0_i32_0 : i32, i32
  }
  func.func @transform_3(%arg0: i32) -> (i32, i32) {
    %c0_i32 = arith.constant 0 : i32
    %c0_i32_0 = arith.constant 0 : i32
    return %c0_i32, %arg0 : i32, i32
  }
  func.func @transform_4(%arg0: i32) -> (i32, i32) {
    %c0_i32 = arith.constant 0 : i32
    %c0_i32_0 = arith.constant 0 : i32
    return %c0_i32, %arg0 : i32, i32
  }
  func.func @transform_5(%arg0: i32) -> (i32, i32) {
    %c0_i32 = arith.constant 0 : i32
    %c0_i32_0 = arith.constant 0 : i32
    return %c0_i32, %arg0 : i32, i32
  }
}

</mosaic_0001>

<llo_original>
// kernel: tpu_custom_call.1
$region0: #{tpu_custom_call.1}
  #allocation0 [shape = 'u32[]', space=smem, size = 0x4, offset = 0x4, fixed_abs, tag = 'smem constant byte address 0x4 - core index']
  #allocation1 [shape = 'u32[144,128]{1,0:T(1,128)}', space=vmem, size = 0x12000, scoped, tag = 'internal scratch']
  %s0 = inlined_call_operand.hbm [shape: f32[49,768], index: 0, kind: input, shape index: {}]
  %s1 = inlined_call_operand.hbm [shape: f32[1,768], index: 1, kind: input, shape index: {}]
  %s2 = inlined_call_operand.hbm [shape: f32[1,768], index: 2, kind: input, shape index: {}]
  %s3 = inlined_call_operand.hbm [shape: bf16[768,3072], index: 3, kind: input, shape index: {}]
  %s4 = inlined_call_operand.hbm [shape: f32[1,3072], index: 4, kind: input, shape index: {}]
  %s5 = inlined_call_operand.hbm [shape: f32[49,3072], index: 5, kind: output, shape index: {}]
  %s6 = sld [smem:[#allocation0]]
  $region73: #{tpu_custom_call.1} parent=0
    _
  %s8 = ssub.s32 1, %s6
  %s9 = scalar_select 0, %s8, %s6
  $region1: #{tpu_custom_call.1} parent=0
    #allocation2 [shape = 'u8[172032]{0}', space=vmem, size = 0x2a000, scoped, tag = 'input window, operand 0, single buffered']
    #allocation3 [shape = 's32[2]{0}', space=sflag, size = 0x8, scoped, tag = 'scoped memory for tpu_custom_call.1']
    #allocation4 [shape = 's32[2]{0}', space=sflag, size = 0x8, scoped, tag = 'scoped memory for tpu_custom_call.1']
    #allocation5 [shape = 'u8[3072]{0}', space=vmem, size = 0xc00, scoped, tag = 'input window, operand 1, single buffered']
    #allocation6 [shape = 's32[1]{0}', space=sflag, size = 0x4, scoped, tag = 'scoped memory for tpu_custom_call.1']
    #allocation7 [shape = 'u8[3072]{0}', space=vmem, size = 0xc00, scoped, tag = 'input window, operand 2, single buffered']
    #allocation8 [shape = 'u8[4718592]{0}', space=vmem, size = 0x480000, scoped, tag = 'input window, operand 3']
    #allocation9 [shape = 's32[2]{0}', space=sflag, size = 0x8, scoped, tag = 'scoped memory for tpu_custom_call.1']
    #allocation10 [shape = 'u8[12288]{0}', space=vmem, size = 0x3000, scoped, tag = 'input window, operand 4']
    #allocation11 [shape = 'u8[688128]{0}', space=vmem, size = 0xa8000, scoped, tag = 'output window, operand 0']
    %10 = vsyncpa [#allocation3], 0
    %11 = vsyncpa [#allocation6], 0
    %12 = vsyncpa [#allocation9], 0
    %s13 = scalar_lea.sflag [#allocation9], 1
    %14 = vsyncpa %s13, 0
    %15 = vsyncpa [#allocation4], 0
    %s16 = scalar_lea.sflag [#allocation4], 1
    %17 = vsyncpa %s16, 0
    loop: start=0, step=1, limit=4
    $region2: #{tpu_custom_call.1} parent=1 // loop_pre_header
      _
    $region3: #{tpu_custom_call.1} parent=1 // loop_header
      %s19 = sphi 0, %s23
      %p20 = scmp.ge.s32.totalorder %s19, 4
      %s27 = sphi 0, %s27
      %s29 = sphi 0, %s27
      %s30 = sphi 0, %s29
      %s44 = sphi 0, %s30
      %s48 = sphi 0, %s48
      %s50 = sphi 0, %s48
      %s51 = sphi 0, %s50
      %s65 = sphi 0, %s51
      %s69 = sphi 0, %s69
      %s71 = sphi 0, %s69
      %s72 = sphi 0, %s71
      %s86 = sphi 0, %s72
      %s92 = sphi 0, %s94
      %s95 = sphi 0, %s92
      %s96 = sphi 0, %s95
      %s112 = sphi 0, %s96
      %s118 = sphi 0, %s120
      %s121 = sphi 0, %s118
      %s122 = sphi 0, %s121
      %s138 = sphi 0, %s122
      %s144 = sphi 0, %s146
      %s147 = sphi 0, %s144
      %s148 = sphi 0, %s147
      %s164 = sphi 0, %s148
    $region4: #{tpu_custom_call.1} parent=1 // loop_header_branch
      %22 = sbr.rel (%p20) target = $region8
    $region5: #{tpu_custom_call.1} parent=1 // loop_body
      %s24 = ssub.s32 %s19, 1
      %s25 = ssub.s32 %s19, 2
      %s26 = sadd.s32 %s19, 1
      %s28 = sadd.s32 %s27, 1
      %p31 = scmp.eq.s32.totalorder %s19, 1
      %p32 = scmp.ne.s32.totalorder %s27, %s29
      %p33 = scmp.eq.s32.totalorder %s19, 0
      %p34 = por %p32, %p33
      %p35 = scmp.ne.s32.totalorder %s27, %s29
      %p36 = scmp.eq.s32.totalorder %s24, 1
      %p37 = por %p35, %p36
      %p38 = scmp.ne.s32.totalorder %s29, %s30
      %p39 = scmp.eq.s32.totalorder %s24, 0
      %p40 = por %p38, %p39
      %p41 = scmp.ne.s32.totalorder %s29, %s30
      %p42 = scmp.eq.s32.totalorder %s25, 1
      %p43 = por %p41, %p42
      %p45 = scmp.ne.s32.totalorder %s30, %s44
      %p46 = scmp.eq.s32.totalorder %s25, 0
      %p47 = por %p45, %p46
      %s49 = sadd.s32 %s48, 1
      %p52 = scmp.eq.s32.totalorder %s19, 1
      %p53 = scmp.ne.s32.totalorder %s48, %s50
      %p54 = scmp.eq.s32.totalorder %s19, 0
      %p55 = por %p53, %p54
      %p56 = scmp.ne.s32.totalorder %s48, %s50
      %p57 = scmp.eq.s32.totalorder %s24, 1
      %p58 = por %p56, %p57
      %p59 = scmp.ne.s32.totalorder %s50, %s51
      %p60 = scmp.eq.s32.totalorder %s24, 0
      %p61 = por %p59, %p60
      %p62 = scmp.ne.s32.totalorder %s50, %s51
      %p63 = scmp.eq.s32.totalorder %s25, 1
      %p64 = por %p62, %p63
      %p66 = scmp.ne.s32.totalorder %s51, %s65
      %p67 = scmp.eq.s32.totalorder %s25, 0
      %p68 = por %p66, %p67
      %s70 = sadd.s32 %s69, 1
      %p73 = scmp.eq.s32.totalorder %s19, 1
      %p74 = scmp.ne.s32.totalorder %s69, %s71
      %p75 = scmp.eq.s32.totalorder %s19, 0
      %p76 = por %p74, %p75
      %p77 = scmp.ne.s32.totalorder %s69, %s71
      %p78 = scmp.eq.s32.totalorder %s24, 1
      %p79 = por %p77, %p78
      %p80 = scmp.ne.s32.totalorder %s71, %s72
      %p81 = scmp.eq.s32.totalorder %s24, 0
      %p82 = por %p80, %p81
      %p83 = scmp.ne.s32.totalorder %s71, %s72
      %p84 = scmp.eq.s32.totalorder %s25, 1
      %p85 = por %p83, %p84
      %p87 = scmp.ne.s32.totalorder %s72, %s86
      %p88 = scmp.eq.s32.totalorder %s25, 0
      %p89 = por %p87, %p88
      %s90 = ssub.s32 %s19, %s26
      %p91 = scmp.eq.s32.totalorder %s90, 0
      %s93 = sadd.s32 %s92, 1
      %s94 = scalar_select %p91, %s92, %s93
      %p97 = pneg %p91
      %p98 = scmp.eq.s32.totalorder %s19, 1
      %p99 = por %p97, %p98
      %p100 = scmp.ne.s32.totalorder %s92, %s95
      %p101 = scmp.eq.s32.totalorder %s19, 0
      %p102 = por %p100, %p101
      %p103 = scmp.ne.s32.totalorder %s92, %s95
      %p104 = scmp.eq.s32.totalorder %s24, 1
      %p105 = por %p103, %p104
      %p106 = scmp.ne.s32.totalorder %s95, %s96
      %p107 = scmp.eq.s32.totalorder %s24, 0
      %p108 = por %p106, %p107
      %p109 = scmp.ne.s32.totalorder %s95, %s96
      %p110 = scmp.eq.s32.totalorder %s25, 1
      %p111 = por %p109, %p110
      %p113 = scmp.ne.s32.totalorder %s96, %s112
      %p114 = scmp.eq.s32.totalorder %s25, 0
      %p115 = por %p113, %p114
      %s116 = ssub.s32 %s19, %s26
      %p117 = scmp.eq.s32.totalorder %s116, 0
      %s119 = sadd.s32 %s118, 1
      %s120 = scalar_select %p117, %s118, %s119
      %p123 = pneg %p117
      %p124 = scmp.eq.s32.totalorder %s19, 1
      %p125 = por %p123, %p124
      %p126 = scmp.ne.s32.totalorder %s118, %s121
      %p127 = scmp.eq.s32.totalorder %s19, 0
      %p128 = por %p126, %p127
      %p129 = scmp.ne.s32.totalorder %s118, %s121
      %p130 = scmp.eq.s32.totalorder %s24, 1
      %p131 = por %p129, %p130
      %p132 = scmp.ne.s32.totalorder %s121, %s122
      %p133 = scmp.eq.s32.totalorder %s24, 0
      %p134 = por %p132, %p133
      %p135 = scmp.ne.s32.totalorder %s121, %s122
      %p136 = scmp.eq.s32.totalorder %s25, 1
      %p137 = por %p135, %p136
      %p139 = scmp.ne.s32.totalorder %s122, %s138
      %p140 = scmp.eq.s32.totalorder %s25, 0
      %p141 = por %p139, %p140
      %s142 = ssub.s32 %s19, %s26
      %p143 = scmp.eq.s32.totalorder %s142, 0
      %s145 = sadd.s32 %s144, 1
      %s146 = scalar_select %p143, %s144, %s145
      %p149 = pneg %p143
      %p150 = scmp.eq.s32.totalorder %s19, 1
      %p151 = por %p149, %p150
      %p152 = scmp.ne.s32.totalorder %s144, %s147
      %p153 = scmp.eq.s32.totalorder %s19, 0
      %p154 = por %p152, %p153
      %p155 = scmp.ne.s32.totalorder %s144, %s147
      %p156 = scmp.eq.s32.totalorder %s24, 1
      %p157 = por %p155, %p156
      %p158 = scmp.ne.s32.totalorder %s147, %s148
      %p159 = scmp.eq.s32.totalorder %s24, 0
      %p160 = por %p158, %p159
      %p161 = scmp.ne.s32.totalorder %s147, %s148
      %p162 = scmp.eq.s32.totalorder %s25, 1
      %p163 = por %p161, %p162
      %p165 = scmp.ne.s32.totalorder %s148, %s164
      %p166 = scmp.eq.s32.totalorder %s25, 0
      %p167 = por %p165, %p166
      %p168 = scmp.le.s32.totalorder 1, %s19
      %p169 = scmp.lt.s32.totalorder %s19, 3
      %p170 = pnand %p168, %p169
      %p171 = pneg %p170
      // Predicated region
      $region9: #{tpu_custom_call.1} parent=5 // pred_check
        _
      $region10: #{tpu_custom_call.1} parent=5 // pred_check_branch
        %173 = sbr.rel (%p170) target = $region12
      $region11: #{tpu_custom_call.1} parent=5 // pred_region
        %s174 = ssub.s32 %s19, 1
        // Predicated region
        $region13: #{tpu_custom_call.1} parent=11 // pred_check
          %p175 = pneg %p40
        $region14: #{tpu_custom_call.1} parent=11 // pred_check_branch
          %177 = sbr.rel (%p175) target = $region16
        $region15: #{tpu_custom_call.1} parent=11 // pred_region
          %s179 = ssub.s32 5376, 5376
          %180 = vsyncadd [#allocation3], %s179
          %s181 = sshll.u32 [#allocation2], 4
          %s182 = int_to_ptr.vmem [resolvable:$true] %s181
          %187 = dma.hbm_to_vmem [thread:$0]  %s0, 5376, %s182, [#allocation3], 768, 768, 48
        $region16: #{tpu_custom_call.1} parent=11 // pred_fallthru
          _
        // Predicated region
        $region17: #{tpu_custom_call.1} parent=11 // pred_check
          %p188 = pneg %p61
        $region18: #{tpu_custom_call.1} parent=11 // pred_check_branch
          %190 = sbr.rel (%p188) target = $region20
        $region19: #{tpu_custom_call.1} parent=11 // pred_region
          %s192 = ssub.s32 96, 96
          %193 = vsyncadd [#allocation6], %s192
          %s195 = sshll.u32 [#allocation5], 4
          %s196 = int_to_ptr.vmem [resolvable:$true] %s195
          %198 = dma.hbm_to_vmem [thread:$0]  %s1, 96, %s196, [#allocation6]
        $region20: #{tpu_custom_call.1} parent=11 // pred_fallthru
          _
        // Predicated region
        $region21: #{tpu_custom_call.1} parent=11 // pred_check
          %p199 = pneg %p82
        $region22: #{tpu_custom_call.1} parent=11 // pred_check_branch
          %201 = sbr.rel (%p199) target = $region24
        $region23: #{tpu_custom_call.1} parent=11 // pred_region
          %s203 = ssub.s32 96, 96
          %204 = vsyncadd [#allocation6], %s203
          %s206 = sshll.u32 [#allocation7], 4
          %s207 = int_to_ptr.vmem [resolvable:$true] %s206
          %209 = dma.hbm_to_vmem [thread:$0]  %s2, 96, %s207, [#allocation6]
        $region24: #{tpu_custom_call.1} parent=11 // pred_fallthru
          _
      $region12: #{tpu_custom_call.1} parent=5 // pred_fallthru
        _
      %p210 = scmp.lt.s32.totalorder %s19, 2
      // Predicated region
      $region25: #{tpu_custom_call.1} parent=5 // pred_check
        %p211 = pneg %p210
      $region26: #{tpu_custom_call.1} parent=5 // pred_check_branch
        %213 = sbr.rel (%p211) target = $region28
      $region27: #{tpu_custom_call.1} parent=5 // pred_region
        // Predicated region
        $region29: #{tpu_custom_call.1} parent=27 // pred_check
          %p214 = pneg %p102
        $region30: #{tpu_custom_call.1} parent=27 // pred_check_branch
          %216 = sbr.rel (%p214) target = $region32
        $region31: #{tpu_custom_call.1} parent=27 // pred_region
          %s217 = sand.u32 %s19, 1
          %s218 = scalar_lea.sflag [#allocation9], %s217
          %s219 = sand.u32 %s92, 1
          %s220 = smul.addr %s219, 4608
          %s221 = scalar_lea.vmem [#allocation8], %s220
          %s222 = smul.u32 12, %s19
          %s224 = ssub.s32 73728, 73728
          %225 = vsyncadd %s218, %s224
          %s226 = smul.addr %s222, 64
          %s227 = scalar_lea.hbm %s3, %s226
          %s228 = sshll.u32 %s221, 4
          %s229 = int_to_ptr.vmem [resolvable:$true] %s228
          %234 = dma.hbm_to_vmem [thread:$0]  %s227, 73728, %s229, %s218, 1536, 768, 48
        $region32: #{tpu_custom_call.1} parent=27 // pred_fallthru
          _
        // Predicated region
        $region33: #{tpu_custom_call.1} parent=27 // pred_check
          %p235 = pneg %p128
        $region34: #{tpu_custom_call.1} parent=27 // pred_check_branch
          %237 = sbr.rel (%p235) target = $region36
        $region35: #{tpu_custom_call.1} parent=27 // pred_region
          %s238 = sand.u32 %s19, 1
          %s239 = scalar_lea.sflag [#allocation9], %s238
          %s240 = sand.u32 %s118, 1
          %s241 = smul.addr %s240, 12
          %s242 = scalar_lea.vmem [#allocation10], %s241
          %s243 = smul.u32 12, %s19
          %s245 = ssub.s32 192, 192
          %246 = vsyncadd %s239, %s245
          %s247 = smul.addr %s243, 16
          %s248 = scalar_lea.hbm %s4, %s247
          %s250 = sshll.u32 %s242, 4
          %s251 = int_to_ptr.vmem [resolvable:$true] %s250
          %253 = dma.hbm_to_vmem [thread:$0]  %s248, 192, %s251, %s239
        $region36: #{tpu_custom_call.1} parent=27 // pred_fallthru
          _
      $region28: #{tpu_custom_call.1} parent=5 // pred_fallthru
        _
      %p254 = scmp.le.s32.totalorder 1, %s19
      %p255 = scmp.lt.s32.totalorder %s19, 3
      %p256 = pnand %p254, %p255
      %p257 = pneg %p256
      // Predicated region
      $region37: #{tpu_custom_call.1} parent=5 // pred_check
        _
      $region38: #{tpu_custom_call.1} parent=5 // pred_check_branch
        %259 = sbr.rel (%p256) target = $region40
      $region39: #{tpu_custom_call.1} parent=5 // pred_region
        %s260 = ssub.s32 %s19, 1
        // Predicated region
        $region41: #{tpu_custom_call.1} parent=39 // pred_check
          %p261 = pneg %p40
        $region42: #{tpu_custom_call.1} parent=39 // pred_check_branch
          %263 = sbr.rel (%p261) target = $region44
        $region43: #{tpu_custom_call.1} parent=39 // pred_region
          %264 = dma.done [#allocation3], 5376
        $region44: #{tpu_custom_call.1} parent=39 // pred_fallthru
          _
        // Predicated region
        $region45: #{tpu_custom_call.1} parent=39 // pred_check
          %p265 = pneg %p61
        $region46: #{tpu_custom_call.1} parent=39 // pred_check_branch
          %267 = sbr.rel (%p265) target = $region48
        $region47: #{tpu_custom_call.1} parent=39 // pred_region
          %268 = dma.done [#allocation6], 96
        $region48: #{tpu_custom_call.1} parent=39 // pred_fallthru
          _
        // Predicated region
        $region49: #{tpu_custom_call.1} parent=39 // pred_check
          %p269 = pneg %p82
        $region50: #{tpu_custom_call.1} parent=39 // pred_check_branch
          %271 = sbr.rel (%p269) target = $region52
        $region51: #{tpu_custom_call.1} parent=39 // pred_region
          %272 = dma.done [#allocation6], 96
        $region52: #{tpu_custom_call.1} parent=39 // pred_fallthru
          _
        %s273 = sand.u32 %s24, 1
        %s274 = scalar_lea.sflag [#allocation9], %s273
        %s275 = sand.u32 %s95, 1
        %s276 = smul.addr %s275, 4608
        %s277 = scalar_lea.vmem [#allocation8], %s276
        // Predicated region
        $region53: #{tpu_custom_call.1} parent=39 // pred_check
          %p278 = pneg %p108
        $region54: #{tpu_custom_call.1} parent=39 // pred_check_branch
          %280 = sbr.rel (%p278) target = $region56
        $region55: #{tpu_custom_call.1} parent=39 // pred_region
          %281 = dma.done %s274, 73728
        $region56: #{tpu_custom_call.1} parent=39 // pred_fallthru
          _
        %s282 = sand.u32 %s24, 1
        %s283 = scalar_lea.sflag [#allocation9], %s282
        %s284 = sand.u32 %s121, 1
        %s285 = smul.addr %s284, 12
        %s286 = scalar_lea.vmem [#allocation10], %s285
        // Predicated region
        $region57: #{tpu_custom_call.1} parent=39 // pred_check
          %p287 = pneg %p134
        $region58: #{tpu_custom_call.1} parent=39 // pred_check_branch
          %289 = sbr.rel (%p287) target = $region60
        $region59: #{tpu_custom_call.1} parent=39 // pred_region
          %290 = dma.done %s283, 192
        $region60: #{tpu_custom_call.1} parent=39 // pred_fallthru
          _
        %p291 = pneg %p40
        %p292 = pneg %p37
        %p293 = pneg %p61
        %p294 = pneg %p58
        %p295 = pneg %p82
        %p296 = pneg %p79
        %s297 = sand.u32 %s24, 1
        %s298 = scalar_lea.sflag [#allocation9], %s297
        %s299 = sand.u32 %s95, 1
        %s300 = smul.addr %s299, 4608
        %s301 = scalar_lea.vmem [#allocation8], %s300
        %p302 = pneg %p108
        %p303 = pneg %p105
        %s304 = sand.u32 %s24, 1
        %s305 = scalar_lea.sflag [#allocation9], %s304
        %s306 = sand.u32 %s121, 1
        %s307 = smul.addr %s306, 12
        %s308 = scalar_lea.vmem [#allocation10], %s307
        %p309 = pneg %p134
        %p310 = pneg %p131
        %p311 = pneg %p160
        %p312 = pneg %p157
        %s313 = sand.u32 %s147, 1
        %s314 = scalar_lea.sflag [#allocation4], %s313
        %s315 = sand.u32 %s147, 1
        %s316 = smul.addr %s315, 672
        %s317 = scalar_lea.vmem [#allocation11], %s316
        %s318 = smul.u32 12, %s24
        %s319 = smul.u32 12, %s24
        %s320 = smul.u32 12, %s24
        %v321 = vld [vmem:[#allocation2] sm:$0xff]
        %v322 = vld [vmem:[#allocation2 + $0x8] sm:$0xff]
        %v323 = vld [vmem:[#allocation2 + $0x10] sm:$0xff]
        %v324 = vld [vmem:[#allocation2 + $0x18] sm:$0xff]
        %v325 = vld [vmem:[#allocation2 + $0x20] sm:$0xff]
        %v326 = vld [vmem:[#allocation2 + $0x28] sm:$0xff]
        %v327 = vld [vmem:[#allocation2 + $0x30] sm:$0xff]
        %v328 = vld [vmem:[#allocation2 + $0x38] sm:$0xff]
        %v329 = vld [vmem:[#allocation2 + $0x40] sm:$0xff]
        %v330 = vld [vmem:[#allocation2 + $0x48] sm:$0xff]
        %v331 = vld [vmem:[#allocation2 + $0x50] sm:$0xff]
        %v332 = vld [vmem:[#allocation2 + $0x58] sm:$0xff]
        %v333 = vld [vmem:[#allocation2 + $0x60] sm:$0xff]
        %v334 = vld [vmem:[#allocation2 + $0x68] sm:$0xff]
        %v335 = vld [vmem:[#allocation2 + $0x70] sm:$0xff]
        %v336 = vld [vmem:[#allocation2 + $0x78] sm:$0xff]
        %v337 = vld [vmem:[#allocation2 + $0x80] sm:$0xff]
        %v338 = vld [vmem:[#allocation2 + $0x88] sm:$0xff]
        %v339 = vld [vmem:[#allocation2 + $0x90] sm:$0xff]
        %v340 = vld [vmem:[#allocation2 + $0x98] sm:$0xff]
        %v341 = vld [vmem:[#allocation2 + $0xa0] sm:$0xff]
        %v342 = vld [vmem:[#allocation2 + $0xa8] sm:$0xff]
        %v343 = vld [vmem:[#allocation2 + $0xb0] sm:$0xff]
        %v344 = vld [vmem:[#allocation2 + $0xb8] sm:$0xff]
        %v345 = vld [vmem:[#allocation2 + $0xc0] sm:$0xff]
        %v346 = vld [vmem:[#allocation2 + $0xc8] sm:$0xff]
        %v347 = vld [vmem:[#allocation2 + $0xd0] sm:$0xff]
        %v348 = vld [vmem:[#allocation2 + $0xd8] sm:$0xff]
        %v349 = vld [vmem:[#allocation2 + $0xe0] sm:$0xff]
        %v350 = vld [vmem:[#allocation2 + $0xe8] sm:$0xff]
        %v351 = vld [vmem:[#allocation2 + $0xf0] sm:$0xff]
        %v352 = vld [vmem:[#allocation2 + $0xf8] sm:$0xff]
        %v353 = vld [vmem:[#allocation2 + $0x100] sm:$0xff]
        %v354 = vld [vmem:[#allocation2 + $0x108] sm:$0xff]
        %v355 = vld [vmem:[#allocation2 + $0x110] sm:$0xff]
        %v356 = vld [vmem:[#allocation2 + $0x118] sm:$0xff]
        %v357 = vld [vmem:[#allocation2 + $0x120] sm:$0x1]
        %v358 = vld [vmem:[#allocation2 + $0x128] sm:$0x1]
        %v359 = vld [vmem:[#allocation2 + $0x130] sm:$0x1]
        %v360 = vld [vmem:[#allocation2 + $0x138] sm:$0x1]
        %v361 = vld [vmem:[#allocation2 + $0x140] sm:$0x1]
        %v362 = vld [vmem:[#allocation2 + $0x148] sm:$0x1]
        %v363 = vadd.f32 %v321, %v322
        %v364 = vadd.f32 %v363, %v323
        %v365 = vadd.f32 %v364, %v324
        %v366 = vadd.f32 %v365, %v325
        %v367 = vadd.f32 %v366, %v326
        %368 = vadd.xlane.f32.xlu0 %v367
        %v369 = vpop.xlane.xlu0 %368
        %v370 = vadd.f32 %v327, %v328
        %v371 = vadd.f32 %v370, %v329
        %v372 = vadd.f32 %v371, %v330
        %v373 = vadd.f32 %v372, %v331
        %v374 = vadd.f32 %v373, %v332
        %375 = vadd.xlane.f32.xlu0 %v374
        %v376 = vpop.xlane.xlu0 %375
        %v377 = vadd.f32 %v333, %v334
        %v378 = vadd.f32 %v377, %v335
        %v379 = vadd.f32 %v378, %v336
        %v380 = vadd.f32 %v379, %v337
        %v381 = vadd.f32 %v380, %v338
        %382 = vadd.xlane.f32.xlu0 %v381
        %v383 = vpop.xlane.xlu0 %382
        %v384 = vadd.f32 %v339, %v340
        %v385 = vadd.f32 %v384, %v341
        %v386 = vadd.f32 %v385, %v342
        %v387 = vadd.f32 %v386, %v343
        %v388 = vadd.f32 %v387, %v344
        %389 = vadd.xlane.f32.xlu0 %v388
        %v390 = vpop.xlane.xlu0 %389
        %v391 = vadd.f32 %v345, %v346
        %v392 = vadd.f32 %v391, %v347
        %v393 = vadd.f32 %v392, %v348
        %v394 = vadd.f32 %v393, %v349
        %v395 = vadd.f32 %v394, %v350
        %396 = vadd.xlane.f32.xlu0 %v395
        %v397 = vpop.xlane.xlu0 %396
        %v398 = vadd.f32 %v351, %v352
        %v399 = vadd.f32 %v398, %v353
        %v400 = vadd.f32 %v399, %v354
        %v401 = vadd.f32 %v400, %v355
        %v402 = vadd.f32 %v401, %v356
        %403 = vadd.xlane.f32.xlu0 %v402
        %v404 = vpop.xlane.xlu0 %403
        %vm405 = vcmask 1040384
        %v406 = vsel %vm405, %v357, 0.0
        %v407 = vsel %vm405, %v358, 0.0
        %v408 = vadd.f32 %v406, %v407
        %v409 = vsel %vm405, %v359, 0.0
        %v410 = vadd.f32 %v408, %v409
        %v411 = vsel %vm405, %v360, 0.0
        %v412 = vadd.f32 %v410, %v411
        %v413 = vsel %vm405, %v361, 0.0
        %v414 = vadd.f32 %v412, %v413
        %v415 = vsel %vm405, %v362, 0.0
        %v416 = vadd.f32 %v414, %v415
        %417 = vadd.xlane.f32.xlu0 %v416
        %v418 = vpop.xlane.xlu0 %417
        %v419 = vrcp.pop 768.0
        %v420 = vmul.f32 %v369, %v419
        %v421 = vmul.f32 %v376, %v419
        %v422 = vmul.f32 %v383, %v419
        %v423 = vmul.f32 %v390, %v419
        %v424 = vmul.f32 %v397, %v419
        %v425 = vmul.f32 %v404, %v419
        %v426 = vmul.f32 %v418, %v419
        %v427 = vsub.f32 %v321, %v420
        %v428 = vsub.f32 %v322, %v420
        %v429 = vsub.f32 %v323, %v420
        %v430 = vsub.f32 %v324, %v420
        %v431 = vsub.f32 %v325, %v420
        %v432 = vsub.f32 %v326, %v420
        %v433 = vsub.f32 %v327, %v421
        %v434 = vsub.f32 %v328, %v421
        %v435 = vsub.f32 %v329, %v421
        %v436 = vsub.f32 %v330, %v421
        %v437 = vsub.f32 %v331, %v421
        %v438 = vsub.f32 %v332, %v421
        %v439 = vsub.f32 %v333, %v422
        %v440 = vsub.f32 %v334, %v422
        %v441 = vsub.f32 %v335, %v422
        %v442 = vsub.f32 %v336, %v422
        %v443 = vsub.f32 %v337, %v422
        %v444 = vsub.f32 %v338, %v422
        %v445 = vsub.f32 %v339, %v423
        %v446 = vsub.f32 %v340, %v423
        %v447 = vsub.f32 %v341, %v423
        %v448 = vsub.f32 %v342, %v423
        %v449 = vsub.f32 %v343, %v423
        %v450 = vsub.f32 %v344, %v423
        %v451 = vsub.f32 %v345, %v424
        %v452 = vsub.f32 %v346, %v424
        %v453 = vsub.f32 %v347, %v424
        %v454 = vsub.f32 %v348, %v424
        %v455 = vsub.f32 %v349, %v424
        %v456 = vsub.f32 %v350, %v424
        %v457 = vsub.f32 %v351, %v425
        %v458 = vsub.f32 %v352, %v425
        %v459 = vsub.f32 %v353, %v425
        %v460 = vsub.f32 %v354, %v425
        %v461 = vsub.f32 %v355, %v425
        %v462 = vsub.f32 %v356, %v425
        %v463 = vsub.f32 %v357, %v426
        %v464 = vsub.f32 %v358, %v426
        %v465 = vsub.f32 %v359, %v426
        %v466 = vsub.f32 %v360, %v426
        %v467 = vsub.f32 %v361, %v426
        %v468 = vsub.f32 %v362, %v426
        %v469 = vmul.f32 %v427, %v427
        %v470 = vmul.f32 %v428, %v428
        %v471 = vmul.f32 %v429, %v429
        %v472 = vmul.f32 %v430, %v430
        %v473 = vmul.f32 %v431, %v431
        %v474 = vmul.f32 %v432, %v432
        %v475 = vmul.f32 %v433, %v433
        %v476 = vmul.f32 %v434, %v434
        %v477 = vmul.f32 %v435, %v435
        %v478 = vmul.f32 %v436, %v436
        %v479 = vmul.f32 %v437, %v437
        %v480 = vmul.f32 %v438, %v438
        %v481 = vmul.f32 %v439, %v439
        %v482 = vmul.f32 %v440, %v440
        %v483 = vmul.f32 %v441, %v441
        %v484 = vmul.f32 %v442, %v442
        %v485 = vmul.f32 %v443, %v443
        %v486 = vmul.f32 %v444, %v444
        %v487 = vmul.f32 %v445, %v445
        %v488 = vmul.f32 %v446, %v446
        %v489 = vmul.f32 %v447, %v447
        %v490 = vmul.f32 %v448, %v448
        %v491 = vmul.f32 %v449, %v449
        %v492 = vmul.f32 %v450, %v450
        %v493 = vmul.f32 %v451, %v451
        %v494 = vmul.f32 %v452, %v452
        %v495 = vmul.f32 %v453, %v453
        %v496 = vmul.f32 %v454, %v454
        %v497 = vmul.f32 %v455, %v455
        %v498 = vmul.f32 %v456, %v456
        %v499 = vmul.f32 %v457, %v457
        %v500 = vmul.f32 %v458, %v458
        %v501 = vmul.f32 %v459, %v459
        %v502 = vmul.f32 %v460, %v460
        %v503 = vmul.f32 %v461, %v461
        %v504 = vmul.f32 %v462, %v462
        %v505 = vmul.f32 %v463, %v463
        %v506 = vmul.f32 %v464, %v464
        %v507 = vmul.f32 %v465, %v465
        %v508 = vmul.f32 %v466, %v466
        %v509 = vmul.f32 %v467, %v467
        %v510 = vmul.f32 %v468, %v468
        %v511 = vadd.f32 %v469, %v470
        %v512 = vadd.f32 %v511, %v471
        %v513 = vadd.f32 %v512, %v472
        %v514 = vadd.f32 %v513, %v473
        %v515 = vadd.f32 %v514, %v474
        %516 = vadd.xlane.f32.xlu0 %v515
        %v517 = vpop.xlane.xlu0 %516
        %v518 = vadd.f32 %v475, %v476
        %v519 = vadd.f32 %v518, %v477
        %v520 = vadd.f32 %v519, %v478
        %v521 = vadd.f32 %v520, %v479
        %v522 = vadd.f32 %v521, %v480
        %523 = vadd.xlane.f32.xlu0 %v522
        %v524 = vpop.xlane.xlu0 %523
        %v525 = vadd.f32 %v481, %v482
        %v526 = vadd.f32 %v525, %v483
        %v527 = vadd.f32 %v526, %v484
        %v528 = vadd.f32 %v527, %v485
        %v529 = vadd.f32 %v528, %v486
        %530 = vadd.xlane.f32.xlu0 %v529
        %v531 = vpop.xlane.xlu0 %530
        %v532 = vadd.f32 %v487, %v488
        %v533 = vadd.f32 %v532, %v489
        %v534 = vadd.f32 %v533, %v490
        %v535 = vadd.f32 %v534, %v491
        %v536 = vadd.f32 %v535, %v492
        %537 = vadd.xlane.f32.xlu0 %v536
        %v538 = vpop.xlane.xlu0 %537
        %v539 = vadd.f32 %v493, %v494
        %v540 = vadd.f32 %v539, %v495
        %v541 = vadd.f32 %v540, %v496
        %v542 = vadd.f32 %v541, %v497
        %v543 = vadd.f32 %v542, %v498
        %544 = vadd.xlane.f32.xlu0 %v543
        %v545 = vpop.xlane.xlu0 %544
        %v546 = vadd.f32 %v499, %v500
        %v547 = vadd.f32 %v546, %v501
        %v548 = vadd.f32 %v547, %v502
        %v549 = vadd.f32 %v548, %v503
        %v550 = vadd.f32 %v549, %v504
        %551 = vadd.xlane.f32.xlu0 %v550
        %v552 = vpop.xlane.xlu0 %551
        %v553 = vsel %vm405, %v505, 0.0
        %v554 = vsel %vm405, %v506, 0.0
        %v555 = vadd.f32 %v553, %v554
        %v556 = vsel %vm405, %v507, 0.0
        %v557 = vadd.f32 %v555, %v556
        %v558 = vsel %vm405, %v508, 0.0
        %v559 = vadd.f32 %v557, %v558
        %v560 = vsel %vm405, %v509, 0.0
        %v561 = vadd.f32 %v559, %v560
        %v562 = vsel %vm405, %v510, 0.0
        %v563 = vadd.f32 %v561, %v562
        %564 = vadd.xlane.f32.xlu0 %v563
        %v565 = vpop.xlane.xlu0 %564
        %v566 = vmul.f32 %v517, %v419
        %v567 = vmul.f32 %v524, %v419
        %v568 = vmul.f32 %v531, %v419
        %v569 = vmul.f32 %v538, %v419
        %v570 = vmul.f32 %v545, %v419
        %v571 = vmul.f32 %v552, %v419
        %v572 = vmul.f32 %v565, %v419
        %v573 = vadd.f32 %v566, 1e-06
        %v574 = vadd.f32 %v567, 1e-06
        %v575 = vadd.f32 %v568, 1e-06
        %v576 = vadd.f32 %v569, 1e-06
        %v577 = vadd.f32 %v570, 1e-06
        %v578 = vadd.f32 %v571, 1e-06
        %v579 = vadd.f32 %v572, 1e-06
        %v580 = vrsqrt.pop %v573
        %v581 = vrsqrt.pop %v574
        %v582 = vrsqrt.pop %v575
        %v583 = vrsqrt.pop %v576
        %v584 = vrsqrt.pop %v577
        %v585 = vrsqrt.pop %v578
        %v586 = vrsqrt.pop %v579
        %v587 = vmul.f32 %v427, %v580
        %v588 = vmul.f32 %v428, %v580
        %v589 = vmul.f32 %v429, %v580
        %v590 = vmul.f32 %v430, %v580
        %v591 = vmul.f32 %v431, %v580
        %v592 = vmul.f32 %v432, %v580
        %v593 = vmul.f32 %v433, %v581
        %v594 = vmul.f32 %v434, %v581
        %v595 = vmul.f32 %v435, %v581
        %v596 = vmul.f32 %v436, %v581
        %v597 = vmul.f32 %v437, %v581
        %v598 = vmul.f32 %v438, %v581
        %v599 = vmul.f32 %v439, %v582
        %v600 = vmul.f32 %v440, %v582
        %v601 = vmul.f32 %v441, %v582
        %v602 = vmul.f32 %v442, %v582
        %v603 = vmul.f32 %v443, %v582
        %v604 = vmul.f32 %v444, %v582
        %v605 = vmul.f32 %v445, %v583
        %v606 = vmul.f32 %v446, %v583
        %v607 = vmul.f32 %v447, %v583
        %v608 = vmul.f32 %v448, %v583
        %v609 = vmul.f32 %v449, %v583
        %v610 = vmul.f32 %v450, %v583
        %v611 = vmul.f32 %v451, %v584
        %v612 = vmul.f32 %v452, %v584
        %v613 = vmul.f32 %v453, %v584
        %v614 = vmul.f32 %v454, %v584
        %v615 = vmul.f32 %v455, %v584
        %v616 = vmul.f32 %v456, %v584
        %v617 = vmul.f32 %v457, %v585
        %v618 = vmul.f32 %v458, %v585
        %v619 = vmul.f32 %v459, %v585
        %v620 = vmul.f32 %v460, %v585
        %v621 = vmul.f32 %v461, %v585
        %v622 = vmul.f32 %v462, %v585
        %v623 = vmul.f32 %v463, %v586
        %v624 = vmul.f32 %v464, %v586
        %v625 = vmul.f32 %v465, %v586
        %v626 = vmul.f32 %v466, %v586
        %v627 = vmul.f32 %v467, %v586
        %v628 = vmul.f32 %v468, %v586
        %v629 = vld [vmem:[#allocation5] sm:$0x3f]
        %v631 = vlaneseq
        %v632 = vshrl.u32 %v631, 7
        %v633 = vsub.s32 0, %v632
        %v634 = vrot.slane %v629, %v633
        %v635 = vlaneseq
        %v636 = vshrl.u32 %v635, 7
        %v637 = vsub.s32 1, %v636
        %v638 = vrot.slane %v629, %v637
        %v639 = vlaneseq
        %v640 = vshrl.u32 %v639, 7
        %v641 = vsub.s32 2, %v640
        %v642 = vrot.slane %v629, %v641
        %v643 = vlaneseq
        %v644 = vshrl.u32 %v643, 7
        %v645 = vsub.s32 3, %v644
        %v646 = vrot.slane %v629, %v645
        %v647 = vlaneseq
        %v648 = vshrl.u32 %v647, 7
        %v649 = vsub.s32 4, %v648
        %v650 = vrot.slane %v629, %v649
        %v651 = vlaneseq
        %v652 = vshrl.u32 %v651, 7
        %v653 = vsub.s32 5, %v652
        %v654 = vrot.slane %v629, %v653
        %v661 = vmul.f32 %v587, %v634
        %v662 = vmul.f32 %v588, %v638
        %v663 = vmul.f32 %v589, %v642
        %v664 = vmul.f32 %v590, %v646
        %v665 = vmul.f32 %v591, %v650
        %v666 = vmul.f32 %v592, %v654
        %v667 = vmul.f32 %v593, %v634
        %v668 = vmul.f32 %v594, %v638
        %v669 = vmul.f32 %v595, %v642
        %v670 = vmul.f32 %v596, %v646
        %v671 = vmul.f32 %v597, %v650
        %v672 = vmul.f32 %v598, %v654
        %v673 = vmul.f32 %v599, %v634
        %v674 = vmul.f32 %v600, %v638
        %v675 = vmul.f32 %v601, %v642
        %v676 = vmul.f32 %v602, %v646
        %v677 = vmul.f32 %v603, %v650
        %v678 = vmul.f32 %v604, %v654
        %v679 = vmul.f32 %v605, %v634
        %v680 = vmul.f32 %v606, %v638
        %v681 = vmul.f32 %v607, %v642
        %v682 = vmul.f32 %v608, %v646
        %v683 = vmul.f32 %v609, %v650
        %v684 = vmul.f32 %v610, %v654
        %v685 = vmul.f32 %v611, %v634
        %v686 = vmul.f32 %v612, %v638
        %v687 = vmul.f32 %v613, %v642
        %v688 = vmul.f32 %v614, %v646
        %v689 = vmul.f32 %v615, %v650
        %v690 = vmul.f32 %v616, %v654
        %v691 = vmul.f32 %v617, %v634
        %v692 = vmul.f32 %v618, %v638
        %v693 = vmul.f32 %v619, %v642
        %v694 = vmul.f32 %v620, %v646
        %v695 = vmul.f32 %v621, %v650
        %v696 = vmul.f32 %v622, %v654
        %v697 = vmul.f32 %v623, %v634
        %v698 = vmul.f32 %v624, %v638
        %v699 = vmul.f32 %v625, %v642
        %v700 = vmul.f32 %v626, %v646
        %v701 = vmul.f32 %v627, %v650
        %v702 = vmul.f32 %v628, %v654
        %v703 = vld [vmem:[#allocation7] sm:$0x3f]
        %v705 = vlaneseq
        %v706 = vshrl.u32 %v705, 7
        %v707 = vsub.s32 0, %v706
        %v708 = vrot.slane %v703, %v707
        %v709 = vlaneseq
        %v710 = vshrl.u32 %v709, 7
        %v711 = vsub.s32 1, %v710
        %v712 = vrot.slane %v703, %v711
        %v713 = vlaneseq
        %v714 = vshrl.u32 %v713, 7
        %v715 = vsub.s32 2, %v714
        %v716 = vrot.slane %v703, %v715
        %v717 = vlaneseq
        %v718 = vshrl.u32 %v717, 7
        %v719 = vsub.s32 3, %v718
        %v720 = vrot.slane %v703, %v719
        %v721 = vlaneseq
        %v722 = vshrl.u32 %v721, 7
        %v723 = vsub.s32 4, %v722
        %v724 = vrot.slane %v703, %v723
        %v725 = vlaneseq
        %v726 = vshrl.u32 %v725, 7
        %v727 = vsub.s32 5, %v726
        %v728 = vrot.slane %v703, %v727
        %v735 = vadd.f32 %v661, %v708
        %v736 = vadd.f32 %v662, %v712
        %v737 = vadd.f32 %v663, %v716
        %v738 = vadd.f32 %v664, %v720
        %v739 = vadd.f32 %v665, %v724
        %v740 = vadd.f32 %v666, %v728
        %v741 = vadd.f32 %v667, %v708
        %v742 = vadd.f32 %v668, %v712
        %v743 = vadd.f32 %v669, %v716
        %v744 = vadd.f32 %v670, %v720
        %v745 = vadd.f32 %v671, %v724
        %v746 = vadd.f32 %v672, %v728
        %v747 = vadd.f32 %v673, %v708
        %v748 = vadd.f32 %v674, %v712
        %v749 = vadd.f32 %v675, %v716
        %v750 = vadd.f32 %v676, %v720
        %v751 = vadd.f32 %v677, %v724
        %v752 = vadd.f32 %v678, %v728
        %v753 = vadd.f32 %v679, %v708
        %v754 = vadd.f32 %v680, %v712
        %v755 = vadd.f32 %v681, %v716
        %v756 = vadd.f32 %v682, %v720
        %v757 = vadd.f32 %v683, %v724
        %v758 = vadd.f32 %v684, %v728
        %v759 = vadd.f32 %v685, %v708
        %v760 = vadd.f32 %v686, %v712
        %v761 = vadd.f32 %v687, %v716
        %v762 = vadd.f32 %v688, %v720
        %v763 = vadd.f32 %v689, %v724
        %v764 = vadd.f32 %v690, %v728
        %v765 = vadd.f32 %v691, %v708
        %v766 = vadd.f32 %v692, %v712
        %v767 = vadd.f32 %v693, %v716
        %v768 = vadd.f32 %v694, %v720
        %v769 = vadd.f32 %v695, %v724
        %v770 = vadd.f32 %v696, %v728
        %v771 = vadd.f32 %v697, %v708
        %v772 = vadd.f32 %v698, %v712
        %v773 = vadd.f32 %v699, %v716
        %v774 = vadd.f32 %v700, %v720
        %v775 = vadd.f32 %v701, %v724
        %v776 = vadd.f32 %v702, %v728
        %v777 = vpack.c.bf16 %v741, %v735
        %v778 = vpack.c.bf16 %v742, %v736
        %v779 = vpack.c.bf16 %v743, %v737
        %v780 = vpack.c.bf16 %v744, %v738
        %v781 = vpack.c.bf16 %v745, %v739
        %v782 = vpack.c.bf16 %v746, %v740
        %v783 = vpack.c.bf16 %v753, %v747
        %v784 = vpack.c.bf16 %v754, %v748
        %v785 = vpack.c.bf16 %v755, %v749
        %v786 = vpack.c.bf16 %v756, %v750
        %v787 = vpack.c.bf16 %v757, %v751
        %v788 = vpack.c.bf16 %v758, %v752
        %v789 = vpack.c.bf16 %v765, %v759
        %v790 = vpack.c.bf16 %v766, %v760
        %v791 = vpack.c.bf16 %v767, %v761
        %v792 = vpack.c.bf16 %v768, %v762
        %v793 = vpack.c.bf16 %v769, %v763
        %v794 = vpack.c.bf16 %v770, %v764
        %v795 = vpack.c.bf16 %v771, %v771
        %v796 = vpack.c.bf16 %v772, %v772
        %v797 = vpack.c.bf16 %v773, %v773
        %v798 = vpack.c.bf16 %v774, %v774
        %v799 = vpack.c.bf16 %v775, %v775
        %v800 = vpack.c.bf16 %v776, %v776
        %v801 = vld [vmem:[%s277] sm:$0xff]
        %v802 = vld [vmem:[%s277 + $0x8] sm:$0xff]
        %v803 = vld [vmem:[%s277 + $0x10] sm:$0xff]
        %v804 = vld [vmem:[%s277 + $0x18] sm:$0xff]
        %v805 = vld [vmem:[%s277 + $0x20] sm:$0xff]
        %v806 = vld [vmem:[%s277 + $0x28] sm:$0xff]
        %v807 = vld [vmem:[%s277 + $0x30] sm:$0xff]
        %v808 = vld [vmem:[%s277 + $0x38] sm:$0xff]
        %v809 = vld [vmem:[%s277 + $0x40] sm:$0xff]
        %v810 = vld [vmem:[%s277 + $0x48] sm:$0xff]
        %v811 = vld [vmem:[%s277 + $0x50] sm:$0xff]
        %v812 = vld [vmem:[%s277 + $0x58] sm:$0xff]
        %v813 = vld [vmem:[%s277 + $0x60] sm:$0xff]
        %v814 = vld [vmem:[%s277 + $0x68] sm:$0xff]
        %v815 = vld [vmem:[%s277 + $0x70] sm:$0xff]
        %v816 = vld [vmem:[%s277 + $0x78] sm:$0xff]
        %v817 = vld [vmem:[%s277 + $0x80] sm:$0xff]
        %v818 = vld [vmem:[%s277 + $0x88] sm:$0xff]
        %v819 = vld [vmem:[%s277 + $0x90] sm:$0xff]
        %v820 = vld [vmem:[%s277 + $0x98] sm:$0xff]
        %v821 = vld [vmem:[%s277 + $0xa0] sm:$0xff]
        %v822 = vld [vmem:[%s277 + $0xa8] sm:$0xff]
        %v823 = vld [vmem:[%s277 + $0xb0] sm:$0xff]
        %v824 = vld [vmem:[%s277 + $0xb8] sm:$0xff]
        %v825 = vld [vmem:[%s277 + $0xc0] sm:$0xff]
        %v826 = vld [vmem:[%s277 + $0xc8] sm:$0xff]
        %v827 = vld [vmem:[%s277 + $0xd0] sm:$0xff]
        %v828 = vld [vmem:[%s277 + $0xd8] sm:$0xff]
        %v829 = vld [vmem:[%s277 + $0xe0] sm:$0xff]
        %v830 = vld [vmem:[%s277 + $0xe8] sm:$0xff]
        %v831 = vld [vmem:[%s277 + $0xf0] sm:$0xff]
        %v832 = vld [vmem:[%s277 + $0xf8] sm:$0xff]
        %v833 = vld [vmem:[%s277 + $0x100] sm:$0xff]
        %v834 = vld [vmem:[%s277 + $0x108] sm:$0xff]
        %v835 = vld [vmem:[%s277 + $0x110] sm:$0xff]
        %v836 = vld [vmem:[%s277 + $0x118] sm:$0xff]
        %v837 = vld [vmem:[%s277 + $0x120] sm:$0xff]
        %v838 = vld [vmem:[%s277 + $0x128] sm:$0xff]
        %v839 = vld [vmem:[%s277 + $0x130] sm:$0xff]
        %v840 = vld [vmem:[%s277 + $0x138] sm:$0xff]
        %v841 = vld [vmem:[%s277 + $0x140] sm:$0xff]
        %v842 = vld [vmem:[%s277 + $0x148] sm:$0xff]
        %v843 = vld [vmem:[%s277 + $0x150] sm:$0xff]
        %v844 = vld [vmem:[%s277 + $0x158] sm:$0xff]
        %v845 = vld [vmem:[%s277 + $0x160] sm:$0xff]
        %v846 = vld [vmem:[%s277 + $0x168] sm:$0xff]
        %v847 = vld [vmem:[%s277 + $0x170] sm:$0xff]
        %v848 = vld [vmem:[%s277 + $0x178] sm:$0xff]
        %v849 = vld [vmem:[%s277 + $0x180] sm:$0xff]
        %v850 = vld [vmem:[%s277 + $0x188] sm:$0xff]
        %v851 = vld [vmem:[%s277 + $0x190] sm:$0xff]
        %v852 = vld [vmem:[%s277 + $0x198] sm:$0xff]
        %v853 = vld [vmem:[%s277 + $0x1a0] sm:$0xff]
        %v854 = vld [vmem:[%s277 + $0x1a8] sm:$0xff]
        %v855 = vld [vmem:[%s277 + $0x1b0] sm:$0xff]
        %v856 = vld [vmem:[%s277 + $0x1b8] sm:$0xff]
        %v857 = vld [vmem:[%s277 + $0x1c0] sm:$0xff]
        %v858 = vld [vmem:[%s277 + $0x1c8] sm:$0xff]
        %v859 = vld [vmem:[%s277 + $0x1d0] sm:$0xff]
        %v860 = vld [vmem:[%s277 + $0x1d8] sm:$0xff]
        %v861 = vld [vmem:[%s277 + $0x1e0] sm:$0xff]
        %v862 = vld [vmem:[%s277 + $0x1e8] sm:$0xff]
        %v863 = vld [vmem:[%s277 + $0x1f0] sm:$0xff]
        %v864 = vld [vmem:[%s277 + $0x1f8] sm:$0xff]
        %v865 = vld [vmem:[%s277 + $0x200] sm:$0xff]
        %v866 = vld [vmem:[%s277 + $0x208] sm:$0xff]
        %v867 = vld [vmem:[%s277 + $0x210] sm:$0xff]
        %v868 = vld [vmem:[%s277 + $0x218] sm:$0xff]
        %v869 = vld [vmem:[%s277 + $0x220] sm:$0xff]
        %v870 = vld [vmem:[%s277 + $0x228] sm:$0xff]
        %v871 = vld [vmem:[%s277 + $0x230] sm:$0xff]
        %v872 = vld [vmem:[%s277 + $0x238] sm:$0xff]
        %v873 = vld [vmem:[%s277 + $0x240] sm:$0xff]
        %v874 = vld [vmem:[%s277 + $0x248] sm:$0xff]
        %v875 = vld [vmem:[%s277 + $0x250] sm:$0xff]
        %v876 = vld [vmem:[%s277 + $0x258] sm:$0xff]
        %v877 = vld [vmem:[%s277 + $0x260] sm:$0xff]
        %v878 = vld [vmem:[%s277 + $0x268] sm:$0xff]
        %v879 = vld [vmem:[%s277 + $0x270] sm:$0xff]
        %v880 = vld [vmem:[%s277 + $0x278] sm:$0xff]
        %v881 = vld [vmem:[%s277 + $0x280] sm:$0xff]
        %v882 = vld [vmem:[%s277 + $0x288] sm:$0xff]
        %v883 = vld [vmem:[%s277 + $0x290] sm:$0xff]
        %v884 = vld [vmem:[%s277 + $0x298] sm:$0xff]
        %v885 = vld [vmem:[%s277 + $0x2a0] sm:$0xff]
        %v886 = vld [vmem:[%s277 + $0x2a8] sm:$0xff]
        %v887 = vld [vmem:[%s277 + $0x2b0] sm:$0xff]
        %v888 = vld [vmem:[%s277 + $0x2b8] sm:$0xff]
        %v889 = vld [vmem:[%s277 + $0x2c0] sm:$0xff]
        %v890 = vld [vmem:[%s277 + $0x2c8] sm:$0xff]
        %v891 = vld [vmem:[%s277 + $0x2d0] sm:$0xff]
        %v892 = vld [vmem:[%s277 + $0x2d8] sm:$0xff]
        %v893 = vld [vmem:[%s277 + $0x2e0] sm:$0xff]
        %v894 = vld [vmem:[%s277 + $0x2e8] sm:$0xff]
        %v895 = vld [vmem:[%s277 + $0x2f0] sm:$0xff]
        %v896 = vld [vmem:[%s277 + $0x2f8] sm:$0xff]
        %v897 = vld [vmem:[%s277 + $0x300] sm:$0xff]
        %v898 = vld [vmem:[%s277 + $0x308] sm:$0xff]
        %v899 = vld [vmem:[%s277 + $0x310] sm:$0xff]
        %v900 = vld [vmem:[%s277 + $0x318] sm:$0xff]
        %v901 = vld [vmem:[%s277 + $0x320] sm:$0xff]
        %v902 = vld [vmem:[%s277 + $0x328] sm:$0xff]
        %v903 = vld [vmem:[%s277 + $0x330] sm:$0xff]
        %v904 = vld [vmem:[%s277 + $0x338] sm:$0xff]
        %v905 = vld [vmem:[%s277 + $0x340] sm:$0xff]
        %v906 = vld [vmem:[%s277 + $0x348] sm:$0xff]
        %v907 = vld [vmem:[%s277 + $0x350] sm:$0xff]
        %v908 = vld [vmem:[%s277 + $0x358] sm:$0xff]
        %v909 = vld [vmem:[%s277 + $0x360] sm:$0xff]
        %v910 = vld [vmem:[%s277 + $0x368] sm:$0xff]
        %v911 = vld [vmem:[%s277 + $0x370] sm:$0xff]
        %v912 = vld [vmem:[%s277 + $0x378] sm:$0xff]
        %v913 = vld [vmem:[%s277 + $0x380] sm:$0xff]
        %v914 = vld [vmem:[%s277 + $0x388] sm:$0xff]
        %v915 = vld [vmem:[%s277 + $0x390] sm:$0xff]
        %v916 = vld [vmem:[%s277 + $0x398] sm:$0xff]
        %v917 = vld [vmem:[%s277 + $0x3a0] sm:$0xff]
        %v918 = vld [vmem:[%s277 + $0x3a8] sm:$0xff]
        %v919 = vld [vmem:[%s277 + $0x3b0] sm:$0xff]
        %v920 = vld [vmem:[%s277 + $0x3b8] sm:$0xff]
        %v921 = vld [vmem:[%s277 + $0x3c0] sm:$0xff]
        %v922 = vld [vmem:[%s277 + $0x3c8] sm:$0xff]
        %v923 = vld [vmem:[%s277 + $0x3d0] sm:$0xff]
        %v924 = vld [vmem:[%s277 + $0x3d8] sm:$0xff]
        %v925 = vld [vmem:[%s277 + $0x3e0] sm:$0xff]
        %v926 = vld [vmem:[%s277 + $0x3e8] sm:$0xff]
        %v927 = vld [vmem:[%s277 + $0x3f0] sm:$0xff]
        %v928 = vld [vmem:[%s277 + $0x3f8] sm:$0xff]
        %v929 = vld [vmem:[%s277 + $0x400] sm:$0xff]
        %v930 = vld [vmem:[%s277 + $0x408] sm:$0xff]
        %v931 = vld [vmem:[%s277 + $0x410] sm:$0xff]
        %v932 = vld [vmem:[%s277 + $0x418] sm:$0xff]
        %v933 = vld [vmem:[%s277 + $0x420] sm:$0xff]
        %v934 = vld [vmem:[%s277 + $0x428] sm:$0xff]
        %v935 = vld [vmem:[%s277 + $0x430] sm:$0xff]
        %v936 = vld [vmem:[%s277 + $0x438] sm:$0xff]
        %v937 = vld [vmem:[%s277 + $0x440] sm:$0xff]
        %v938 = vld [vmem:[%s277 + $0x448] sm:$0xff]
        %v939 = vld [vmem:[%s277 + $0x450] sm:$0xff]
        %v940 = vld [vmem:[%s277 + $0x458] sm:$0xff]
        %v941 = vld [vmem:[%s277 + $0x460] sm:$0xff]
        %v942 = vld [vmem:[%s277 + $0x468] sm:$0xff]
        %v943 = vld [vmem:[%s277 + $0x470] sm:$0xff]
        %v944 = vld [vmem:[%s277 + $0x478] sm:$0xff]
        %v945 = vld [vmem:[%s277 + $0x480] sm:$0xff]
        %v946 = vld [vmem:[%s277 + $0x488] sm:$0xff]
        %v947 = vld [vmem:[%s277 + $0x490] sm:$0xff]
        %v948 = vld [vmem:[%s277 + $0x498] sm:$0xff]
        %v949 = vld [vmem:[%s277 + $0x4a0] sm:$0xff]
        %v950 = vld [vmem:[%s277 + $0x4a8] sm:$0xff]
        %v951 = vld [vmem:[%s277 + $0x4b0] sm:$0xff]
        %v952 = vld [vmem:[%s277 + $0x4b8] sm:$0xff]
        %v953 = vld [vmem:[%s277 + $0x4c0] sm:$0xff]
        %v954 = vld [vmem:[%s277 + $0x4c8] sm:$0xff]
        %v955 = vld [vmem:[%s277 + $0x4d0] sm:$0xff]
        %v956 = vld [vmem:[%s277 + $0x4d8] sm:$0xff]
        %v957 = vld [vmem:[%s277 + $0x4e0] sm:$0xff]
        %v958 = vld [vmem:[%s277 + $0x4e8] sm:$0xff]
        %v959 = vld [vmem:[%s277 + $0x4f0] sm:$0xff]
        %v960 = vld [vmem:[%s277 + $0x4f8] sm:$0xff]
        %v961 = vld [vmem:[%s277 + $0x500] sm:$0xff]
        %v962 = vld [vmem:[%s277 + $0x508] sm:$0xff]
        %v963 = vld [vmem:[%s277 + $0x510] sm:$0xff]
        %v964 = vld [vmem:[%s277 + $0x518] sm:$0xff]
        %v965 = vld [vmem:[%s277 + $0x520] sm:$0xff]
        %v966 = vld [vmem:[%s277 + $0x528] sm:$0xff]
        %v967 = vld [vmem:[%s277 + $0x530] sm:$0xff]
        %v968 = vld [vmem:[%s277 + $0x538] sm:$0xff]
        %v969 = vld [vmem:[%s277 + $0x540] sm:$0xff]
        %v970 = vld [vmem:[%s277 + $0x548] sm:$0xff]
        %v971 = vld [vmem:[%s277 + $0x550] sm:$0xff]
        %v972 = vld [vmem:[%s277 + $0x558] sm:$0xff]
        %v973 = vld [vmem:[%s277 + $0x560] sm:$0xff]
        %v974 = vld [vmem:[%s277 + $0x568] sm:$0xff]
        %v975 = vld [vmem:[%s277 + $0x570] sm:$0xff]
        %v976 = vld [vmem:[%s277 + $0x578] sm:$0xff]
        %v977 = vld [vmem:[%s277 + $0x580] sm:$0xff]
        %v978 = vld [vmem:[%s277 + $0x588] sm:$0xff]
        %v979 = vld [vmem:[%s277 + $0x590] sm:$0xff]
        %v980 = vld [vmem:[%s277 + $0x598] sm:$0xff]
        %v981 = vld [vmem:[%s277 + $0x5a0] sm:$0xff]
        %v982 = vld [vmem:[%s277 + $0x5a8] sm:$0xff]
        %v983 = vld [vmem:[%s277 + $0x5b0] sm:$0xff]
        %v984 = vld [vmem:[%s277 + $0x5b8] sm:$0xff]
        %v985 = vld [vmem:[%s277 + $0x5c0] sm:$0xff]
        %v986 = vld [vmem:[%s277 + $0x5c8] sm:$0xff]
        %v987 = vld [vmem:[%s277 + $0x5d0] sm:$0xff]
        %v988 = vld [vmem:[%s277 + $0x5d8] sm:$0xff]
        %v989 = vld [vmem:[%s277 + $0x5e0] sm:$0xff]
        %v990 = vld [vmem:[%s277 + $0x5e8] sm:$0xff]
        %v991 = vld [vmem:[%s277 + $0x5f0] sm:$0xff]
        %v992 = vld [vmem:[%s277 + $0x5f8] sm:$0xff]
        %v993 = vld [vmem:[%s277 + $0x600] sm:$0xff]
        %v994 = vld [vmem:[%s277 + $0x608] sm:$0xff]
        %v995 = vld [vmem:[%s277 + $0x610] sm:$0xff]
        %v996 = vld [vmem:[%s277 + $0x618] sm:$0xff]
        %v997 = vld [vmem:[%s277 + $0x620] sm:$0xff]
        %v998 = vld [vmem:[%s277 + $0x628] sm:$0xff]
        %v999 = vld [vmem:[%s277 + $0x630] sm:$0xff]
        %v1000 = vld [vmem:[%s277 + $0x638] sm:$0xff]
        %v1001 = vld [vmem:[%s277 + $0x640] sm:$0xff]
        %v1002 = vld [vmem:[%s277 + $0x648] sm:$0xff]
        %v1003 = vld [vmem:[%s277 + $0x650] sm:$0xff]
        %v1004 = vld [vmem:[%s277 + $0x658] sm:$0xff]
        %v1005 = vld [vmem:[%s277 + $0x660] sm:$0xff]
        %v1006 = vld [vmem:[%s277 + $0x668] sm:$0xff]
        %v1007 = vld [vmem:[%s277 + $0x670] sm:$0xff]
        %v1008 = vld [vmem:[%s277 + $0x678] sm:$0xff]
        %v1009 = vld [vmem:[%s277 + $0x680] sm:$0xff]
        %v1010 = vld [vmem:[%s277 + $0x688] sm:$0xff]
        %v1011 = vld [vmem:[%s277 + $0x690] sm:$0xff]
        %v1012 = vld [vmem:[%s277 + $0x698] sm:$0xff]
        %v1013 = vld [vmem:[%s277 + $0x6a0] sm:$0xff]
        %v1014 = vld [vmem:[%s277 + $0x6a8] sm:$0xff]
        %v1015 = vld [vmem:[%s277 + $0x6b0] sm:$0xff]
        %v1016 = vld [vmem:[%s277 + $0x6b8] sm:$0xff]
        %v1017 = vld [vmem:[%s277 + $0x6c0] sm:$0xff]
        %v1018 = vld [vmem:[%s277 + $0x6c8] sm:$0xff]
        %v1019 = vld [vmem:[%s277 + $0x6d0] sm:$0xff]
        %v1020 = vld [vmem:[%s277 + $0x6d8] sm:$0xff]
        %v1021 = vld [vmem:[%s277 + $0x6e0] sm:$0xff]
        %v1022 = vld [vmem:[%s277 + $0x6e8] sm:$0xff]
        %v1023 = vld [vmem:[%s277 + $0x6f0] sm:$0xff]
        %v1024 = vld [vmem:[%s277 + $0x6f8] sm:$0xff]
        %v1025 = vld [vmem:[%s277 + $0x700] sm:$0xff]
        %v1026 = vld [vmem:[%s277 + $0x708] sm:$0xff]
        %v1027 = vld [vmem:[%s277 + $0x710] sm:$0xff]
        %v1028 = vld [vmem:[%s277 + $0x718] sm:$0xff]
        %v1029 = vld [vmem:[%s277 + $0x720] sm:$0xff]
        %v1030 = vld [vmem:[%s277 + $0x728] sm:$0xff]
        %v1031 = vld [vmem:[%s277 + $0x730] sm:$0xff]
        %v1032 = vld [vmem:[%s277 + $0x738] sm:$0xff]
        %v1033 = vld [vmem:[%s277 + $0x740] sm:$0xff]
        %v1034 = vld [vmem:[%s277 + $0x748] sm:$0xff]
        %v1035 = vld [vmem:[%s277 + $0x750] sm:$0xff]
        %v1036 = vld [vmem:[%s277 + $0x758] sm:$0xff]
        %v1037 = vld [vmem:[%s277 + $0x760] sm:$0xff]
        %v1038 = vld [vmem:[%s277 + $0x768] sm:$0xff]
        %v1039 = vld [vmem:[%s277 + $0x770] sm:$0xff]
        %v1040 = vld [vmem:[%s277 + $0x778] sm:$0xff]
        %v1041 = vld [vmem:[%s277 + $0x780] sm:$0xff]
        %v1042 = vld [vmem:[%s277 + $0x788] sm:$0xff]
        %v1043 = vld [vmem:[%s277 + $0x790] sm:$0xff]
        %v1044 = vld [vmem:[%s277 + $0x798] sm:$0xff]
        %v1045 = vld [vmem:[%s277 + $0x7a0] sm:$0xff]
        %v1046 = vld [vmem:[%s277 + $0x7a8] sm:$0xff]
        %v1047 = vld [vmem:[%s277 + $0x7b0] sm:$0xff]
        %v1048 = vld [vmem:[%s277 + $0x7b8] sm:$0xff]
        %v1049 = vld [vmem:[%s277 + $0x7c0] sm:$0xff]
        %v1050 = vld [vmem:[%s277 + $0x7c8] sm:$0xff]
        %v1051 = vld [vmem:[%s277 + $0x7d0] sm:$0xff]
        %v1052 = vld [vmem:[%s277 + $0x7d8] sm:$0xff]
        %v1053 = vld [vmem:[%s277 + $0x7e0] sm:$0xff]
        %v1054 = vld [vmem:[%s277 + $0x7e8] sm:$0xff]
        %v1055 = vld [vmem:[%s277 + $0x7f0] sm:$0xff]
        %v1056 = vld [vmem:[%s277 + $0x7f8] sm:$0xff]
        %v1057 = vld [vmem:[%s277 + $0x800] sm:$0xff]
        %v1058 = vld [vmem:[%s277 + $0x808] sm:$0xff]
        %v1059 = vld [vmem:[%s277 + $0x810] sm:$0xff]
        %v1060 = vld [vmem:[%s277 + $0x818] sm:$0xff]
        %v1061 = vld [vmem:[%s277 + $0x820] sm:$0xff]
        %v1062 = vld [vmem:[%s277 + $0x828] sm:$0xff]
        %v1063 = vld [vmem:[%s277 + $0x830] sm:$0xff]
        %v1064 = vld [vmem:[%s277 + $0x838] sm:$0xff]
        %v1065 = vld [vmem:[%s277 + $0x840] sm:$0xff]
        %v1066 = vld [vmem:[%s277 + $0x848] sm:$0xff]
        %v1067 = vld [vmem:[%s277 + $0x850] sm:$0xff]
        %v1068 = vld [vmem:[%s277 + $0x858] sm:$0xff]
        %v1069 = vld [vmem:[%s277 + $0x860] sm:$0xff]
        %v1070 = vld [vmem:[%s277 + $0x868] sm:$0xff]
        %v1071 = vld [vmem:[%s277 + $0x870] sm:$0xff]
        %v1072 = vld [vmem:[%s277 + $0x878] sm:$0xff]
        %v1073 = vld [vmem:[%s277 + $0x880] sm:$0xff]
        %v1074 = vld [vmem:[%s277 + $0x888] sm:$0xff]
        %v1075 = vld [vmem:[%s277 + $0x890] sm:$0xff]
        %v1076 = vld [vmem:[%s277 + $0x898] sm:$0xff]
        %v1077 = vld [vmem:[%s277 + $0x8a0] sm:$0xff]
        %v1078 = vld [vmem:[%s277 + $0x8a8] sm:$0xff]
        %v1079 = vld [vmem:[%s277 + $0x8b0] sm:$0xff]
        %v1080 = vld [vmem:[%s277 + $0x8b8] sm:$0xff]
        %v1081 = vld [vmem:[%s277 + $0x8c0] sm:$0xff]
        %v1082 = vld [vmem:[%s277 + $0x8c8] sm:$0xff]
        %v1083 = vld [vmem:[%s277 + $0x8d0] sm:$0xff]
        %v1084 = vld [vmem:[%s277 + $0x8d8] sm:$0xff]
        %v1085 = vld [vmem:[%s277 + $0x8e0] sm:$0xff]
        %v1086 = vld [vmem:[%s277 + $0x8e8] sm:$0xff]
        %v1087 = vld [vmem:[%s277 + $0x8f0] sm:$0xff]
        %v1088 = vld [vmem:[%s277 + $0x8f8] sm:$0xff]
        %v1089 = vld [vmem:[%s277 + $0x900] sm:$0xff]
        %v1090 = vld [vmem:[%s277 + $0x908] sm:$0xff]
        %v1091 = vld [vmem:[%s277 + $0x910] sm:$0xff]
        %v1092 = vld [vmem:[%s277 + $0x918] sm:$0xff]
        %v1093 = vld [vmem:[%s277 + $0x920] sm:$0xff]
        %v1094 = vld [vmem:[%s277 + $0x928] sm:$0xff]
        %v1095 = vld [vmem:[%s277 + $0x930] sm:$0xff]
        %v1096 = vld [vmem:[%s277 + $0x938] sm:$0xff]
        %v1097 = vld [vmem:[%s277 + $0x940] sm:$0xff]
        %v1098 = vld [vmem:[%s277 + $0x948] sm:$0xff]
        %v1099 = vld [vmem:[%s277 + $0x950] sm:$0xff]
        %v1100 = vld [vmem:[%s277 + $0x958] sm:$0xff]
        %v1101 = vld [vmem:[%s277 + $0x960] sm:$0xff]
        %v1102 = vld [vmem:[%s277 + $0x968] sm:$0xff]
        %v1103 = vld [vmem:[%s277 + $0x970] sm:$0xff]
        %v1104 = vld [vmem:[%s277 + $0x978] sm:$0xff]
        %v1105 = vld [vmem:[%s277 + $0x980] sm:$0xff]
        %v1106 = vld [vmem:[%s277 + $0x988] sm:$0xff]
        %v1107 = vld [vmem:[%s277 + $0x990] sm:$0xff]
        %v1108 = vld [vmem:[%s277 + $0x998] sm:$0xff]
        %v1109 = vld [vmem:[%s277 + $0x9a0] sm:$0xff]
        %v1110 = vld [vmem:[%s277 + $0x9a8] sm:$0xff]
        %v1111 = vld [vmem:[%s277 + $0x9b0] sm:$0xff]
        %v1112 = vld [vmem:[%s277 + $0x9b8] sm:$0xff]
        %v1113 = vld [vmem:[%s277 + $0x9c0] sm:$0xff]
        %v1114 = vld [vmem:[%s277 + $0x9c8] sm:$0xff]
        %v1115 = vld [vmem:[%s277 + $0x9d0] sm:$0xff]
        %v1116 = vld [vmem:[%s277 + $0x9d8] sm:$0xff]
        %v1117 = vld [vmem:[%s277 + $0x9e0] sm:$0xff]
        %v1118 = vld [vmem:[%s277 + $0x9e8] sm:$0xff]
        %v1119 = vld [vmem:[%s277 + $0x9f0] sm:$0xff]
        %v1120 = vld [vmem:[%s277 + $0x9f8] sm:$0xff]
        %v1121 = vld [vmem:[%s277 + $0xa00] sm:$0xff]
        %v1122 = vld [vmem:[%s277 + $0xa08] sm:$0xff]
        %v1123 = vld [vmem:[%s277 + $0xa10] sm:$0xff]
        %v1124 = vld [vmem:[%s277 + $0xa18] sm:$0xff]
        %v1125 = vld [vmem:[%s277 + $0xa20] sm:$0xff]
        %v1126 = vld [vmem:[%s277 + $0xa28] sm:$0xff]
        %v1127 = vld [vmem:[%s277 + $0xa30] sm:$0xff]
        %v1128 = vld [vmem:[%s277 + $0xa38] sm:$0xff]
        %v1129 = vld [vmem:[%s277 + $0xa40] sm:$0xff]
        %v1130 = vld [vmem:[%s277 + $0xa48] sm:$0xff]
        %v1131 = vld [vmem:[%s277 + $0xa50] sm:$0xff]
        %v1132 = vld [vmem:[%s277 + $0xa58] sm:$0xff]
        %v1133 = vld [vmem:[%s277 + $0xa60] sm:$0xff]
        %v1134 = vld [vmem:[%s277 + $0xa68] sm:$0xff]
        %v1135 = vld [vmem:[%s277 + $0xa70] sm:$0xff]
        %v1136 = vld [vmem:[%s277 + $0xa78] sm:$0xff]
        %v1137 = vld [vmem:[%s277 + $0xa80] sm:$0xff]
        %v1138 = vld [vmem:[%s277 + $0xa88] sm:$0xff]
        %v1139 = vld [vmem:[%s277 + $0xa90] sm:$0xff]
        %v1140 = vld [vmem:[%s277 + $0xa98] sm:$0xff]
        %v1141 = vld [vmem:[%s277 + $0xaa0] sm:$0xff]
        %v1142 = vld [vmem:[%s277 + $0xaa8] sm:$0xff]
        %v1143 = vld [vmem:[%s277 + $0xab0] sm:$0xff]
        %v1144 = vld [vmem:[%s277 + $0xab8] sm:$0xff]
        %v1145 = vld [vmem:[%s277 + $0xac0] sm:$0xff]
        %v1146 = vld [vmem:[%s277 + $0xac8] sm:$0xff]
        %v1147 = vld [vmem:[%s277 + $0xad0] sm:$0xff]
        %v1148 = vld [vmem:[%s277 + $0xad8] sm:$0xff]
        %v1149 = vld [vmem:[%s277 + $0xae0] sm:$0xff]
        %v1150 = vld [vmem:[%s277 + $0xae8] sm:$0xff]
        %v1151 = vld [vmem:[%s277 + $0xaf0] sm:$0xff]
        %v1152 = vld [vmem:[%s277 + $0xaf8] sm:$0xff]
        %v1153 = vld [vmem:[%s277 + $0xb00] sm:$0xff]
        %v1154 = vld [vmem:[%s277 + $0xb08] sm:$0xff]
        %v1155 = vld [vmem:[%s277 + $0xb10] sm:$0xff]
        %v1156 = vld [vmem:[%s277 + $0xb18] sm:$0xff]
        %v1157 = vld [vmem:[%s277 + $0xb20] sm:$0xff]
        %v1158 = vld [vmem:[%s277 + $0xb28] sm:$0xff]
        %v1159 = vld [vmem:[%s277 + $0xb30] sm:$0xff]
        %v1160 = vld [vmem:[%s277 + $0xb38] sm:$0xff]
        %v1161 = vld [vmem:[%s277 + $0xb40] sm:$0xff]
        %v1162 = vld [vmem:[%s277 + $0xb48] sm:$0xff]
        %v1163 = vld [vmem:[%s277 + $0xb50] sm:$0xff]
        %v1164 = vld [vmem:[%s277 + $0xb58] sm:$0xff]
        %v1165 = vld [vmem:[%s277 + $0xb60] sm:$0xff]
        %v1166 = vld [vmem:[%s277 + $0xb68] sm:$0xff]
        %v1167 = vld [vmem:[%s277 + $0xb70] sm:$0xff]
        %v1168 = vld [vmem:[%s277 + $0xb78] sm:$0xff]
        %v1169 = vld [vmem:[%s277 + $0xb80] sm:$0xff]
        %v1170 = vld [vmem:[%s277 + $0xb88] sm:$0xff]
        %v1171 = vld [vmem:[%s277 + $0xb90] sm:$0xff]
        %v1172 = vld [vmem:[%s277 + $0xb98] sm:$0xff]
        %v1173 = vld [vmem:[%s277 + $0xba0] sm:$0xff]
        %v1174 = vld [vmem:[%s277 + $0xba8] sm:$0xff]
        %v1175 = vld [vmem:[%s277 + $0xbb0] sm:$0xff]
        %v1176 = vld [vmem:[%s277 + $0xbb8] sm:$0xff]
        %v1177 = vld [vmem:[%s277 + $0xbc0] sm:$0xff]
        %v1178 = vld [vmem:[%s277 + $0xbc8] sm:$0xff]
        %v1179 = vld [vmem:[%s277 + $0xbd0] sm:$0xff]
        %v1180 = vld [vmem:[%s277 + $0xbd8] sm:$0xff]
        %v1181 = vld [vmem:[%s277 + $0xbe0] sm:$0xff]
        %v1182 = vld [vmem:[%s277 + $0xbe8] sm:$0xff]
        %v1183 = vld [vmem:[%s277 + $0xbf0] sm:$0xff]
        %v1184 = vld [vmem:[%s277 + $0xbf8] sm:$0xff]
        %v1185 = vld [vmem:[%s277 + $0xc00] sm:$0xff]
        %v1186 = vld [vmem:[%s277 + $0xc08] sm:$0xff]
        %v1187 = vld [vmem:[%s277 + $0xc10] sm:$0xff]
        %v1188 = vld [vmem:[%s277 + $0xc18] sm:$0xff]
        %v1189 = vld [vmem:[%s277 + $0xc20] sm:$0xff]
        %v1190 = vld [vmem:[%s277 + $0xc28] sm:$0xff]
        %v1191 = vld [vmem:[%s277 + $0xc30] sm:$0xff]
        %v1192 = vld [vmem:[%s277 + $0xc38] sm:$0xff]
        %v1193 = vld [vmem:[%s277 + $0xc40] sm:$0xff]
        %v1194 = vld [vmem:[%s277 + $0xc48] sm:$0xff]
        %v1195 = vld [vmem:[%s277 + $0xc50] sm:$0xff]
        %v1196 = vld [vmem:[%s277 + $0xc58] sm:$0xff]
        %v1197 = vld [vmem:[%s277 + $0xc60] sm:$0xff]
        %v1198 = vld [vmem:[%s277 + $0xc68] sm:$0xff]
        %v1199 = vld [vmem:[%s277 + $0xc70] sm:$0xff]
        %v1200 = vld [vmem:[%s277 + $0xc78] sm:$0xff]
        %v1201 = vld [vmem:[%s277 + $0xc80] sm:$0xff]
        %v1202 = vld [vmem:[%s277 + $0xc88] sm:$0xff]
        %v1203 = vld [vmem:[%s277 + $0xc90] sm:$0xff]
        %v1204 = vld [vmem:[%s277 + $0xc98] sm:$0xff]
        %v1205 = vld [vmem:[%s277 + $0xca0] sm:$0xff]
        %v1206 = vld [vmem:[%s277 + $0xca8] sm:$0xff]
        %v1207 = vld [vmem:[%s277 + $0xcb0] sm:$0xff]
        %v1208 = vld [vmem:[%s277 + $0xcb8] sm:$0xff]
        %v1209 = vld [vmem:[%s277 + $0xcc0] sm:$0xff]
        %v1210 = vld [vmem:[%s277 + $0xcc8] sm:$0xff]
        %v1211 = vld [vmem:[%s277 + $0xcd0] sm:$0xff]
        %v1212 = vld [vmem:[%s277 + $0xcd8] sm:$0xff]
        %v1213 = vld [vmem:[%s277 + $0xce0] sm:$0xff]
        %v1214 = vld [vmem:[%s277 + $0xce8] sm:$0xff]
        %v1215 = vld [vmem:[%s277 + $0xcf0] sm:$0xff]
        %v1216 = vld [vmem:[%s277 + $0xcf8] sm:$0xff]
        %v1217 = vld [vmem:[%s277 + $0xd00] sm:$0xff]
        %v1218 = vld [vmem:[%s277 + $0xd08] sm:$0xff]
        %v1219 = vld [vmem:[%s277 + $0xd10] sm:$0xff]
        %v1220 = vld [vmem:[%s277 + $0xd18] sm:$0xff]
        %v1221 = vld [vmem:[%s277 + $0xd20] sm:$0xff]
        %v1222 = vld [vmem:[%s277 + $0xd28] sm:$0xff]
        %v1223 = vld [vmem:[%s277 + $0xd30] sm:$0xff]
        %v1224 = vld [vmem:[%s277 + $0xd38] sm:$0xff]
        %v1225 = vld [vmem:[%s277 + $0xd40] sm:$0xff]
        %v1226 = vld [vmem:[%s277 + $0xd48] sm:$0xff]
        %v1227 = vld [vmem:[%s277 + $0xd50] sm:$0xff]
        %v1228 = vld [vmem:[%s277 + $0xd58] sm:$0xff]
        %v1229 = vld [vmem:[%s277 + $0xd60] sm:$0xff]
        %v1230 = vld [vmem:[%s277 + $0xd68] sm:$0xff]
        %v1231 = vld [vmem:[%s277 + $0xd70] sm:$0xff]
        %v1232 = vld [vmem:[%s277 + $0xd78] sm:$0xff]
        %v1233 = vld [vmem:[%s277 + $0xd80] sm:$0xff]
        %v1234 = vld [vmem:[%s277 + $0xd88] sm:$0xff]
        %v1235 = vld [vmem:[%s277 + $0xd90] sm:$0xff]
        %v1236 = vld [vmem:[%s277 + $0xd98] sm:$0xff]
        %v1237 = vld [vmem:[%s277 + $0xda0] sm:$0xff]
        %v1238 = vld [vmem:[%s277 + $0xda8] sm:$0xff]
        %v1239 = vld [vmem:[%s277 + $0xdb0] sm:$0xff]
        %v1240 = vld [vmem:[%s277 + $0xdb8] sm:$0xff]
        %v1241 = vld [vmem:[%s277 + $0xdc0] sm:$0xff]
        %v1242 = vld [vmem:[%s277 + $0xdc8] sm:$0xff]
        %v1243 = vld [vmem:[%s277 + $0xdd0] sm:$0xff]
        %v1244 = vld [vmem:[%s277 + $0xdd8] sm:$0xff]
        %v1245 = vld [vmem:[%s277 + $0xde0] sm:$0xff]
        %v1246 = vld [vmem:[%s277 + $0xde8] sm:$0xff]
        %v1247 = vld [vmem:[%s277 + $0xdf0] sm:$0xff]
        %v1248 = vld [vmem:[%s277 + $0xdf8] sm:$0xff]
        %v1249 = vld [vmem:[%s277 + $0xe00] sm:$0xff]
        %v1250 = vld [vmem:[%s277 + $0xe08] sm:$0xff]
        %v1251 = vld [vmem:[%s277 + $0xe10] sm:$0xff]
        %v1252 = vld [vmem:[%s277 + $0xe18] sm:$0xff]
        %v1253 = vld [vmem:[%s277 + $0xe20] sm:$0xff]
        %v1254 = vld [vmem:[%s277 + $0xe28] sm:$0xff]
        %v1255 = vld [vmem:[%s277 + $0xe30] sm:$0xff]
        %v1256 = vld [vmem:[%s277 + $0xe38] sm:$0xff]
        %v1257 = vld [vmem:[%s277 + $0xe40] sm:$0xff]
        %v1258 = vld [vmem:[%s277 + $0xe48] sm:$0xff]
        %v1259 = vld [vmem:[%s277 + $0xe50] sm:$0xff]
        %v1260 = vld [vmem:[%s277 + $0xe58] sm:$0xff]
        %v1261 = vld [vmem:[%s277 + $0xe60] sm:$0xff]
        %v1262 = vld [vmem:[%s277 + $0xe68] sm:$0xff]
        %v1263 = vld [vmem:[%s277 + $0xe70] sm:$0xff]
        %v1264 = vld [vmem:[%s277 + $0xe78] sm:$0xff]
        %v1265 = vld [vmem:[%s277 + $0xe80] sm:$0xff]
        %v1266 = vld [vmem:[%s277 + $0xe88] sm:$0xff]
        %v1267 = vld [vmem:[%s277 + $0xe90] sm:$0xff]
        %v1268 = vld [vmem:[%s277 + $0xe98] sm:$0xff]
        %v1269 = vld [vmem:[%s277 + $0xea0] sm:$0xff]
        %v1270 = vld [vmem:[%s277 + $0xea8] sm:$0xff]
        %v1271 = vld [vmem:[%s277 + $0xeb0] sm:$0xff]
        %v1272 = vld [vmem:[%s277 + $0xeb8] sm:$0xff]
        %v1273 = vld [vmem:[%s277 + $0xec0] sm:$0xff]
        %v1274 = vld [vmem:[%s277 + $0xec8] sm:$0xff]
        %v1275 = vld [vmem:[%s277 + $0xed0] sm:$0xff]
        %v1276 = vld [vmem:[%s277 + $0xed8] sm:$0xff]
        %v1277 = vld [vmem:[%s277 + $0xee0] sm:$0xff]
        %v1278 = vld [vmem:[%s277 + $0xee8] sm:$0xff]
        %v1279 = vld [vmem:[%s277 + $0xef0] sm:$0xff]
        %v1280 = vld [vmem:[%s277 + $0xef8] sm:$0xff]
        %v1281 = vld [vmem:[%s277 + $0xf00] sm:$0xff]
        %v1282 = vld [vmem:[%s277 + $0xf08] sm:$0xff]
        %v1283 = vld [vmem:[%s277 + $0xf10] sm:$0xff]
        %v1284 = vld [vmem:[%s277 + $0xf18] sm:$0xff]
        %v1285 = vld [vmem:[%s277 + $0xf20] sm:$0xff]
        %v1286 = vld [vmem:[%s277 + $0xf28] sm:$0xff]
        %v1287 = vld [vmem:[%s277 + $0xf30] sm:$0xff]
        %v1288 = vld [vmem:[%s277 + $0xf38] sm:$0xff]
        %v1289 = vld [vmem:[%s277 + $0xf40] sm:$0xff]
        %v1290 = vld [vmem:[%s277 + $0xf48] sm:$0xff]
        %v1291 = vld [vmem:[%s277 + $0xf50] sm:$0xff]
        %v1292 = vld [vmem:[%s277 + $0xf58] sm:$0xff]
        %v1293 = vld [vmem:[%s277 + $0xf60] sm:$0xff]
        %v1294 = vld [vmem:[%s277 + $0xf68] sm:$0xff]
        %v1295 = vld [vmem:[%s277 + $0xf70] sm:$0xff]
        %v1296 = vld [vmem:[%s277 + $0xf78] sm:$0xff]
        %v1297 = vld [vmem:[%s277 + $0xf80] sm:$0xff]
        %v1298 = vld [vmem:[%s277 + $0xf88] sm:$0xff]
        %v1299 = vld [vmem:[%s277 + $0xf90] sm:$0xff]
        %v1300 = vld [vmem:[%s277 + $0xf98] sm:$0xff]
        %v1301 = vld [vmem:[%s277 + $0xfa0] sm:$0xff]
        %v1302 = vld [vmem:[%s277 + $0xfa8] sm:$0xff]
        %v1303 = vld [vmem:[%s277 + $0xfb0] sm:$0xff]
        %v1304 = vld [vmem:[%s277 + $0xfb8] sm:$0xff]
        %v1305 = vld [vmem:[%s277 + $0xfc0] sm:$0xff]
        %v1306 = vld [vmem:[%s277 + $0xfc8] sm:$0xff]
        %v1307 = vld [vmem:[%s277 + $0xfd0] sm:$0xff]
        %v1308 = vld [vmem:[%s277 + $0xfd8] sm:$0xff]
        %v1309 = vld [vmem:[%s277 + $0xfe0] sm:$0xff]
        %v1310 = vld [vmem:[%s277 + $0xfe8] sm:$0xff]
        %v1311 = vld [vmem:[%s277 + $0xff0] sm:$0xff]
        %v1312 = vld [vmem:[%s277 + $0xff8] sm:$0xff]
        %v1313 = vld [vmem:[%s277 + $0x1000] sm:$0xff]
        %v1314 = vld [vmem:[%s277 + $0x1008] sm:$0xff]
        %v1315 = vld [vmem:[%s277 + $0x1010] sm:$0xff]
        %v1316 = vld [vmem:[%s277 + $0x1018] sm:$0xff]
        %v1317 = vld [vmem:[%s277 + $0x1020] sm:$0xff]
        %v1318 = vld [vmem:[%s277 + $0x1028] sm:$0xff]
        %v1319 = vld [vmem:[%s277 + $0x1030] sm:$0xff]
        %v1320 = vld [vmem:[%s277 + $0x1038] sm:$0xff]
        %v1321 = vld [vmem:[%s277 + $0x1040] sm:$0xff]
        %v1322 = vld [vmem:[%s277 + $0x1048] sm:$0xff]
        %v1323 = vld [vmem:[%s277 + $0x1050] sm:$0xff]
        %v1324 = vld [vmem:[%s277 + $0x1058] sm:$0xff]
        %v1325 = vld [vmem:[%s277 + $0x1060] sm:$0xff]
        %v1326 = vld [vmem:[%s277 + $0x1068] sm:$0xff]
        %v1327 = vld [vmem:[%s277 + $0x1070] sm:$0xff]
        %v1328 = vld [vmem:[%s277 + $0x1078] sm:$0xff]
        %v1329 = vld [vmem:[%s277 + $0x1080] sm:$0xff]
        %v1330 = vld [vmem:[%s277 + $0x1088] sm:$0xff]
        %v1331 = vld [vmem:[%s277 + $0x1090] sm:$0xff]
        %v1332 = vld [vmem:[%s277 + $0x1098] sm:$0xff]
        %v1333 = vld [vmem:[%s277 + $0x10a0] sm:$0xff]
        %v1334 = vld [vmem:[%s277 + $0x10a8] sm:$0xff]
        %v1335 = vld [vmem:[%s277 + $0x10b0] sm:$0xff]
        %v1336 = vld [vmem:[%s277 + $0x10b8] sm:$0xff]
        %v1337 = vld [vmem:[%s277 + $0x10c0] sm:$0xff]
        %v1338 = vld [vmem:[%s277 + $0x10c8] sm:$0xff]
        %v1339 = vld [vmem:[%s277 + $0x10d0] sm:$0xff]
        %v1340 = vld [vmem:[%s277 + $0x10d8] sm:$0xff]
        %v1341 = vld [vmem:[%s277 + $0x10e0] sm:$0xff]
        %v1342 = vld [vmem:[%s277 + $0x10e8] sm:$0xff]
        %v1343 = vld [vmem:[%s277 + $0x10f0] sm:$0xff]
        %v1344 = vld [vmem:[%s277 + $0x10f8] sm:$0xff]
        %v1345 = vld [vmem:[%s277 + $0x1100] sm:$0xff]
        %v1346 = vld [vmem:[%s277 + $0x1108] sm:$0xff]
        %v1347 = vld [vmem:[%s277 + $0x1110] sm:$0xff]
        %v1348 = vld [vmem:[%s277 + $0x1118] sm:$0xff]
        %v1349 = vld [vmem:[%s277 + $0x1120] sm:$0xff]
        %v1350 = vld [vmem:[%s277 + $0x1128] sm:$0xff]
        %v1351 = vld [vmem:[%s277 + $0x1130] sm:$0xff]
        %v1352 = vld [vmem:[%s277 + $0x1138] sm:$0xff]
        %v1353 = vld [vmem:[%s277 + $0x1140] sm:$0xff]
        %v1354 = vld [vmem:[%s277 + $0x1148] sm:$0xff]
        %v1355 = vld [vmem:[%s277 + $0x1150] sm:$0xff]
        %v1356 = vld [vmem:[%s277 + $0x1158] sm:$0xff]
        %v1357 = vld [vmem:[%s277 + $0x1160] sm:$0xff]
        %v1358 = vld [vmem:[%s277 + $0x1168] sm:$0xff]
        %v1359 = vld [vmem:[%s277 + $0x1170] sm:$0xff]
        %v1360 = vld [vmem:[%s277 + $0x1178] sm:$0xff]
        %v1361 = vld [vmem:[%s277 + $0x1180] sm:$0xff]
        %v1362 = vld [vmem:[%s277 + $0x1188] sm:$0xff]
        %v1363 = vld [vmem:[%s277 + $0x1190] sm:$0xff]
        %v1364 = vld [vmem:[%s277 + $0x1198] sm:$0xff]
        %v1365 = vld [vmem:[%s277 + $0x11a0] sm:$0xff]
        %v1366 = vld [vmem:[%s277 + $0x11a8] sm:$0xff]
        %v1367 = vld [vmem:[%s277 + $0x11b0] sm:$0xff]
        %v1368 = vld [vmem:[%s277 + $0x11b8] sm:$0xff]
        %v1369 = vld [vmem:[%s277 + $0x11c0] sm:$0xff]
        %v1370 = vld [vmem:[%s277 + $0x11c8] sm:$0xff]
        %v1371 = vld [vmem:[%s277 + $0x11d0] sm:$0xff]
        %v1372 = vld [vmem:[%s277 + $0x11d8] sm:$0xff]
        %v1373 = vld [vmem:[%s277 + $0x11e0] sm:$0xff]
        %v1374 = vld [vmem:[%s277 + $0x11e8] sm:$0xff]
        %v1375 = vld [vmem:[%s277 + $0x11f0] sm:$0xff]
        %v1376 = vld [vmem:[%s277 + $0x11f8] sm:$0xff]
        %v1377 = vld [vmem:[%s286] sm:$0xff]
        %v1378 = vld [vmem:[%s286 + $0x8] sm:$0xf]
        %v1381 = vlaneseq
        %v1382 = vshrl.u32 %v1381, 7
        %v1383 = vsub.s32 0, %v1382
        %v1384 = vrot.slane %v1377, %v1383
        %v1385 = vlaneseq
        %v1386 = vshrl.u32 %v1385, 7
        %v1387 = vsub.s32 1, %v1386
        %v1388 = vrot.slane %v1377, %v1387
        %v1389 = vlaneseq
        %v1390 = vshrl.u32 %v1389, 7
        %v1391 = vsub.s32 2, %v1390
        %v1392 = vrot.slane %v1377, %v1391
        %v1393 = vlaneseq
        %v1394 = vshrl.u32 %v1393, 7
        %v1395 = vsub.s32 3, %v1394
        %v1396 = vrot.slane %v1377, %v1395
        %v1397 = vlaneseq
        %v1398 = vshrl.u32 %v1397, 7
        %v1399 = vsub.s32 4, %v1398
        %v1400 = vrot.slane %v1377, %v1399
        %v1401 = vlaneseq
        %v1402 = vshrl.u32 %v1401, 7
        %v1403 = vsub.s32 5, %v1402
        %v1404 = vrot.slane %v1377, %v1403
        %v1405 = vlaneseq
        %v1406 = vshrl.u32 %v1405, 7
        %v1407 = vsub.s32 6, %v1406
        %v1408 = vrot.slane %v1377, %v1407
        %v1409 = vlaneseq
        %v1410 = vshrl.u32 %v1409, 7
        %v1411 = vsub.s32 7, %v1410
        %v1412 = vrot.slane %v1377, %v1411
        %v1413 = vlaneseq
        %v1414 = vshrl.u32 %v1413, 7
        %v1415 = vsub.s32 0, %v1414
        %v1416 = vrot.slane %v1378, %v1415
        %v1417 = vlaneseq
        %v1418 = vshrl.u32 %v1417, 7
        %v1419 = vsub.s32 1, %v1418
        %v1420 = vrot.slane %v1378, %v1419
        %v1421 = vlaneseq
        %v1422 = vshrl.u32 %v1421, 7
        %v1423 = vsub.s32 2, %v1422
        %v1424 = vrot.slane %v1378, %v1423
        %v1425 = vlaneseq
        %v1426 = vshrl.u32 %v1425, 7
        %v1427 = vsub.s32 3, %v1426
        %v1428 = vrot.slane %v1378, %v1427
        %v2017 = vunpack.c.l.b16 %v801
        %v2018 = vunpack.c.h.b16 %v801
        %v2019 = vunpack.c.l.b16 %v802
        %v2020 = vunpack.c.h.b16 %v802
        %v2021 = vunpack.c.l.b16 %v803
        %v2022 = vunpack.c.h.b16 %v803
        %v2023 = vunpack.c.l.b16 %v804
        %v2024 = vunpack.c.h.b16 %v804
        %v2025 = vunpack.c.l.b16 %v805
        %v2026 = vunpack.c.h.b16 %v805
        %v2027 = vunpack.c.l.b16 %v806
        %v2028 = vunpack.c.h.b16 %v806
        %v2029 = vunpack.c.l.b16 %v807
        %v2030 = vunpack.c.h.b16 %v807
        %v2031 = vunpack.c.l.b16 %v808
        %v2032 = vunpack.c.h.b16 %v808
        %v2033 = vunpack.c.l.b16 %v809
        %v2034 = vunpack.c.h.b16 %v809
        %v2035 = vunpack.c.l.b16 %v810
        %v2036 = vunpack.c.h.b16 %v810
        %v2037 = vunpack.c.l.b16 %v811
        %v2038 = vunpack.c.h.b16 %v811
        %v2039 = vunpack.c.l.b16 %v812
        %v2040 = vunpack.c.h.b16 %v812
        %v2041 = vunpack.c.l.b16 %v813
        %v2042 = vunpack.c.h.b16 %v813
        %v2043 = vunpack.c.l.b16 %v814
        %v2044 = vunpack.c.h.b16 %v814
        %v2045 = vunpack.c.l.b16 %v815
        %v2046 = vunpack.c.h.b16 %v815
        %v2047 = vunpack.c.l.b16 %v816
        %v2048 = vunpack.c.h.b16 %v816
        %v2049 = vunpack.c.l.b16 %v817
        %v2050 = vunpack.c.h.b16 %v817
        %v2051 = vunpack.c.l.b16 %v818
        %v2052 = vunpack.c.h.b16 %v818
        %v2053 = vunpack.c.l.b16 %v819
        %v2054 = vunpack.c.h.b16 %v819
        %v2055 = vunpack.c.l.b16 %v820
        %v2056 = vunpack.c.h.b16 %v820
        %v2057 = vunpack.c.l.b16 %v821
        %v2058 = vunpack.c.h.b16 %v821
        %v2059 = vunpack.c.l.b16 %v822
        %v2060 = vunpack.c.h.b16 %v822
        %v2061 = vunpack.c.l.b16 %v823
        %v2062 = vunpack.c.h.b16 %v823
        %v2063 = vunpack.c.l.b16 %v824
        %v2064 = vunpack.c.h.b16 %v824
        %v2065 = vunpack.c.l.b16 %v825
        %v2066 = vunpack.c.h.b16 %v825
        %v2067 = vunpack.c.l.b16 %v826
        %v2068 = vunpack.c.h.b16 %v826
        %v2069 = vunpack.c.l.b16 %v827
        %v2070 = vunpack.c.h.b16 %v827
        %v2071 = vunpack.c.l.b16 %v828
        %v2072 = vunpack.c.h.b16 %v828
        %v2073 = vunpack.c.l.b16 %v829
        %v2074 = vunpack.c.h.b16 %v829
        %v2075 = vunpack.c.l.b16 %v830
        %v2076 = vunpack.c.h.b16 %v830
        %v2077 = vunpack.c.l.b16 %v831
        %v2078 = vunpack.c.h.b16 %v831
        %v2079 = vunpack.c.l.b16 %v832
        %v2080 = vunpack.c.h.b16 %v832
        %v2081 = vunpack.c.l.b16 %v833
        %v2082 = vunpack.c.h.b16 %v833
        %v2083 = vunpack.c.l.b16 %v834
        %v2084 = vunpack.c.h.b16 %v834
        %v2085 = vunpack.c.l.b16 %v835
        %v2086 = vunpack.c.h.b16 %v835
        %v2087 = vunpack.c.l.b16 %v836
        %v2088 = vunpack.c.h.b16 %v836
        %v2089 = vunpack.c.l.b16 %v837
        %v2090 = vunpack.c.h.b16 %v837
        %v2091 = vunpack.c.l.b16 %v838
        %v2092 = vunpack.c.h.b16 %v838
        %v2093 = vunpack.c.l.b16 %v839
        %v2094 = vunpack.c.h.b16 %v839
        %v2095 = vunpack.c.l.b16 %v840
        %v2096 = vunpack.c.h.b16 %v840
        %v2097 = vunpack.c.l.b16 %v841
        %v2098 = vunpack.c.h.b16 %v841
        %v2099 = vunpack.c.l.b16 %v842
        %v2100 = vunpack.c.h.b16 %v842
        %v2101 = vunpack.c.l.b16 %v843
        %v2102 = vunpack.c.h.b16 %v843
        %v2103 = vunpack.c.l.b16 %v844
        %v2104 = vunpack.c.h.b16 %v844
        %v2105 = vunpack.c.l.b16 %v845
        %v2106 = vunpack.c.h.b16 %v845
        %v2107 = vunpack.c.l.b16 %v846
        %v2108 = vunpack.c.h.b16 %v846
        %v2109 = vunpack.c.l.b16 %v847
        %v2110 = vunpack.c.h.b16 %v847
        %v2111 = vunpack.c.l.b16 %v848
        %v2112 = vunpack.c.h.b16 %v848
        %v2113 = vunpack.c.l.b16 %v849
        %v2114 = vunpack.c.h.b16 %v849
        %v2115 = vunpack.c.l.b16 %v850
        %v2116 = vunpack.c.h.b16 %v850
        %v2117 = vunpack.c.l.b16 %v851
        %v2118 = vunpack.c.h.b16 %v851
        %v2119 = vunpack.c.l.b16 %v852
        %v2120 = vunpack.c.h.b16 %v852
        %v2121 = vunpack.c.l.b16 %v853
        %v2122 = vunpack.c.h.b16 %v853
        %v2123 = vunpack.c.l.b16 %v854
        %v2124 = vunpack.c.h.b16 %v854
        %v2125 = vunpack.c.l.b16 %v855
        %v2126 = vunpack.c.h.b16 %v855
        %v2127 = vunpack.c.l.b16 %v856
        %v2128 = vunpack.c.h.b16 %v856
        %v2129 = vunpack.c.l.b16 %v857
        %v2130 = vunpack.c.h.b16 %v857
        %v2131 = vunpack.c.l.b16 %v858
        %v2132 = vunpack.c.h.b16 %v858
        %v2133 = vunpack.c.l.b16 %v859
        %v2134 = vunpack.c.h.b16 %v859
        %v2135 = vunpack.c.l.b16 %v860
        %v2136 = vunpack.c.h.b16 %v860
        %v2137 = vunpack.c.l.b16 %v861
        %v2138 = vunpack.c.h.b16 %v861
        %v2139 = vunpack.c.l.b16 %v862
        %v2140 = vunpack.c.h.b16 %v862
        %v2141 = vunpack.c.l.b16 %v863
        %v2142 = vunpack.c.h.b16 %v863
        %v2143 = vunpack.c.l.b16 %v864
        %v2144 = vunpack.c.h.b16 %v864
        %v2145 = vunpack.c.l.b16 %v865
        %v2146 = vunpack.c.h.b16 %v865
        %v2147 = vunpack.c.l.b16 %v866
        %v2148 = vunpack.c.h.b16 %v866
        %v2149 = vunpack.c.l.b16 %v867
        %v2150 = vunpack.c.h.b16 %v867
        %v2151 = vunpack.c.l.b16 %v868
        %v2152 = vunpack.c.h.b16 %v868
        %v2153 = vunpack.c.l.b16 %v869
        %v2154 = vunpack.c.h.b16 %v869
        %v2155 = vunpack.c.l.b16 %v870
        %v2156 = vunpack.c.h.b16 %v870
        %v2157 = vunpack.c.l.b16 %v871
        %v2158 = vunpack.c.h.b16 %v871
        %v2159 = vunpack.c.l.b16 %v872
        %v2160 = vunpack.c.h.b16 %v872
        %v2161 = vunpack.c.l.b16 %v873
        %v2162 = vunpack.c.h.b16 %v873
        %v2163 = vunpack.c.l.b16 %v874
        %v2164 = vunpack.c.h.b16 %v874
        %v2165 = vunpack.c.l.b16 %v875
        %v2166 = vunpack.c.h.b16 %v875
        %v2167 = vunpack.c.l.b16 %v876
        %v2168 = vunpack.c.h.b16 %v876
        %v2169 = vunpack.c.l.b16 %v877
        %v2170 = vunpack.c.h.b16 %v877
        %v2171 = vunpack.c.l.b16 %v878
        %v2172 = vunpack.c.h.b16 %v878
        %v2173 = vunpack.c.l.b16 %v879
        %v2174 = vunpack.c.h.b16 %v879
        %v2175 = vunpack.c.l.b16 %v880
        %v2176 = vunpack.c.h.b16 %v880
        %v2177 = vunpack.c.l.b16 %v881
        %v2178 = vunpack.c.h.b16 %v881
        %v2179 = vunpack.c.l.b16 %v882
        %v2180 = vunpack.c.h.b16 %v882
        %v2181 = vunpack.c.l.b16 %v883
        %v2182 = vunpack.c.h.b16 %v883
        %v2183 = vunpack.c.l.b16 %v884
        %v2184 = vunpack.c.h.b16 %v884
        %v2185 = vunpack.c.l.b16 %v885
        %v2186 = vunpack.c.h.b16 %v885
        %v2187 = vunpack.c.l.b16 %v886
        %v2188 = vunpack.c.h.b16 %v886
        %v2189 = vunpack.c.l.b16 %v887
        %v2190 = vunpack.c.h.b16 %v887
        %v2191 = vunpack.c.l.b16 %v888
        %v2192 = vunpack.c.h.b16 %v888
        %v2193 = vunpack.c.l.b16 %v889
        %v2194 = vunpack.c.h.b16 %v889
        %v2195 = vunpack.c.l.b16 %v890
        %v2196 = vunpack.c.h.b16 %v890
        %v2197 = vunpack.c.l.b16 %v891
        %v2198 = vunpack.c.h.b16 %v891
        %v2199 = vunpack.c.l.b16 %v892
        %v2200 = vunpack.c.h.b16 %v892
        %v2201 = vunpack.c.l.b16 %v893
        %v2202 = vunpack.c.h.b16 %v893
        %v2203 = vunpack.c.l.b16 %v894
        %v2204 = vunpack.c.h.b16 %v894
        %v2205 = vunpack.c.l.b16 %v895
        %v2206 = vunpack.c.h.b16 %v895
        %v2207 = vunpack.c.l.b16 %v896
        %v2208 = vunpack.c.h.b16 %v896
        %v2209 = vunpack.c.l.b16 %v897
        %v2210 = vunpack.c.h.b16 %v897
        %v2211 = vunpack.c.l.b16 %v898
        %v2212 = vunpack.c.h.b16 %v898
        %v2213 = vunpack.c.l.b16 %v899
        %v2214 = vunpack.c.h.b16 %v899
        %v2215 = vunpack.c.l.b16 %v900
        %v2216 = vunpack.c.h.b16 %v900
        %v2217 = vunpack.c.l.b16 %v901
        %v2218 = vunpack.c.h.b16 %v901
        %v2219 = vunpack.c.l.b16 %v902
        %v2220 = vunpack.c.h.b16 %v902
        %v2221 = vunpack.c.l.b16 %v903
        %v2222 = vunpack.c.h.b16 %v903
        %v2223 = vunpack.c.l.b16 %v904
        %v2224 = vunpack.c.h.b16 %v904
        %v2225 = vunpack.c.l.b16 %v905
        %v2226 = vunpack.c.h.b16 %v905
        %v2227 = vunpack.c.l.b16 %v906
        %v2228 = vunpack.c.h.b16 %v906
        %v2229 = vunpack.c.l.b16 %v907
        %v2230 = vunpack.c.h.b16 %v907
        %v2231 = vunpack.c.l.b16 %v908
        %v2232 = vunpack.c.h.b16 %v908
        %v2233 = vunpack.c.l.b16 %v909
        %v2234 = vunpack.c.h.b16 %v909
        %v2235 = vunpack.c.l.b16 %v910
        %v2236 = vunpack.c.h.b16 %v910
        %v2237 = vunpack.c.l.b16 %v911
        %v2238 = vunpack.c.h.b16 %v911
        %v2239 = vunpack.c.l.b16 %v912
        %v2240 = vunpack.c.h.b16 %v912
        %v2241 = vunpack.c.l.b16 %v913
        %v2242 = vunpack.c.h.b16 %v913
        %v2243 = vunpack.c.l.b16 %v914
        %v2244 = vunpack.c.h.b16 %v914
        %v2245 = vunpack.c.l.b16 %v915
        %v2246 = vunpack.c.h.b16 %v915
        %v2247 = vunpack.c.l.b16 %v916
        %v2248 = vunpack.c.h.b16 %v916
        %v2249 = vunpack.c.l.b16 %v917
        %v2250 = vunpack.c.h.b16 %v917
        %v2251 = vunpack.c.l.b16 %v918
        %v2252 = vunpack.c.h.b16 %v918
        %v2253 = vunpack.c.l.b16 %v919
        %v2254 = vunpack.c.h.b16 %v919
        %v2255 = vunpack.c.l.b16 %v920
        %v2256 = vunpack.c.h.b16 %v920
        %v2257 = vunpack.c.l.b16 %v921
        %v2258 = vunpack.c.h.b16 %v921
        %v2259 = vunpack.c.l.b16 %v922
        %v2260 = vunpack.c.h.b16 %v922
        %v2261 = vunpack.c.l.b16 %v923
        %v2262 = vunpack.c.h.b16 %v923
        %v2263 = vunpack.c.l.b16 %v924
        %v2264 = vunpack.c.h.b16 %v924
        %v2265 = vunpack.c.l.b16 %v925
        %v2266 = vunpack.c.h.b16 %v925
        %v2267 = vunpack.c.l.b16 %v926
        %v2268 = vunpack.c.h.b16 %v926
        %v2269 = vunpack.c.l.b16 %v927
        %v2270 = vunpack.c.h.b16 %v927
        %v2271 = vunpack.c.l.b16 %v928
        %v2272 = vunpack.c.h.b16 %v928
        %v2273 = vunpack.c.l.b16 %v929
        %v2274 = vunpack.c.h.b16 %v929
        %v2275 = vunpack.c.l.b16 %v930
        %v2276 = vunpack.c.h.b16 %v930
        %v2277 = vunpack.c.l.b16 %v931
        %v2278 = vunpack.c.h.b16 %v931
        %v2279 = vunpack.c.l.b16 %v932
        %v2280 = vunpack.c.h.b16 %v932
        %v2281 = vunpack.c.l.b16 %v933
        %v2282 = vunpack.c.h.b16 %v933
        %v2283 = vunpack.c.l.b16 %v934
        %v2284 = vunpack.c.h.b16 %v934
        %v2285 = vunpack.c.l.b16 %v935
        %v2286 = vunpack.c.h.b16 %v935
        %v2287 = vunpack.c.l.b16 %v936
        %v2288 = vunpack.c.h.b16 %v936
        %v2289 = vunpack.c.l.b16 %v937
        %v2290 = vunpack.c.h.b16 %v937
        %v2291 = vunpack.c.l.b16 %v938
        %v2292 = vunpack.c.h.b16 %v938
        %v2293 = vunpack.c.l.b16 %v939
        %v2294 = vunpack.c.h.b16 %v939
        %v2295 = vunpack.c.l.b16 %v940
        %v2296 = vunpack.c.h.b16 %v940
        %v2297 = vunpack.c.l.b16 %v941
        %v2298 = vunpack.c.h.b16 %v941
        %v2299 = vunpack.c.l.b16 %v942
        %v2300 = vunpack.c.h.b16 %v942
        %v2301 = vunpack.c.l.b16 %v943
        %v2302 = vunpack.c.h.b16 %v943
        %v2303 = vunpack.c.l.b16 %v944
        %v2304 = vunpack.c.h.b16 %v944
        %v2305 = vunpack.c.l.b16 %v945
        %v2306 = vunpack.c.h.b16 %v945
        %v2307 = vunpack.c.l.b16 %v946
        %v2308 = vunpack.c.h.b16 %v946
        %v2309 = vunpack.c.l.b16 %v947
        %v2310 = vunpack.c.h.b16 %v947
        %v2311 = vunpack.c.l.b16 %v948
        %v2312 = vunpack.c.h.b16 %v948
        %v2313 = vunpack.c.l.b16 %v949
        %v2314 = vunpack.c.h.b16 %v949
        %v2315 = vunpack.c.l.b16 %v950
        %v2316 = vunpack.c.h.b16 %v950
        %v2317 = vunpack.c.l.b16 %v951
        %v2318 = vunpack.c.h.b16 %v951
        %v2319 = vunpack.c.l.b16 %v952
        %v2320 = vunpack.c.h.b16 %v952
        %v2321 = vunpack.c.l.b16 %v953
        %v2322 = vunpack.c.h.b16 %v953
        %v2323 = vunpack.c.l.b16 %v954
        %v2324 = vunpack.c.h.b16 %v954
        %v2325 = vunpack.c.l.b16 %v955
        %v2326 = vunpack.c.h.b16 %v955
        %v2327 = vunpack.c.l.b16 %v956
        %v2328 = vunpack.c.h.b16 %v956
        %v2329 = vunpack.c.l.b16 %v957
        %v2330 = vunpack.c.h.b16 %v957
        %v2331 = vunpack.c.l.b16 %v958
        %v2332 = vunpack.c.h.b16 %v958
        %v2333 = vunpack.c.l.b16 %v959
        %v2334 = vunpack.c.h.b16 %v959
        %v2335 = vunpack.c.l.b16 %v960
        %v2336 = vunpack.c.h.b16 %v960
        %v2337 = vunpack.c.l.b16 %v961
        %v2338 = vunpack.c.h.b16 %v961
        %v2339 = vunpack.c.l.b16 %v962
        %v2340 = vunpack.c.h.b16 %v962
        %v2341 = vunpack.c.l.b16 %v963
        %v2342 = vunpack.c.h.b16 %v963
        %v2343 = vunpack.c.l.b16 %v964
        %v2344 = vunpack.c.h.b16 %v964
        %v2345 = vunpack.c.l.b16 %v965
        %v2346 = vunpack.c.h.b16 %v965
        %v2347 = vunpack.c.l.b16 %v966
        %v2348 = vunpack.c.h.b16 %v966
        %v2349 = vunpack.c.l.b16 %v967
        %v2350 = vunpack.c.h.b16 %v967
        %v2351 = vunpack.c.l.b16 %v968
        %v2352 = vunpack.c.h.b16 %v968
        %v2353 = vunpack.c.l.b16 %v969
        %v2354 = vunpack.c.h.b16 %v969
        %v2355 = vunpack.c.l.b16 %v970
        %v2356 = vunpack.c.h.b16 %v970
        %v2357 = vunpack.c.l.b16 %v971
        %v2358 = vunpack.c.h.b16 %v971
        %v2359 = vunpack.c.l.b16 %v972
        %v2360 = vunpack.c.h.b16 %v972
        %v2361 = vunpack.c.l.b16 %v973
        %v2362 = vunpack.c.h.b16 %v973
        %v2363 = vunpack.c.l.b16 %v974
        %v2364 = vunpack.c.h.b16 %v974
        %v2365 = vunpack.c.l.b16 %v975
        %v2366 = vunpack.c.h.b16 %v975
        %v2367 = vunpack.c.l.b16 %v976
        %v2368 = vunpack.c.h.b16 %v976
        %v2369 = vunpack.c.l.b16 %v977
        %v2370 = vunpack.c.h.b16 %v977
        %v2371 = vunpack.c.l.b16 %v978
        %v2372 = vunpack.c.h.b16 %v978
        %v2373 = vunpack.c.l.b16 %v979
        %v2374 = vunpack.c.h.b16 %v979
        %v2375 = vunpack.c.l.b16 %v980
        %v2376 = vunpack.c.h.b16 %v980
        %v2377 = vunpack.c.l.b16 %v981
        %v2378 = vunpack.c.h.b16 %v981
        %v2379 = vunpack.c.l.b16 %v982
        %v2380 = vunpack.c.h.b16 %v982
        %v2381 = vunpack.c.l.b16 %v983
        %v2382 = vunpack.c.h.b16 %v983
        %v2383 = vunpack.c.l.b16 %v984
        %v2384 = vunpack.c.h.b16 %v984
        %v2385 = vunpack.c.l.b16 %v985
        %v2386 = vunpack.c.h.b16 %v985
        %v2387 = vunpack.c.l.b16 %v986
        %v2388 = vunpack.c.h.b16 %v986
        %v2389 = vunpack.c.l.b16 %v987
        %v2390 = vunpack.c.h.b16 %v987
        %v2391 = vunpack.c.l.b16 %v988
        %v2392 = vunpack.c.h.b16 %v988
        %v2393 = vunpack.c.l.b16 %v989
        %v2394 = vunpack.c.h.b16 %v989
        %v2395 = vunpack.c.l.b16 %v990
        %v2396 = vunpack.c.h.b16 %v990
        %v2397 = vunpack.c.l.b16 %v991
        %v2398 = vunpack.c.h.b16 %v991
        %v2399 = vunpack.c.l.b16 %v992
        %v2400 = vunpack.c.h.b16 %v992
        %v2401 = vunpack.c.l.b16 %v993
        %v2402 = vunpack.c.h.b16 %v993
        %v2403 = vunpack.c.l.b16 %v994
        %v2404 = vunpack.c.h.b16 %v994
        %v2405 = vunpack.c.l.b16 %v995
        %v2406 = vunpack.c.h.b16 %v995
        %v2407 = vunpack.c.l.b16 %v996
        %v2408 = vunpack.c.h.b16 %v996
        %v2409 = vunpack.c.l.b16 %v997
        %v2410 = vunpack.c.h.b16 %v997
        %v2411 = vunpack.c.l.b16 %v998
        %v2412 = vunpack.c.h.b16 %v998
        %v2413 = vunpack.c.l.b16 %v999
        %v2414 = vunpack.c.h.b16 %v999
        %v2415 = vunpack.c.l.b16 %v1000
        %v2416 = vunpack.c.h.b16 %v1000
        %v2417 = vunpack.c.l.b16 %v1001
        %v2418 = vunpack.c.h.b16 %v1001
        %v2419 = vunpack.c.l.b16 %v1002
        %v2420 = vunpack.c.h.b16 %v1002
        %v2421 = vunpack.c.l.b16 %v1003
        %v2422 = vunpack.c.h.b16 %v1003
        %v2423 = vunpack.c.l.b16 %v1004
        %v2424 = vunpack.c.h.b16 %v1004
        %v2425 = vunpack.c.l.b16 %v1005
        %v2426 = vunpack.c.h.b16 %v1005
        %v2427 = vunpack.c.l.b16 %v1006
        %v2428 = vunpack.c.h.b16 %v1006
        %v2429 = vunpack.c.l.b16 %v1007
        %v2430 = vunpack.c.h.b16 %v1007
        %v2431 = vunpack.c.l.b16 %v1008
        %v2432 = vunpack.c.h.b16 %v1008
        %v2433 = vunpack.c.l.b16 %v1009
        %v2434 = vunpack.c.h.b16 %v1009
        %v2435 = vunpack.c.l.b16 %v1010
        %v2436 = vunpack.c.h.b16 %v1010
        %v2437 = vunpack.c.l.b16 %v1011
        %v2438 = vunpack.c.h.b16 %v1011
        %v2439 = vunpack.c.l.b16 %v1012
        %v2440 = vunpack.c.h.b16 %v1012
        %v2441 = vunpack.c.l.b16 %v1013
        %v2442 = vunpack.c.h.b16 %v1013
        %v2443 = vunpack.c.l.b16 %v1014
        %v2444 = vunpack.c.h.b16 %v1014
        %v2445 = vunpack.c.l.b16 %v1015
        %v2446 = vunpack.c.h.b16 %v1015
        %v2447 = vunpack.c.l.b16 %v1016
        %v2448 = vunpack.c.h.b16 %v1016
        %v2449 = vunpack.c.l.b16 %v1017
        %v2450 = vunpack.c.h.b16 %v1017
        %v2451 = vunpack.c.l.b16 %v1018
        %v2452 = vunpack.c.h.b16 %v1018
        %v2453 = vunpack.c.l.b16 %v1019
        %v2454 = vunpack.c.h.b16 %v1019
        %v2455 = vunpack.c.l.b16 %v1020
        %v2456 = vunpack.c.h.b16 %v1020
        %v2457 = vunpack.c.l.b16 %v1021
        %v2458 = vunpack.c.h.b16 %v1021
        %v2459 = vunpack.c.l.b16 %v1022
        %v2460 = vunpack.c.h.b16 %v1022
        %v2461 = vunpack.c.l.b16 %v1023
        %v2462 = vunpack.c.h.b16 %v1023
        %v2463 = vunpack.c.l.b16 %v1024
        %v2464 = vunpack.c.h.b16 %v1024
        %v2465 = vunpack.c.l.b16 %v1025
        %v2466 = vunpack.c.h.b16 %v1025
        %v2467 = vunpack.c.l.b16 %v1026
        %v2468 = vunpack.c.h.b16 %v1026
        %v2469 = vunpack.c.l.b16 %v1027
        %v2470 = vunpack.c.h.b16 %v1027
        %v2471 = vunpack.c.l.b16 %v1028
        %v2472 = vunpack.c.h.b16 %v1028
        %v2473 = vunpack.c.l.b16 %v1029
        %v2474 = vunpack.c.h.b16 %v1029
        %v2475 = vunpack.c.l.b16 %v1030
        %v2476 = vunpack.c.h.b16 %v1030
        %v2477 = vunpack.c.l.b16 %v1031
        %v2478 = vunpack.c.h.b16 %v1031
        %v2479 = vunpack.c.l.b16 %v1032
        %v2480 = vunpack.c.h.b16 %v1032
        %v2481 = vunpack.c.l.b16 %v1033
        %v2482 = vunpack.c.h.b16 %v1033
        %v2483 = vunpack.c.l.b16 %v1034
        %v2484 = vunpack.c.h.b16 %v1034
        %v2485 = vunpack.c.l.b16 %v1035
        %v2486 = vunpack.c.h.b16 %v1035
        %v2487 = vunpack.c.l.b16 %v1036
        %v2488 = vunpack.c.h.b16 %v1036
        %v2489 = vunpack.c.l.b16 %v1037
        %v2490 = vunpack.c.h.b16 %v1037
        %v2491 = vunpack.c.l.b16 %v1038
        %v2492 = vunpack.c.h.b16 %v1038
        %v2493 = vunpack.c.l.b16 %v1039
        %v2494 = vunpack.c.h.b16 %v1039
        %v2495 = vunpack.c.l.b16 %v1040
        %v2496 = vunpack.c.h.b16 %v1040
        %v2497 = vunpack.c.l.b16 %v1041
        %v2498 = vunpack.c.h.b16 %v1041
        %v2499 = vunpack.c.l.b16 %v1042
        %v2500 = vunpack.c.h.b16 %v1042
        %v2501 = vunpack.c.l.b16 %v1043
        %v2502 = vunpack.c.h.b16 %v1043
        %v2503 = vunpack.c.l.b16 %v1044
        %v2504 = vunpack.c.h.b16 %v1044
        %v2505 = vunpack.c.l.b16 %v1045
        %v2506 = vunpack.c.h.b16 %v1045
        %v2507 = vunpack.c.l.b16 %v1046
        %v2508 = vunpack.c.h.b16 %v1046
        %v2509 = vunpack.c.l.b16 %v1047
        %v2510 = vunpack.c.h.b16 %v1047
        %v2511 = vunpack.c.l.b16 %v1048
        %v2512 = vunpack.c.h.b16 %v1048
        %v2513 = vunpack.c.l.b16 %v1049
        %v2514 = vunpack.c.h.b16 %v1049
        %v2515 = vunpack.c.l.b16 %v1050
        %v2516 = vunpack.c.h.b16 %v1050
        %v2517 = vunpack.c.l.b16 %v1051
        %v2518 = vunpack.c.h.b16 %v1051
        %v2519 = vunpack.c.l.b16 %v1052
        %v2520 = vunpack.c.h.b16 %v1052
        %v2521 = vunpack.c.l.b16 %v1053
        %v2522 = vunpack.c.h.b16 %v1053
        %v2523 = vunpack.c.l.b16 %v1054
        %v2524 = vunpack.c.h.b16 %v1054
        %v2525 = vunpack.c.l.b16 %v1055
        %v2526 = vunpack.c.h.b16 %v1055
        %v2527 = vunpack.c.l.b16 %v1056
        %v2528 = vunpack.c.h.b16 %v1056
        %v2529 = vunpack.c.l.b16 %v1057
        %v2530 = vunpack.c.h.b16 %v1057
        %v2531 = vunpack.c.l.b16 %v1058
        %v2532 = vunpack.c.h.b16 %v1058
        %v2533 = vunpack.c.l.b16 %v1059
        %v2534 = vunpack.c.h.b16 %v1059
        %v2535 = vunpack.c.l.b16 %v1060
        %v2536 = vunpack.c.h.b16 %v1060
        %v2537 = vunpack.c.l.b16 %v1061
        %v2538 = vunpack.c.h.b16 %v1061
        %v2539 = vunpack.c.l.b16 %v1062
        %v2540 = vunpack.c.h.b16 %v1062
        %v2541 = vunpack.c.l.b16 %v1063
        %v2542 = vunpack.c.h.b16 %v1063
        %v2543 = vunpack.c.l.b16 %v1064
        %v2544 = vunpack.c.h.b16 %v1064
        %v2545 = vunpack.c.l.b16 %v1065
        %v2546 = vunpack.c.h.b16 %v1065
        %v2547 = vunpack.c.l.b16 %v1066
        %v2548 = vunpack.c.h.b16 %v1066
        %v2549 = vunpack.c.l.b16 %v1067
        %v2550 = vunpack.c.h.b16 %v1067
        %v2551 = vunpack.c.l.b16 %v1068
        %v2552 = vunpack.c.h.b16 %v1068
        %v2553 = vunpack.c.l.b16 %v1069
        %v2554 = vunpack.c.h.b16 %v1069
        %v2555 = vunpack.c.l.b16 %v1070
        %v2556 = vunpack.c.h.b16 %v1070
        %v2557 = vunpack.c.l.b16 %v1071
        %v2558 = vunpack.c.h.b16 %v1071
        %v2559 = vunpack.c.l.b16 %v1072
        %v2560 = vunpack.c.h.b16 %v1072
        %v2561 = vunpack.c.l.b16 %v1073
        %v2562 = vunpack.c.h.b16 %v1073
        %v2563 = vunpack.c.l.b16 %v1074
        %v2564 = vunpack.c.h.b16 %v1074
        %v2565 = vunpack.c.l.b16 %v1075
        %v2566 = vunpack.c.h.b16 %v1075
        %v2567 = vunpack.c.l.b16 %v1076
        %v2568 = vunpack.c.h.b16 %v1076
        %v2569 = vunpack.c.l.b16 %v1077
        %v2570 = vunpack.c.h.b16 %v1077
        %v2571 = vunpack.c.l.b16 %v1078
        %v2572 = vunpack.c.h.b16 %v1078
        %v2573 = vunpack.c.l.b16 %v1079
        %v2574 = vunpack.c.h.b16 %v1079
        %v2575 = vunpack.c.l.b16 %v1080
        %v2576 = vunpack.c.h.b16 %v1080
        %v2577 = vunpack.c.l.b16 %v1081
        %v2578 = vunpack.c.h.b16 %v1081
        %v2579 = vunpack.c.l.b16 %v1082
        %v2580 = vunpack.c.h.b16 %v1082
        %v2581 = vunpack.c.l.b16 %v1083
        %v2582 = vunpack.c.h.b16 %v1083
        %v2583 = vunpack.c.l.b16 %v1084
        %v2584 = vunpack.c.h.b16 %v1084
        %v2585 = vunpack.c.l.b16 %v1085
        %v2586 = vunpack.c.h.b16 %v1085
        %v2587 = vunpack.c.l.b16 %v1086
        %v2588 = vunpack.c.h.b16 %v1086
        %v2589 = vunpack.c.l.b16 %v1087
        %v2590 = vunpack.c.h.b16 %v1087
        %v2591 = vunpack.c.l.b16 %v1088
        %v2592 = vunpack.c.h.b16 %v1088
        %v2593 = vunpack.c.l.b16 %v1089
        %v2594 = vunpack.c.h.b16 %v1089
        %v2595 = vunpack.c.l.b16 %v1090
        %v2596 = vunpack.c.h.b16 %v1090
        %v2597 = vunpack.c.l.b16 %v1091
        %v2598 = vunpack.c.h.b16 %v1091
        %v2599 = vunpack.c.l.b16 %v1092
        %v2600 = vunpack.c.h.b16 %v1092
        %v2601 = vunpack.c.l.b16 %v1093
        %v2602 = vunpack.c.h.b16 %v1093
        %v2603 = vunpack.c.l.b16 %v1094
        %v2604 = vunpack.c.h.b16 %v1094
        %v2605 = vunpack.c.l.b16 %v1095
        %v2606 = vunpack.c.h.b16 %v1095
        %v2607 = vunpack.c.l.b16 %v1096
        %v2608 = vunpack.c.h.b16 %v1096
        %v2609 = vunpack.c.l.b16 %v1097
        %v2610 = vunpack.c.h.b16 %v1097
        %v2611 = vunpack.c.l.b16 %v1098
        %v2612 = vunpack.c.h.b16 %v1098
        %v2613 = vunpack.c.l.b16 %v1099
        %v2614 = vunpack.c.h.b16 %v1099
        %v2615 = vunpack.c.l.b16 %v1100
        %v2616 = vunpack.c.h.b16 %v1100
        %v2617 = vunpack.c.l.b16 %v1101
        %v2618 = vunpack.c.h.b16 %v1101
        %v2619 = vunpack.c.l.b16 %v1102
        %v2620 = vunpack.c.h.b16 %v1102
        %v2621 = vunpack.c.l.b16 %v1103
        %v2622 = vunpack.c.h.b16 %v1103
        %v2623 = vunpack.c.l.b16 %v1104
        %v2624 = vunpack.c.h.b16 %v1104
        %v2625 = vunpack.c.l.b16 %v1105
        %v2626 = vunpack.c.h.b16 %v1105
        %v2627 = vunpack.c.l.b16 %v1106
        %v2628 = vunpack.c.h.b16 %v1106
        %v2629 = vunpack.c.l.b16 %v1107
        %v2630 = vunpack.c.h.b16 %v1107
        %v2631 = vunpack.c.l.b16 %v1108
        %v2632 = vunpack.c.h.b16 %v1108
        %v2633 = vunpack.c.l.b16 %v1109
        %v2634 = vunpack.c.h.b16 %v1109
        %v2635 = vunpack.c.l.b16 %v1110
        %v2636 = vunpack.c.h.b16 %v1110
        %v2637 = vunpack.c.l.b16 %v1111
        %v2638 = vunpack.c.h.b16 %v1111
        %v2639 = vunpack.c.l.b16 %v1112
        %v2640 = vunpack.c.h.b16 %v1112
        %v2641 = vunpack.c.l.b16 %v1113
        %v2642 = vunpack.c.h.b16 %v1113
        %v2643 = vunpack.c.l.b16 %v1114
        %v2644 = vunpack.c.h.b16 %v1114
        %v2645 = vunpack.c.l.b16 %v1115
        %v2646 = vunpack.c.h.b16 %v1115
        %v2647 = vunpack.c.l.b16 %v1116
        %v2648 = vunpack.c.h.b16 %v1116
        %v2649 = vunpack.c.l.b16 %v1117
        %v2650 = vunpack.c.h.b16 %v1117
        %v2651 = vunpack.c.l.b16 %v1118
        %v2652 = vunpack.c.h.b16 %v1118
        %v2653 = vunpack.c.l.b16 %v1119
        %v2654 = vunpack.c.h.b16 %v1119
        %v2655 = vunpack.c.l.b16 %v1120
        %v2656 = vunpack.c.h.b16 %v1120
        %v2657 = vunpack.c.l.b16 %v1121
        %v2658 = vunpack.c.h.b16 %v1121
        %v2659 = vunpack.c.l.b16 %v1122
        %v2660 = vunpack.c.h.b16 %v1122
        %v2661 = vunpack.c.l.b16 %v1123
        %v2662 = vunpack.c.h.b16 %v1123
        %v2663 = vunpack.c.l.b16 %v1124
        %v2664 = vunpack.c.h.b16 %v1124
        %v2665 = vunpack.c.l.b16 %v1125
        %v2666 = vunpack.c.h.b16 %v1125
        %v2667 = vunpack.c.l.b16 %v1126
        %v2668 = vunpack.c.h.b16 %v1126
        %v2669 = vunpack.c.l.b16 %v1127
        %v2670 = vunpack.c.h.b16 %v1127
        %v2671 = vunpack.c.l.b16 %v1128
        %v2672 = vunpack.c.h.b16 %v1128
        %v2673 = vunpack.c.l.b16 %v1129
        %v2674 = vunpack.c.h.b16 %v1129
        %v2675 = vunpack.c.l.b16 %v1130
        %v2676 = vunpack.c.h.b16 %v1130
        %v2677 = vunpack.c.l.b16 %v1131
        %v2678 = vunpack.c.h.b16 %v1131
        %v2679 = vunpack.c.l.b16 %v1132
        %v2680 = vunpack.c.h.b16 %v1132
        %v2681 = vunpack.c.l.b16 %v1133
        %v2682 = vunpack.c.h.b16 %v1133
        %v2683 = vunpack.c.l.b16 %v1134
        %v2684 = vunpack.c.h.b16 %v1134
        %v2685 = vunpack.c.l.b16 %v1135
        %v2686 = vunpack.c.h.b16 %v1135
        %v2687 = vunpack.c.l.b16 %v1136
        %v2688 = vunpack.c.h.b16 %v1136
        %v2689 = vunpack.c.l.b16 %v1137
        %v2690 = vunpack.c.h.b16 %v1137
        %v2691 = vunpack.c.l.b16 %v1138
        %v2692 = vunpack.c.h.b16 %v1138
        %v2693 = vunpack.c.l.b16 %v1139
        %v2694 = vunpack.c.h.b16 %v1139
        %v2695 = vunpack.c.l.b16 %v1140
        %v2696 = vunpack.c.h.b16 %v1140
        %v2697 = vunpack.c.l.b16 %v1141
        %v2698 = vunpack.c.h.b16 %v1141
        %v2699 = vunpack.c.l.b16 %v1142
        %v2700 = vunpack.c.h.b16 %v1142
        %v2701 = vunpack.c.l.b16 %v1143
        %v2702 = vunpack.c.h.b16 %v1143
        %v2703 = vunpack.c.l.b16 %v1144
        %v2704 = vunpack.c.h.b16 %v1144
        %v2705 = vunpack.c.l.b16 %v1145
        %v2706 = vunpack.c.h.b16 %v1145
        %v2707 = vunpack.c.l.b16 %v1146
        %v2708 = vunpack.c.h.b16 %v1146
        %v2709 = vunpack.c.l.b16 %v1147
        %v2710 = vunpack.c.h.b16 %v1147
        %v2711 = vunpack.c.l.b16 %v1148
        %v2712 = vunpack.c.h.b16 %v1148
        %v2713 = vunpack.c.l.b16 %v1149
        %v2714 = vunpack.c.h.b16 %v1149
        %v2715 = vunpack.c.l.b16 %v1150
        %v2716 = vunpack.c.h.b16 %v1150
        %v2717 = vunpack.c.l.b16 %v1151
        %v2718 = vunpack.c.h.b16 %v1151
        %v2719 = vunpack.c.l.b16 %v1152
        %v2720 = vunpack.c.h.b16 %v1152
        %v2721 = vunpack.c.l.b16 %v1153
        %v2722 = vunpack.c.h.b16 %v1153
        %v2723 = vunpack.c.l.b16 %v1154
        %v2724 = vunpack.c.h.b16 %v1154
        %v2725 = vunpack.c.l.b16 %v1155
        %v2726 = vunpack.c.h.b16 %v1155
        %v2727 = vunpack.c.l.b16 %v1156
        %v2728 = vunpack.c.h.b16 %v1156
        %v2729 = vunpack.c.l.b16 %v1157
        %v2730 = vunpack.c.h.b16 %v1157
        %v2731 = vunpack.c.l.b16 %v1158
        %v2732 = vunpack.c.h.b16 %v1158
        %v2733 = vunpack.c.l.b16 %v1159
        %v2734 = vunpack.c.h.b16 %v1159
        %v2735 = vunpack.c.l.b16 %v1160
        %v2736 = vunpack.c.h.b16 %v1160
        %v2737 = vunpack.c.l.b16 %v1161
        %v2738 = vunpack.c.h.b16 %v1161
        %v2739 = vunpack.c.l.b16 %v1162
        %v2740 = vunpack.c.h.b16 %v1162
        %v2741 = vunpack.c.l.b16 %v1163
        %v2742 = vunpack.c.h.b16 %v1163
        %v2743 = vunpack.c.l.b16 %v1164
        %v2744 = vunpack.c.h.b16 %v1164
        %v2745 = vunpack.c.l.b16 %v1165
        %v2746 = vunpack.c.h.b16 %v1165
        %v2747 = vunpack.c.l.b16 %v1166
        %v2748 = vunpack.c.h.b16 %v1166
        %v2749 = vunpack.c.l.b16 %v1167
        %v2750 = vunpack.c.h.b16 %v1167
        %v2751 = vunpack.c.l.b16 %v1168
        %v2752 = vunpack.c.h.b16 %v1168
        %v2753 = vunpack.c.l.b16 %v1169
        %v2754 = vunpack.c.h.b16 %v1169
        %v2755 = vunpack.c.l.b16 %v1170
        %v2756 = vunpack.c.h.b16 %v1170
        %v2757 = vunpack.c.l.b16 %v1171
        %v2758 = vunpack.c.h.b16 %v1171
        %v2759 = vunpack.c.l.b16 %v1172
        %v2760 = vunpack.c.h.b16 %v1172
        %v2761 = vunpack.c.l.b16 %v1173
        %v2762 = vunpack.c.h.b16 %v1173
        %v2763 = vunpack.c.l.b16 %v1174
        %v2764 = vunpack.c.h.b16 %v1174
        %v2765 = vunpack.c.l.b16 %v1175
        %v2766 = vunpack.c.h.b16 %v1175
        %v2767 = vunpack.c.l.b16 %v1176
        %v2768 = vunpack.c.h.b16 %v1176
        %v2769 = vunpack.c.l.b16 %v1177
        %v2770 = vunpack.c.h.b16 %v1177
        %v2771 = vunpack.c.l.b16 %v1178
        %v2772 = vunpack.c.h.b16 %v1178
        %v2773 = vunpack.c.l.b16 %v1179
        %v2774 = vunpack.c.h.b16 %v1179
        %v2775 = vunpack.c.l.b16 %v1180
        %v2776 = vunpack.c.h.b16 %v1180
        %v2777 = vunpack.c.l.b16 %v1181
        %v2778 = vunpack.c.h.b16 %v1181
        %v2779 = vunpack.c.l.b16 %v1182
        %v2780 = vunpack.c.h.b16 %v1182
        %v2781 = vunpack.c.l.b16 %v1183
        %v2782 = vunpack.c.h.b16 %v1183
        %v2783 = vunpack.c.l.b16 %v1184
        %v2784 = vunpack.c.h.b16 %v1184
        %v2785 = vunpack.c.l.b16 %v1185
        %v2786 = vunpack.c.h.b16 %v1185
        %v2787 = vunpack.c.l.b16 %v1186
        %v2788 = vunpack.c.h.b16 %v1186
        %v2789 = vunpack.c.l.b16 %v1187
        %v2790 = vunpack.c.h.b16 %v1187
        %v2791 = vunpack.c.l.b16 %v1188
        %v2792 = vunpack.c.h.b16 %v1188
        %v2793 = vunpack.c.l.b16 %v1189
        %v2794 = vunpack.c.h.b16 %v1189
        %v2795 = vunpack.c.l.b16 %v1190
        %v2796 = vunpack.c.h.b16 %v1190
        %v2797 = vunpack.c.l.b16 %v1191
        %v2798 = vunpack.c.h.b16 %v1191
        %v2799 = vunpack.c.l.b16 %v1192
        %v2800 = vunpack.c.h.b16 %v1192
        %v2801 = vunpack.c.l.b16 %v1193
        %v2802 = vunpack.c.h.b16 %v1193
        %v2803 = vunpack.c.l.b16 %v1194
        %v2804 = vunpack.c.h.b16 %v1194
        %v2805 = vunpack.c.l.b16 %v1195
        %v2806 = vunpack.c.h.b16 %v1195
        %v2807 = vunpack.c.l.b16 %v1196
        %v2808 = vunpack.c.h.b16 %v1196
        %v2809 = vunpack.c.l.b16 %v1197
        %v2810 = vunpack.c.h.b16 %v1197
        %v2811 = vunpack.c.l.b16 %v1198
        %v2812 = vunpack.c.h.b16 %v1198
        %v2813 = vunpack.c.l.b16 %v1199
        %v2814 = vunpack.c.h.b16 %v1199
        %v2815 = vunpack.c.l.b16 %v1200
        %v2816 = vunpack.c.h.b16 %v1200
        %v2817 = vunpack.c.l.b16 %v1201
        %v2818 = vunpack.c.h.b16 %v1201
        %v2819 = vunpack.c.l.b16 %v1202
        %v2820 = vunpack.c.h.b16 %v1202
        %v2821 = vunpack.c.l.b16 %v1203
        %v2822 = vunpack.c.h.b16 %v1203
        %v2823 = vunpack.c.l.b16 %v1204
        %v2824 = vunpack.c.h.b16 %v1204
        %v2825 = vunpack.c.l.b16 %v1205
        %v2826 = vunpack.c.h.b16 %v1205
        %v2827 = vunpack.c.l.b16 %v1206
        %v2828 = vunpack.c.h.b16 %v1206
        %v2829 = vunpack.c.l.b16 %v1207
        %v2830 = vunpack.c.h.b16 %v1207
        %v2831 = vunpack.c.l.b16 %v1208
        %v2832 = vunpack.c.h.b16 %v1208
        %v2833 = vunpack.c.l.b16 %v1209
        %v2834 = vunpack.c.h.b16 %v1209
        %v2835 = vunpack.c.l.b16 %v1210
        %v2836 = vunpack.c.h.b16 %v1210
        %v2837 = vunpack.c.l.b16 %v1211
        %v2838 = vunpack.c.h.b16 %v1211
        %v2839 = vunpack.c.l.b16 %v1212
        %v2840 = vunpack.c.h.b16 %v1212
        %v2841 = vunpack.c.l.b16 %v1213
        %v2842 = vunpack.c.h.b16 %v1213
        %v2843 = vunpack.c.l.b16 %v1214
        %v2844 = vunpack.c.h.b16 %v1214
        %v2845 = vunpack.c.l.b16 %v1215
        %v2846 = vunpack.c.h.b16 %v1215
        %v2847 = vunpack.c.l.b16 %v1216
        %v2848 = vunpack.c.h.b16 %v1216
        %v2849 = vunpack.c.l.b16 %v1217
        %v2850 = vunpack.c.h.b16 %v1217
        %v2851 = vunpack.c.l.b16 %v1218
        %v2852 = vunpack.c.h.b16 %v1218
        %v2853 = vunpack.c.l.b16 %v1219
        %v2854 = vunpack.c.h.b16 %v1219
        %v2855 = vunpack.c.l.b16 %v1220
        %v2856 = vunpack.c.h.b16 %v1220
        %v2857 = vunpack.c.l.b16 %v1221
        %v2858 = vunpack.c.h.b16 %v1221
        %v2859 = vunpack.c.l.b16 %v1222
        %v2860 = vunpack.c.h.b16 %v1222
        %v2861 = vunpack.c.l.b16 %v1223
        %v2862 = vunpack.c.h.b16 %v1223
        %v2863 = vunpack.c.l.b16 %v1224
        %v2864 = vunpack.c.h.b16 %v1224
        %v2865 = vunpack.c.l.b16 %v1225
        %v2866 = vunpack.c.h.b16 %v1225
        %v2867 = vunpack.c.l.b16 %v1226
        %v2868 = vunpack.c.h.b16 %v1226
        %v2869 = vunpack.c.l.b16 %v1227
        %v2870 = vunpack.c.h.b16 %v1227
        %v2871 = vunpack.c.l.b16 %v1228
        %v2872 = vunpack.c.h.b16 %v1228
        %v2873 = vunpack.c.l.b16 %v1229
        %v2874 = vunpack.c.h.b16 %v1229
        %v2875 = vunpack.c.l.b16 %v1230
        %v2876 = vunpack.c.h.b16 %v1230
        %v2877 = vunpack.c.l.b16 %v1231
        %v2878 = vunpack.c.h.b16 %v1231
        %v2879 = vunpack.c.l.b16 %v1232
        %v2880 = vunpack.c.h.b16 %v1232
        %v2881 = vunpack.c.l.b16 %v1233
        %v2882 = vunpack.c.h.b16 %v1233
        %v2883 = vunpack.c.l.b16 %v1234
        %v2884 = vunpack.c.h.b16 %v1234
        %v2885 = vunpack.c.l.b16 %v1235
        %v2886 = vunpack.c.h.b16 %v1235
        %v2887 = vunpack.c.l.b16 %v1236
        %v2888 = vunpack.c.h.b16 %v1236
        %v2889 = vunpack.c.l.b16 %v1237
        %v2890 = vunpack.c.h.b16 %v1237
        %v2891 = vunpack.c.l.b16 %v1238
        %v2892 = vunpack.c.h.b16 %v1238
        %v2893 = vunpack.c.l.b16 %v1239
        %v2894 = vunpack.c.h.b16 %v1239
        %v2895 = vunpack.c.l.b16 %v1240
        %v2896 = vunpack.c.h.b16 %v1240
        %v2897 = vunpack.c.l.b16 %v1241
        %v2898 = vunpack.c.h.b16 %v1241
        %v2899 = vunpack.c.l.b16 %v1242
        %v2900 = vunpack.c.h.b16 %v1242
        %v2901 = vunpack.c.l.b16 %v1243
        %v2902 = vunpack.c.h.b16 %v1243
        %v2903 = vunpack.c.l.b16 %v1244
        %v2904 = vunpack.c.h.b16 %v1244
        %v2905 = vunpack.c.l.b16 %v1245
        %v2906 = vunpack.c.h.b16 %v1245
        %v2907 = vunpack.c.l.b16 %v1246
        %v2908 = vunpack.c.h.b16 %v1246
        %v2909 = vunpack.c.l.b16 %v1247
        %v2910 = vunpack.c.h.b16 %v1247
        %v2911 = vunpack.c.l.b16 %v1248
        %v2912 = vunpack.c.h.b16 %v1248
        %v2913 = vunpack.c.l.b16 %v1249
        %v2914 = vunpack.c.h.b16 %v1249
        %v2915 = vunpack.c.l.b16 %v1250
        %v2916 = vunpack.c.h.b16 %v1250
        %v2917 = vunpack.c.l.b16 %v1251
        %v2918 = vunpack.c.h.b16 %v1251
        %v2919 = vunpack.c.l.b16 %v1252
        %v2920 = vunpack.c.h.b16 %v1252
        %v2921 = vunpack.c.l.b16 %v1253
        %v2922 = vunpack.c.h.b16 %v1253
        %v2923 = vunpack.c.l.b16 %v1254
        %v2924 = vunpack.c.h.b16 %v1254
        %v2925 = vunpack.c.l.b16 %v1255
        %v2926 = vunpack.c.h.b16 %v1255
        %v2927 = vunpack.c.l.b16 %v1256
        %v2928 = vunpack.c.h.b16 %v1256
        %v2929 = vunpack.c.l.b16 %v1257
        %v2930 = vunpack.c.h.b16 %v1257
        %v2931 = vunpack.c.l.b16 %v1258
        %v2932 = vunpack.c.h.b16 %v1258
        %v2933 = vunpack.c.l.b16 %v1259
        %v2934 = vunpack.c.h.b16 %v1259
        %v2935 = vunpack.c.l.b16 %v1260
        %v2936 = vunpack.c.h.b16 %v1260
        %v2937 = vunpack.c.l.b16 %v1261
        %v2938 = vunpack.c.h.b16 %v1261
        %v2939 = vunpack.c.l.b16 %v1262
        %v2940 = vunpack.c.h.b16 %v1262
        %v2941 = vunpack.c.l.b16 %v1263
        %v2942 = vunpack.c.h.b16 %v1263
        %v2943 = vunpack.c.l.b16 %v1264
        %v2944 = vunpack.c.h.b16 %v1264
        %v2945 = vunpack.c.l.b16 %v1265
        %v2946 = vunpack.c.h.b16 %v1265
        %v2947 = vunpack.c.l.b16 %v1266
        %v2948 = vunpack.c.h.b16 %v1266
        %v2949 = vunpack.c.l.b16 %v1267
        %v2950 = vunpack.c.h.b16 %v1267
        %v2951 = vunpack.c.l.b16 %v1268
        %v2952 = vunpack.c.h.b16 %v1268
        %v2953 = vunpack.c.l.b16 %v1269
        %v2954 = vunpack.c.h.b16 %v1269
        %v2955 = vunpack.c.l.b16 %v1270
        %v2956 = vunpack.c.h.b16 %v1270
        %v2957 = vunpack.c.l.b16 %v1271
        %v2958 = vunpack.c.h.b16 %v1271
        %v2959 = vunpack.c.l.b16 %v1272
        %v2960 = vunpack.c.h.b16 %v1272
        %v2961 = vunpack.c.l.b16 %v1273
        %v2962 = vunpack.c.h.b16 %v1273
        %v2963 = vunpack.c.l.b16 %v1274
        %v2964 = vunpack.c.h.b16 %v1274
        %v2965 = vunpack.c.l.b16 %v1275
        %v2966 = vunpack.c.h.b16 %v1275
        %v2967 = vunpack.c.l.b16 %v1276
        %v2968 = vunpack.c.h.b16 %v1276
        %v2969 = vunpack.c.l.b16 %v1277
        %v2970 = vunpack.c.h.b16 %v1277
        %v2971 = vunpack.c.l.b16 %v1278
        %v2972 = vunpack.c.h.b16 %v1278
        %v2973 = vunpack.c.l.b16 %v1279
        %v2974 = vunpack.c.h.b16 %v1279
        %v2975 = vunpack.c.l.b16 %v1280
        %v2976 = vunpack.c.h.b16 %v1280
        %v2977 = vunpack.c.l.b16 %v1281
        %v2978 = vunpack.c.h.b16 %v1281
        %v2979 = vunpack.c.l.b16 %v1282
        %v2980 = vunpack.c.h.b16 %v1282
        %v2981 = vunpack.c.l.b16 %v1283
        %v2982 = vunpack.c.h.b16 %v1283
        %v2983 = vunpack.c.l.b16 %v1284
        %v2984 = vunpack.c.h.b16 %v1284
        %v2985 = vunpack.c.l.b16 %v1285
        %v2986 = vunpack.c.h.b16 %v1285
        %v2987 = vunpack.c.l.b16 %v1286
        %v2988 = vunpack.c.h.b16 %v1286
        %v2989 = vunpack.c.l.b16 %v1287
        %v2990 = vunpack.c.h.b16 %v1287
        %v2991 = vunpack.c.l.b16 %v1288
        %v2992 = vunpack.c.h.b16 %v1288
        %v2993 = vunpack.c.l.b16 %v1289
        %v2994 = vunpack.c.h.b16 %v1289
        %v2995 = vunpack.c.l.b16 %v1290
        %v2996 = vunpack.c.h.b16 %v1290
        %v2997 = vunpack.c.l.b16 %v1291
        %v2998 = vunpack.c.h.b16 %v1291
        %v2999 = vunpack.c.l.b16 %v1292
        %v3000 = vunpack.c.h.b16 %v1292
        %v3001 = vunpack.c.l.b16 %v1293
        %v3002 = vunpack.c.h.b16 %v1293
        %v3003 = vunpack.c.l.b16 %v1294
        %v3004 = vunpack.c.h.b16 %v1294
        %v3005 = vunpack.c.l.b16 %v1295
        %v3006 = vunpack.c.h.b16 %v1295
        %v3007 = vunpack.c.l.b16 %v1296
        %v3008 = vunpack.c.h.b16 %v1296
        %v3009 = vunpack.c.l.b16 %v1297
        %v3010 = vunpack.c.h.b16 %v1297
        %v3011 = vunpack.c.l.b16 %v1298
        %v3012 = vunpack.c.h.b16 %v1298
        %v3013 = vunpack.c.l.b16 %v1299
        %v3014 = vunpack.c.h.b16 %v1299
        %v3015 = vunpack.c.l.b16 %v1300
        %v3016 = vunpack.c.h.b16 %v1300
        %v3017 = vunpack.c.l.b16 %v1301
        %v3018 = vunpack.c.h.b16 %v1301
        %v3019 = vunpack.c.l.b16 %v1302
        %v3020 = vunpack.c.h.b16 %v1302
        %v3021 = vunpack.c.l.b16 %v1303
        %v3022 = vunpack.c.h.b16 %v1303
        %v3023 = vunpack.c.l.b16 %v1304
        %v3024 = vunpack.c.h.b16 %v1304
        %v3025 = vunpack.c.l.b16 %v1305
        %v3026 = vunpack.c.h.b16 %v1305
        %v3027 = vunpack.c.l.b16 %v1306
        %v3028 = vunpack.c.h.b16 %v1306
        %v3029 = vunpack.c.l.b16 %v1307
        %v3030 = vunpack.c.h.b16 %v1307
        %v3031 = vunpack.c.l.b16 %v1308
        %v3032 = vunpack.c.h.b16 %v1308
        %v3033 = vunpack.c.l.b16 %v1309
        %v3034 = vunpack.c.h.b16 %v1309
        %v3035 = vunpack.c.l.b16 %v1310
        %v3036 = vunpack.c.h.b16 %v1310
        %v3037 = vunpack.c.l.b16 %v1311
        %v3038 = vunpack.c.h.b16 %v1311
        %v3039 = vunpack.c.l.b16 %v1312
        %v3040 = vunpack.c.h.b16 %v1312
        %v3041 = vunpack.c.l.b16 %v1313
        %v3042 = vunpack.c.h.b16 %v1313
        %v3043 = vunpack.c.l.b16 %v1314
        %v3044 = vunpack.c.h.b16 %v1314
        %v3045 = vunpack.c.l.b16 %v1315
        %v3046 = vunpack.c.h.b16 %v1315
        %v3047 = vunpack.c.l.b16 %v1316
        %v3048 = vunpack.c.h.b16 %v1316
        %v3049 = vunpack.c.l.b16 %v1317
        %v3050 = vunpack.c.h.b16 %v1317
        %v3051 = vunpack.c.l.b16 %v1318
        %v3052 = vunpack.c.h.b16 %v1318
        %v3053 = vunpack.c.l.b16 %v1319
        %v3054 = vunpack.c.h.b16 %v1319
        %v3055 = vunpack.c.l.b16 %v1320
        %v3056 = vunpack.c.h.b16 %v1320
        %v3057 = vunpack.c.l.b16 %v1321
        %v3058 = vunpack.c.h.b16 %v1321
        %v3059 = vunpack.c.l.b16 %v1322
        %v3060 = vunpack.c.h.b16 %v1322
        %v3061 = vunpack.c.l.b16 %v1323
        %v3062 = vunpack.c.h.b16 %v1323
        %v3063 = vunpack.c.l.b16 %v1324
        %v3064 = vunpack.c.h.b16 %v1324
        %v3065 = vunpack.c.l.b16 %v1325
        %v3066 = vunpack.c.h.b16 %v1325
        %v3067 = vunpack.c.l.b16 %v1326
        %v3068 = vunpack.c.h.b16 %v1326
        %v3069 = vunpack.c.l.b16 %v1327
        %v3070 = vunpack.c.h.b16 %v1327
        %v3071 = vunpack.c.l.b16 %v1328
        %v3072 = vunpack.c.h.b16 %v1328
        %v3073 = vunpack.c.l.b16 %v1329
        %v3074 = vunpack.c.h.b16 %v1329
        %v3075 = vunpack.c.l.b16 %v1330
        %v3076 = vunpack.c.h.b16 %v1330
        %v3077 = vunpack.c.l.b16 %v1331
        %v3078 = vunpack.c.h.b16 %v1331
        %v3079 = vunpack.c.l.b16 %v1332
        %v3080 = vunpack.c.h.b16 %v1332
        %v3081 = vunpack.c.l.b16 %v1333
        %v3082 = vunpack.c.h.b16 %v1333
        %v3083 = vunpack.c.l.b16 %v1334
        %v3084 = vunpack.c.h.b16 %v1334
        %v3085 = vunpack.c.l.b16 %v1335
        %v3086 = vunpack.c.h.b16 %v1335
        %v3087 = vunpack.c.l.b16 %v1336
        %v3088 = vunpack.c.h.b16 %v1336
        %v3089 = vunpack.c.l.b16 %v1337
        %v3090 = vunpack.c.h.b16 %v1337
        %v3091 = vunpack.c.l.b16 %v1338
        %v3092 = vunpack.c.h.b16 %v1338
        %v3093 = vunpack.c.l.b16 %v1339
        %v3094 = vunpack.c.h.b16 %v1339
        %v3095 = vunpack.c.l.b16 %v1340
        %v3096 = vunpack.c.h.b16 %v1340
        %v3097 = vunpack.c.l.b16 %v1341
        %v3098 = vunpack.c.h.b16 %v1341
        %v3099 = vunpack.c.l.b16 %v1342
        %v3100 = vunpack.c.h.b16 %v1342
        %v3101 = vunpack.c.l.b16 %v1343
        %v3102 = vunpack.c.h.b16 %v1343
        %v3103 = vunpack.c.l.b16 %v1344
        %v3104 = vunpack.c.h.b16 %v1344
        %v3105 = vunpack.c.l.b16 %v1345
        %v3106 = vunpack.c.h.b16 %v1345
        %v3107 = vunpack.c.l.b16 %v1346
        %v3108 = vunpack.c.h.b16 %v1346
        %v3109 = vunpack.c.l.b16 %v1347
        %v3110 = vunpack.c.h.b16 %v1347
        %v3111 = vunpack.c.l.b16 %v1348
        %v3112 = vunpack.c.h.b16 %v1348
        %v3113 = vunpack.c.l.b16 %v1349
        %v3114 = vunpack.c.h.b16 %v1349
        %v3115 = vunpack.c.l.b16 %v1350
        %v3116 = vunpack.c.h.b16 %v1350
        %v3117 = vunpack.c.l.b16 %v1351
        %v3118 = vunpack.c.h.b16 %v1351
        %v3119 = vunpack.c.l.b16 %v1352
        %v3120 = vunpack.c.h.b16 %v1352
        %v3121 = vunpack.c.l.b16 %v1353
        %v3122 = vunpack.c.h.b16 %v1353
        %v3123 = vunpack.c.l.b16 %v1354
        %v3124 = vunpack.c.h.b16 %v1354
        %v3125 = vunpack.c.l.b16 %v1355
        %v3126 = vunpack.c.h.b16 %v1355
        %v3127 = vunpack.c.l.b16 %v1356
        %v3128 = vunpack.c.h.b16 %v1356
        %v3129 = vunpack.c.l.b16 %v1357
        %v3130 = vunpack.c.h.b16 %v1357
        %v3131 = vunpack.c.l.b16 %v1358
        %v3132 = vunpack.c.h.b16 %v1358
        %v3133 = vunpack.c.l.b16 %v1359
        %v3134 = vunpack.c.h.b16 %v1359
        %v3135 = vunpack.c.l.b16 %v1360
        %v3136 = vunpack.c.h.b16 %v1360
        %v3137 = vunpack.c.l.b16 %v1361
        %v3138 = vunpack.c.h.b16 %v1361
        %v3139 = vunpack.c.l.b16 %v1362
        %v3140 = vunpack.c.h.b16 %v1362
        %v3141 = vunpack.c.l.b16 %v1363
        %v3142 = vunpack.c.h.b16 %v1363
        %v3143 = vunpack.c.l.b16 %v1364
        %v3144 = vunpack.c.h.b16 %v1364
        %v3145 = vunpack.c.l.b16 %v1365
        %v3146 = vunpack.c.h.b16 %v1365
        %v3147 = vunpack.c.l.b16 %v1366
        %v3148 = vunpack.c.h.b16 %v1366
        %v3149 = vunpack.c.l.b16 %v1367
        %v3150 = vunpack.c.h.b16 %v1367
        %v3151 = vunpack.c.l.b16 %v1368
        %v3152 = vunpack.c.h.b16 %v1368
        %v3153 = vunpack.c.l.b16 %v1369
        %v3154 = vunpack.c.h.b16 %v1369
        %v3155 = vunpack.c.l.b16 %v1370
        %v3156 = vunpack.c.h.b16 %v1370
        %v3157 = vunpack.c.l.b16 %v1371
        %v3158 = vunpack.c.h.b16 %v1371
        %v3159 = vunpack.c.l.b16 %v1372
        %v3160 = vunpack.c.h.b16 %v1372
        %v3161 = vunpack.c.l.b16 %v1373
        %v3162 = vunpack.c.h.b16 %v1373
        %v3163 = vunpack.c.l.b16 %v1374
        %v3164 = vunpack.c.h.b16 %v1374
        %v3165 = vunpack.c.l.b16 %v1375
        %v3166 = vunpack.c.h.b16 %v1375
        %v3167 = vunpack.c.l.b16 %v1376
        %v3168 = vunpack.c.h.b16 %v1376
        %v3169 = vpack.c.b16 %v2029, %v2017
        %v3170 = vpack.c.b16 %v2030, %v2018
        %v3171 = vpack.c.b16 %v2031, %v2019
        %v3172 = vpack.c.b16 %v2032, %v2020
        %v3173 = vpack.c.b16 %v2033, %v2021
        %v3174 = vpack.c.b16 %v2034, %v2022
        %v3175 = vpack.c.b16 %v2035, %v2023
        %v3176 = vpack.c.b16 %v2036, %v2024
        %v3177 = vpack.c.b16 %v2037, %v2025
        %v3178 = vpack.c.b16 %v2038, %v2026
        %v3179 = vpack.c.b16 %v2039, %v2027
        %v3180 = vpack.c.b16 %v2040, %v2028
        %v3181 = vpack.c.b16 %v2053, %v2041
        %v3182 = vpack.c.b16 %v2054, %v2042
        %v3183 = vpack.c.b16 %v2055, %v2043
        %v3184 = vpack.c.b16 %v2056, %v2044
        %v3185 = vpack.c.b16 %v2057, %v2045
        %v3186 = vpack.c.b16 %v2058, %v2046
        %v3187 = vpack.c.b16 %v2059, %v2047
        %v3188 = vpack.c.b16 %v2060, %v2048
        %v3189 = vpack.c.b16 %v2061, %v2049
        %v3190 = vpack.c.b16 %v2062, %v2050
        %v3191 = vpack.c.b16 %v2063, %v2051
        %v3192 = vpack.c.b16 %v2064, %v2052
        %v3193 = vpack.c.b16 %v2077, %v2065
        %v3194 = vpack.c.b16 %v2078, %v2066
        %v3195 = vpack.c.b16 %v2079, %v2067
        %v3196 = vpack.c.b16 %v2080, %v2068
        %v3197 = vpack.c.b16 %v2081, %v2069
        %v3198 = vpack.c.b16 %v2082, %v2070
        %v3199 = vpack.c.b16 %v2083, %v2071
        %v3200 = vpack.c.b16 %v2084, %v2072
        %v3201 = vpack.c.b16 %v2085, %v2073
        %v3202 = vpack.c.b16 %v2086, %v2074
        %v3203 = vpack.c.b16 %v2087, %v2075
        %v3204 = vpack.c.b16 %v2088, %v2076
        %v3205 = vpack.c.b16 %v2101, %v2089
        %v3206 = vpack.c.b16 %v2102, %v2090
        %v3207 = vpack.c.b16 %v2103, %v2091
        %v3208 = vpack.c.b16 %v2104, %v2092
        %v3209 = vpack.c.b16 %v2105, %v2093
        %v3210 = vpack.c.b16 %v2106, %v2094
        %v3211 = vpack.c.b16 %v2107, %v2095
        %v3212 = vpack.c.b16 %v2108, %v2096
        %v3213 = vpack.c.b16 %v2109, %v2097
        %v3214 = vpack.c.b16 %v2110, %v2098
        %v3215 = vpack.c.b16 %v2111, %v2099
        %v3216 = vpack.c.b16 %v2112, %v2100
        %v3217 = vpack.c.b16 %v2125, %v2113
        %v3218 = vpack.c.b16 %v2126, %v2114
        %v3219 = vpack.c.b16 %v2127, %v2115
        %v3220 = vpack.c.b16 %v2128, %v2116
        %v3221 = vpack.c.b16 %v2129, %v2117
        %v3222 = vpack.c.b16 %v2130, %v2118
        %v3223 = vpack.c.b16 %v2131, %v2119
        %v3224 = vpack.c.b16 %v2132, %v2120
        %v3225 = vpack.c.b16 %v2133, %v2121
        %v3226 = vpack.c.b16 %v2134, %v2122
        %v3227 = vpack.c.b16 %v2135, %v2123
        %v3228 = vpack.c.b16 %v2136, %v2124
        %v3229 = vpack.c.b16 %v2149, %v2137
        %v3230 = vpack.c.b16 %v2150, %v2138
        %v3231 = vpack.c.b16 %v2151, %v2139
        %v3232 = vpack.c.b16 %v2152, %v2140
        %v3233 = vpack.c.b16 %v2153, %v2141
        %v3234 = vpack.c.b16 %v2154, %v2142
        %v3235 = vpack.c.b16 %v2155, %v2143
        %v3236 = vpack.c.b16 %v2156, %v2144
        %v3237 = vpack.c.b16 %v2157, %v2145
        %v3238 = vpack.c.b16 %v2158, %v2146
        %v3239 = vpack.c.b16 %v2159, %v2147
        %v3240 = vpack.c.b16 %v2160, %v2148
        %v3241 = vpack.c.b16 %v2173, %v2161
        %v3242 = vpack.c.b16 %v2174, %v2162
        %v3243 = vpack.c.b16 %v2175, %v2163
        %v3244 = vpack.c.b16 %v2176, %v2164
        %v3245 = vpack.c.b16 %v2177, %v2165
        %v3246 = vpack.c.b16 %v2178, %v2166
        %v3247 = vpack.c.b16 %v2179, %v2167
        %v3248 = vpack.c.b16 %v2180, %v2168
        %v3249 = vpack.c.b16 %v2181, %v2169
        %v3250 = vpack.c.b16 %v2182, %v2170
        %v3251 = vpack.c.b16 %v2183, %v2171
        %v3252 = vpack.c.b16 %v2184, %v2172
        %v3253 = vpack.c.b16 %v2197, %v2185
        %v3254 = vpack.c.b16 %v2198, %v2186
        %v3255 = vpack.c.b16 %v2199, %v2187
        %v3256 = vpack.c.b16 %v2200, %v2188
        %v3257 = vpack.c.b16 %v2201, %v2189
        %v3258 = vpack.c.b16 %v2202, %v2190
        %v3259 = vpack.c.b16 %v2203, %v2191
        %v3260 = vpack.c.b16 %v2204, %v2192
        %v3261 = vpack.c.b16 %v2205, %v2193
        %v3262 = vpack.c.b16 %v2206, %v2194
        %v3263 = vpack.c.b16 %v2207, %v2195
        %v3264 = vpack.c.b16 %v2208, %v2196
        %v3265 = vpack.c.b16 %v2221, %v2209
        %v3266 = vpack.c.b16 %v2222, %v2210
        %v3267 = vpack.c.b16 %v2223, %v2211
        %v3268 = vpack.c.b16 %v2224, %v2212
        %v3269 = vpack.c.b16 %v2225, %v2213
        %v3270 = vpack.c.b16 %v2226, %v2214
        %v3271 = vpack.c.b16 %v2227, %v2215
        %v3272 = vpack.c.b16 %v2228, %v2216
        %v3273 = vpack.c.b16 %v2229, %v2217
        %v3274 = vpack.c.b16 %v2230, %v2218
        %v3275 = vpack.c.b16 %v2231, %v2219
        %v3276 = vpack.c.b16 %v2232, %v2220
        %v3277 = vpack.c.b16 %v2245, %v2233
        %v3278 = vpack.c.b16 %v2246, %v2234
        %v3279 = vpack.c.b16 %v2247, %v2235
        %v3280 = vpack.c.b16 %v2248, %v2236
        %v3281 = vpack.c.b16 %v2249, %v2237
        %v3282 = vpack.c.b16 %v2250, %v2238
        %v3283 = vpack.c.b16 %v2251, %v2239
        %v3284 = vpack.c.b16 %v2252, %v2240
        %v3285 = vpack.c.b16 %v2253, %v2241
        %v3286 = vpack.c.b16 %v2254, %v2242
        %v3287 = vpack.c.b16 %v2255, %v2243
        %v3288 = vpack.c.b16 %v2256, %v2244
        %v3289 = vpack.c.b16 %v2269, %v2257
        %v3290 = vpack.c.b16 %v2270, %v2258
        %v3291 = vpack.c.b16 %v2271, %v2259
        %v3292 = vpack.c.b16 %v2272, %v2260
        %v3293 = vpack.c.b16 %v2273, %v2261
        %v3294 = vpack.c.b16 %v2274, %v2262
        %v3295 = vpack.c.b16 %v2275, %v2263
        %v3296 = vpack.c.b16 %v2276, %v2264
        %v3297 = vpack.c.b16 %v2277, %v2265
        %v3298 = vpack.c.b16 %v2278, %v2266
        %v3299 = vpack.c.b16 %v2279, %v2267
        %v3300 = vpack.c.b16 %v2280, %v2268
        %v3301 = vpack.c.b16 %v2293, %v2281
        %v3302 = vpack.c.b16 %v2294, %v2282
        %v3303 = vpack.c.b16 %v2295, %v2283
        %v3304 = vpack.c.b16 %v2296, %v2284
        %v3305 = vpack.c.b16 %v2297, %v2285
        %v3306 = vpack.c.b16 %v2298, %v2286
        %v3307 = vpack.c.b16 %v2299, %v2287
        %v3308 = vpack.c.b16 %v2300, %v2288
        %v3309 = vpack.c.b16 %v2301, %v2289
        %v3310 = vpack.c.b16 %v2302, %v2290
        %v3311 = vpack.c.b16 %v2303, %v2291
        %v3312 = vpack.c.b16 %v2304, %v2292
        %v3313 = vpack.c.b16 %v2317, %v2305
        %v3314 = vpack.c.b16 %v2318, %v2306
        %v3315 = vpack.c.b16 %v2319, %v2307
        %v3316 = vpack.c.b16 %v2320, %v2308
        %v3317 = vpack.c.b16 %v2321, %v2309
        %v3318 = vpack.c.b16 %v2322, %v2310
        %v3319 = vpack.c.b16 %v2323, %v2311
        %v3320 = vpack.c.b16 %v2324, %v2312
        %v3321 = vpack.c.b16 %v2325, %v2313
        %v3322 = vpack.c.b16 %v2326, %v2314
        %v3323 = vpack.c.b16 %v2327, %v2315
        %v3324 = vpack.c.b16 %v2328, %v2316
        %v3325 = vpack.c.b16 %v2341, %v2329
        %v3326 = vpack.c.b16 %v2342, %v2330
        %v3327 = vpack.c.b16 %v2343, %v2331
        %v3328 = vpack.c.b16 %v2344, %v2332
        %v3329 = vpack.c.b16 %v2345, %v2333
        %v3330 = vpack.c.b16 %v2346, %v2334
        %v3331 = vpack.c.b16 %v2347, %v2335
        %v3332 = vpack.c.b16 %v2348, %v2336
        %v3333 = vpack.c.b16 %v2349, %v2337
        %v3334 = vpack.c.b16 %v2350, %v2338
        %v3335 = vpack.c.b16 %v2351, %v2339
        %v3336 = vpack.c.b16 %v2352, %v2340
        %v3337 = vpack.c.b16 %v2365, %v2353
        %v3338 = vpack.c.b16 %v2366, %v2354
        %v3339 = vpack.c.b16 %v2367, %v2355
        %v3340 = vpack.c.b16 %v2368, %v2356
        %v3341 = vpack.c.b16 %v2369, %v2357
        %v3342 = vpack.c.b16 %v2370, %v2358
        %v3343 = vpack.c.b16 %v2371, %v2359
        %v3344 = vpack.c.b16 %v2372, %v2360
        %v3345 = vpack.c.b16 %v2373, %v2361
        %v3346 = vpack.c.b16 %v2374, %v2362
        %v3347 = vpack.c.b16 %v2375, %v2363
        %v3348 = vpack.c.b16 %v2376, %v2364
        %v3349 = vpack.c.b16 %v2389, %v2377
        %v3350 = vpack.c.b16 %v2390, %v2378
        %v3351 = vpack.c.b16 %v2391, %v2379
        %v3352 = vpack.c.b16 %v2392, %v2380
        %v3353 = vpack.c.b16 %v2393, %v2381
        %v3354 = vpack.c.b16 %v2394, %v2382
        %v3355 = vpack.c.b16 %v2395, %v2383
        %v3356 = vpack.c.b16 %v2396, %v2384
        %v3357 = vpack.c.b16 %v2397, %v2385
        %v3358 = vpack.c.b16 %v2398, %v2386
        %v3359 = vpack.c.b16 %v2399, %v2387
        %v3360 = vpack.c.b16 %v2400, %v2388
        %v3361 = vpack.c.b16 %v2413, %v2401
        %v3362 = vpack.c.b16 %v2414, %v2402
        %v3363 = vpack.c.b16 %v2415, %v2403
        %v3364 = vpack.c.b16 %v2416, %v2404
        %v3365 = vpack.c.b16 %v2417, %v2405
        %v3366 = vpack.c.b16 %v2418, %v2406
        %v3367 = vpack.c.b16 %v2419, %v2407
        %v3368 = vpack.c.b16 %v2420, %v2408
        %v3369 = vpack.c.b16 %v2421, %v2409
        %v3370 = vpack.c.b16 %v2422, %v2410
        %v3371 = vpack.c.b16 %v2423, %v2411
        %v3372 = vpack.c.b16 %v2424, %v2412
        %v3373 = vpack.c.b16 %v2437, %v2425
        %v3374 = vpack.c.b16 %v2438, %v2426
        %v3375 = vpack.c.b16 %v2439, %v2427
        %v3376 = vpack.c.b16 %v2440, %v2428
        %v3377 = vpack.c.b16 %v2441, %v2429
        %v3378 = vpack.c.b16 %v2442, %v2430
        %v3379 = vpack.c.b16 %v2443, %v2431
        %v3380 = vpack.c.b16 %v2444, %v2432
        %v3381 = vpack.c.b16 %v2445, %v2433
        %v3382 = vpack.c.b16 %v2446, %v2434
        %v3383 = vpack.c.b16 %v2447, %v2435
        %v3384 = vpack.c.b16 %v2448, %v2436
        %v3385 = vpack.c.b16 %v2461, %v2449
        %v3386 = vpack.c.b16 %v2462, %v2450
        %v3387 = vpack.c.b16 %v2463, %v2451
        %v3388 = vpack.c.b16 %v2464, %v2452
        %v3389 = vpack.c.b16 %v2465, %v2453
        %v3390 = vpack.c.b16 %v2466, %v2454
        %v3391 = vpack.c.b16 %v2467, %v2455
        %v3392 = vpack.c.b16 %v2468, %v2456
        %v3393 = vpack.c.b16 %v2469, %v2457
        %v3394 = vpack.c.b16 %v2470, %v2458
        %v3395 = vpack.c.b16 %v2471, %v2459
        %v3396 = vpack.c.b16 %v2472, %v2460
        %v3397 = vpack.c.b16 %v2485, %v2473
        %v3398 = vpack.c.b16 %v2486, %v2474
        %v3399 = vpack.c.b16 %v2487, %v2475
        %v3400 = vpack.c.b16 %v2488, %v2476
        %v3401 = vpack.c.b16 %v2489, %v2477
        %v3402 = vpack.c.b16 %v2490, %v2478
        %v3403 = vpack.c.b16 %v2491, %v2479
        %v3404 = vpack.c.b16 %v2492, %v2480
        %v3405 = vpack.c.b16 %v2493, %v2481
        %v3406 = vpack.c.b16 %v2494, %v2482
        %v3407 = vpack.c.b16 %v2495, %v2483
        %v3408 = vpack.c.b16 %v2496, %v2484
        %v3409 = vpack.c.b16 %v2509, %v2497
        %v3410 = vpack.c.b16 %v2510, %v2498
        %v3411 = vpack.c.b16 %v2511, %v2499
        %v3412 = vpack.c.b16 %v2512, %v2500
        %v3413 = vpack.c.b16 %v2513, %v2501
        %v3414 = vpack.c.b16 %v2514, %v2502
        %v3415 = vpack.c.b16 %v2515, %v2503
        %v3416 = vpack.c.b16 %v2516, %v2504
        %v3417 = vpack.c.b16 %v2517, %v2505
        %v3418 = vpack.c.b16 %v2518, %v2506
        %v3419 = vpack.c.b16 %v2519, %v2507
        %v3420 = vpack.c.b16 %v2520, %v2508
        %v3421 = vpack.c.b16 %v2533, %v2521
        %v3422 = vpack.c.b16 %v2534, %v2522
        %v3423 = vpack.c.b16 %v2535, %v2523
        %v3424 = vpack.c.b16 %v2536, %v2524
        %v3425 = vpack.c.b16 %v2537, %v2525
        %v3426 = vpack.c.b16 %v2538, %v2526
        %v3427 = vpack.c.b16 %v2539, %v2527
        %v3428 = vpack.c.b16 %v2540, %v2528
        %v3429 = vpack.c.b16 %v2541, %v2529
        %v3430 = vpack.c.b16 %v2542, %v2530
        %v3431 = vpack.c.b16 %v2543, %v2531
        %v3432 = vpack.c.b16 %v2544, %v2532
        %v3433 = vpack.c.b16 %v2557, %v2545
        %v3434 = vpack.c.b16 %v2558, %v2546
        %v3435 = vpack.c.b16 %v2559, %v2547
        %v3436 = vpack.c.b16 %v2560, %v2548
        %v3437 = vpack.c.b16 %v2561, %v2549
        %v3438 = vpack.c.b16 %v2562, %v2550
        %v3439 = vpack.c.b16 %v2563, %v2551
        %v3440 = vpack.c.b16 %v2564, %v2552
        %v3441 = vpack.c.b16 %v2565, %v2553
        %v3442 = vpack.c.b16 %v2566, %v2554
        %v3443 = vpack.c.b16 %v2567, %v2555
        %v3444 = vpack.c.b16 %v2568, %v2556
        %v3445 = vpack.c.b16 %v2581, %v2569
        %v3446 = vpack.c.b16 %v2582, %v2570
        %v3447 = vpack.c.b16 %v2583, %v2571
        %v3448 = vpack.c.b16 %v2584, %v2572
        %v3449 = vpack.c.b16 %v2585, %v2573
        %v3450 = vpack.c.b16 %v2586, %v2574
        %v3451 = vpack.c.b16 %v2587, %v2575
        %v3452 = vpack.c.b16 %v2588, %v2576
        %v3453 = vpack.c.b16 %v2589, %v2577
        %v3454 = vpack.c.b16 %v2590, %v2578
        %v3455 = vpack.c.b16 %v2591, %v2579
        %v3456 = vpack.c.b16 %v2592, %v2580
        %v3457 = vpack.c.b16 %v2605, %v2593
        %v3458 = vpack.c.b16 %v2606, %v2594
        %v3459 = vpack.c.b16 %v2607, %v2595
        %v3460 = vpack.c.b16 %v2608, %v2596
        %v3461 = vpack.c.b16 %v2609, %v2597
        %v3462 = vpack.c.b16 %v2610, %v2598
        %v3463 = vpack.c.b16 %v2611, %v2599
        %v3464 = vpack.c.b16 %v2612, %v2600
        %v3465 = vpack.c.b16 %v2613, %v2601
        %v3466 = vpack.c.b16 %v2614, %v2602
        %v3467 = vpack.c.b16 %v2615, %v2603
        %v3468 = vpack.c.b16 %v2616, %v2604
        %v3469 = vpack.c.b16 %v2629, %v2617
        %v3470 = vpack.c.b16 %v2630, %v2618
        %v3471 = vpack.c.b16 %v2631, %v2619
        %v3472 = vpack.c.b16 %v2632, %v2620
        %v3473 = vpack.c.b16 %v2633, %v2621
        %v3474 = vpack.c.b16 %v2634, %v2622
        %v3475 = vpack.c.b16 %v2635, %v2623
        %v3476 = vpack.c.b16 %v2636, %v2624
        %v3477 = vpack.c.b16 %v2637, %v2625
        %v3478 = vpack.c.b16 %v2638, %v2626
        %v3479 = vpack.c.b16 %v2639, %v2627
        %v3480 = vpack.c.b16 %v2640, %v2628
        %v3481 = vpack.c.b16 %v2653, %v2641
        %v3482 = vpack.c.b16 %v2654, %v2642
        %v3483 = vpack.c.b16 %v2655, %v2643
        %v3484 = vpack.c.b16 %v2656, %v2644
        %v3485 = vpack.c.b16 %v2657, %v2645
        %v3486 = vpack.c.b16 %v2658, %v2646
        %v3487 = vpack.c.b16 %v2659, %v2647
        %v3488 = vpack.c.b16 %v2660, %v2648
        %v3489 = vpack.c.b16 %v2661, %v2649
        %v3490 = vpack.c.b16 %v2662, %v2650
        %v3491 = vpack.c.b16 %v2663, %v2651
        %v3492 = vpack.c.b16 %v2664, %v2652
        %v3493 = vpack.c.b16 %v2677, %v2665
        %v3494 = vpack.c.b16 %v2678, %v2666
        %v3495 = vpack.c.b16 %v2679, %v2667
        %v3496 = vpack.c.b16 %v2680, %v2668
        %v3497 = vpack.c.b16 %v2681, %v2669
        %v3498 = vpack.c.b16 %v2682, %v2670
        %v3499 = vpack.c.b16 %v2683, %v2671
        %v3500 = vpack.c.b16 %v2684, %v2672
        %v3501 = vpack.c.b16 %v2685, %v2673
        %v3502 = vpack.c.b16 %v2686, %v2674
        %v3503 = vpack.c.b16 %v2687, %v2675
        %v3504 = vpack.c.b16 %v2688, %v2676
        %v3505 = vpack.c.b16 %v2701, %v2689
        %v3506 = vpack.c.b16 %v2702, %v2690
        %v3507 = vpack.c.b16 %v2703, %v2691
        %v3508 = vpack.c.b16 %v2704, %v2692
        %v3509 = vpack.c.b16 %v2705, %v2693
        %v3510 = vpack.c.b16 %v2706, %v2694
        %v3511 = vpack.c.b16 %v2707, %v2695
        %v3512 = vpack.c.b16 %v2708, %v2696
        %v3513 = vpack.c.b16 %v2709, %v2697
        %v3514 = vpack.c.b16 %v2710, %v2698
        %v3515 = vpack.c.b16 %v2711, %v2699
        %v3516 = vpack.c.b16 %v2712, %v2700
        %v3517 = vpack.c.b16 %v2725, %v2713
        %v3518 = vpack.c.b16 %v2726, %v2714
        %v3519 = vpack.c.b16 %v2727, %v2715
        %v3520 = vpack.c.b16 %v2728, %v2716
        %v3521 = vpack.c.b16 %v2729, %v2717
        %v3522 = vpack.c.b16 %v2730, %v2718
        %v3523 = vpack.c.b16 %v2731, %v2719
        %v3524 = vpack.c.b16 %v2732, %v2720
        %v3525 = vpack.c.b16 %v2733, %v2721
        %v3526 = vpack.c.b16 %v2734, %v2722
        %v3527 = vpack.c.b16 %v2735, %v2723
        %v3528 = vpack.c.b16 %v2736, %v2724
        %v3529 = vpack.c.b16 %v2749, %v2737
        %v3530 = vpack.c.b16 %v2750, %v2738
        %v3531 = vpack.c.b16 %v2751, %v2739
        %v3532 = vpack.c.b16 %v2752, %v2740
        %v3533 = vpack.c.b16 %v2753, %v2741
        %v3534 = vpack.c.b16 %v2754, %v2742
        %v3535 = vpack.c.b16 %v2755, %v2743
        %v3536 = vpack.c.b16 %v2756, %v2744
        %v3537 = vpack.c.b16 %v2757, %v2745
        %v3538 = vpack.c.b16 %v2758, %v2746
        %v3539 = vpack.c.b16 %v2759, %v2747
        %v3540 = vpack.c.b16 %v2760, %v2748
        %v3541 = vpack.c.b16 %v2773, %v2761
        %v3542 = vpack.c.b16 %v2774, %v2762
        %v3543 = vpack.c.b16 %v2775, %v2763
        %v3544 = vpack.c.b16 %v2776, %v2764
        %v3545 = vpack.c.b16 %v2777, %v2765
        %v3546 = vpack.c.b16 %v2778, %v2766
        %v3547 = vpack.c.b16 %v2779, %v2767
        %v3548 = vpack.c.b16 %v2780, %v2768
        %v3549 = vpack.c.b16 %v2781, %v2769
        %v3550 = vpack.c.b16 %v2782, %v2770
        %v3551 = vpack.c.b16 %v2783, %v2771
        %v3552 = vpack.c.b16 %v2784, %v2772
        %v3553 = vpack.c.b16 %v2797, %v2785
        %v3554 = vpack.c.b16 %v2798, %v2786
        %v3555 = vpack.c.b16 %v2799, %v2787
        %v3556 = vpack.c.b16 %v2800, %v2788
        %v3557 = vpack.c.b16 %v2801, %v2789
        %v3558 = vpack.c.b16 %v2802, %v2790
        %v3559 = vpack.c.b16 %v2803, %v2791
        %v3560 = vpack.c.b16 %v2804, %v2792
        %v3561 = vpack.c.b16 %v2805, %v2793
        %v3562 = vpack.c.b16 %v2806, %v2794
        %v3563 = vpack.c.b16 %v2807, %v2795
        %v3564 = vpack.c.b16 %v2808, %v2796
        %v3565 = vpack.c.b16 %v2821, %v2809
        %v3566 = vpack.c.b16 %v2822, %v2810
        %v3567 = vpack.c.b16 %v2823, %v2811
        %v3568 = vpack.c.b16 %v2824, %v2812
        %v3569 = vpack.c.b16 %v2825, %v2813
        %v3570 = vpack.c.b16 %v2826, %v2814
        %v3571 = vpack.c.b16 %v2827, %v2815
        %v3572 = vpack.c.b16 %v2828, %v2816
        %v3573 = vpack.c.b16 %v2829, %v2817
        %v3574 = vpack.c.b16 %v2830, %v2818
        %v3575 = vpack.c.b16 %v2831, %v2819
        %v3576 = vpack.c.b16 %v2832, %v2820
        %v3577 = vpack.c.b16 %v2845, %v2833
        %v3578 = vpack.c.b16 %v2846, %v2834
        %v3579 = vpack.c.b16 %v2847, %v2835
        %v3580 = vpack.c.b16 %v2848, %v2836
        %v3581 = vpack.c.b16 %v2849, %v2837
        %v3582 = vpack.c.b16 %v2850, %v2838
        %v3583 = vpack.c.b16 %v2851, %v2839
        %v3584 = vpack.c.b16 %v2852, %v2840
        %v3585 = vpack.c.b16 %v2853, %v2841
        %v3586 = vpack.c.b16 %v2854, %v2842
        %v3587 = vpack.c.b16 %v2855, %v2843
        %v3588 = vpack.c.b16 %v2856, %v2844
        %v3589 = vpack.c.b16 %v2869, %v2857
        %v3590 = vpack.c.b16 %v2870, %v2858
        %v3591 = vpack.c.b16 %v2871, %v2859
        %v3592 = vpack.c.b16 %v2872, %v2860
        %v3593 = vpack.c.b16 %v2873, %v2861
        %v3594 = vpack.c.b16 %v2874, %v2862
        %v3595 = vpack.c.b16 %v2875, %v2863
        %v3596 = vpack.c.b16 %v2876, %v2864
        %v3597 = vpack.c.b16 %v2877, %v2865
        %v3598 = vpack.c.b16 %v2878, %v2866
        %v3599 = vpack.c.b16 %v2879, %v2867
        %v3600 = vpack.c.b16 %v2880, %v2868
        %v3601 = vpack.c.b16 %v2893, %v2881
        %v3602 = vpack.c.b16 %v2894, %v2882
        %v3603 = vpack.c.b16 %v2895, %v2883
        %v3604 = vpack.c.b16 %v2896, %v2884
        %v3605 = vpack.c.b16 %v2897, %v2885
        %v3606 = vpack.c.b16 %v2898, %v2886
        %v3607 = vpack.c.b16 %v2899, %v2887
        %v3608 = vpack.c.b16 %v2900, %v2888
        %v3609 = vpack.c.b16 %v2901, %v2889
        %v3610 = vpack.c.b16 %v2902, %v2890
        %v3611 = vpack.c.b16 %v2903, %v2891
        %v3612 = vpack.c.b16 %v2904, %v2892
        %v3613 = vpack.c.b16 %v2917, %v2905
        %v3614 = vpack.c.b16 %v2918, %v2906
        %v3615 = vpack.c.b16 %v2919, %v2907
        %v3616 = vpack.c.b16 %v2920, %v2908
        %v3617 = vpack.c.b16 %v2921, %v2909
        %v3618 = vpack.c.b16 %v2922, %v2910
        %v3619 = vpack.c.b16 %v2923, %v2911
        %v3620 = vpack.c.b16 %v2924, %v2912
        %v3621 = vpack.c.b16 %v2925, %v2913
        %v3622 = vpack.c.b16 %v2926, %v2914
        %v3623 = vpack.c.b16 %v2927, %v2915
        %v3624 = vpack.c.b16 %v2928, %v2916
        %v3625 = vpack.c.b16 %v2941, %v2929
        %v3626 = vpack.c.b16 %v2942, %v2930
        %v3627 = vpack.c.b16 %v2943, %v2931
        %v3628 = vpack.c.b16 %v2944, %v2932
        %v3629 = vpack.c.b16 %v2945, %v2933
        %v3630 = vpack.c.b16 %v2946, %v2934
        %v3631 = vpack.c.b16 %v2947, %v2935
        %v3632 = vpack.c.b16 %v2948, %v2936
        %v3633 = vpack.c.b16 %v2949, %v2937
        %v3634 = vpack.c.b16 %v2950, %v2938
        %v3635 = vpack.c.b16 %v2951, %v2939
        %v3636 = vpack.c.b16 %v2952, %v2940
        %v3637 = vpack.c.b16 %v2965, %v2953
        %v3638 = vpack.c.b16 %v2966, %v2954
        %v3639 = vpack.c.b16 %v2967, %v2955
        %v3640 = vpack.c.b16 %v2968, %v2956
        %v3641 = vpack.c.b16 %v2969, %v2957
        %v3642 = vpack.c.b16 %v2970, %v2958
        %v3643 = vpack.c.b16 %v2971, %v2959
        %v3644 = vpack.c.b16 %v2972, %v2960
        %v3645 = vpack.c.b16 %v2973, %v2961
        %v3646 = vpack.c.b16 %v2974, %v2962
        %v3647 = vpack.c.b16 %v2975, %v2963
        %v3648 = vpack.c.b16 %v2976, %v2964
        %v3649 = vpack.c.b16 %v2989, %v2977
        %v3650 = vpack.c.b16 %v2990, %v2978
        %v3651 = vpack.c.b16 %v2991, %v2979
        %v3652 = vpack.c.b16 %v2992, %v2980
        %v3653 = vpack.c.b16 %v2993, %v2981
        %v3654 = vpack.c.b16 %v2994, %v2982
        %v3655 = vpack.c.b16 %v2995, %v2983
        %v3656 = vpack.c.b16 %v2996, %v2984
        %v3657 = vpack.c.b16 %v2997, %v2985
        %v3658 = vpack.c.b16 %v2998, %v2986
        %v3659 = vpack.c.b16 %v2999, %v2987
        %v3660 = vpack.c.b16 %v3000, %v2988
        %v3661 = vpack.c.b16 %v3013, %v3001
        %v3662 = vpack.c.b16 %v3014, %v3002
        %v3663 = vpack.c.b16 %v3015, %v3003
        %v3664 = vpack.c.b16 %v3016, %v3004
        %v3665 = vpack.c.b16 %v3017, %v3005
        %v3666 = vpack.c.b16 %v3018, %v3006
        %v3667 = vpack.c.b16 %v3019, %v3007
        %v3668 = vpack.c.b16 %v3020, %v3008
        %v3669 = vpack.c.b16 %v3021, %v3009
        %v3670 = vpack.c.b16 %v3022, %v3010
        %v3671 = vpack.c.b16 %v3023, %v3011
        %v3672 = vpack.c.b16 %v3024, %v3012
        %v3673 = vpack.c.b16 %v3037, %v3025
        %v3674 = vpack.c.b16 %v3038, %v3026
        %v3675 = vpack.c.b16 %v3039, %v3027
        %v3676 = vpack.c.b16 %v3040, %v3028
        %v3677 = vpack.c.b16 %v3041, %v3029
        %v3678 = vpack.c.b16 %v3042, %v3030
        %v3679 = vpack.c.b16 %v3043, %v3031
        %v3680 = vpack.c.b16 %v3044, %v3032
        %v3681 = vpack.c.b16 %v3045, %v3033
        %v3682 = vpack.c.b16 %v3046, %v3034
        %v3683 = vpack.c.b16 %v3047, %v3035
        %v3684 = vpack.c.b16 %v3048, %v3036
        %v3685 = vpack.c.b16 %v3061, %v3049
        %v3686 = vpack.c.b16 %v3062, %v3050
        %v3687 = vpack.c.b16 %v3063, %v3051
        %v3688 = vpack.c.b16 %v3064, %v3052
        %v3689 = vpack.c.b16 %v3065, %v3053
        %v3690 = vpack.c.b16 %v3066, %v3054
        %v3691 = vpack.c.b16 %v3067, %v3055
        %v3692 = vpack.c.b16 %v3068, %v3056
        %v3693 = vpack.c.b16 %v3069, %v3057
        %v3694 = vpack.c.b16 %v3070, %v3058
        %v3695 = vpack.c.b16 %v3071, %v3059
        %v3696 = vpack.c.b16 %v3072, %v3060
        %v3697 = vpack.c.b16 %v3085, %v3073
        %v3698 = vpack.c.b16 %v3086, %v3074
        %v3699 = vpack.c.b16 %v3087, %v3075
        %v3700 = vpack.c.b16 %v3088, %v3076
        %v3701 = vpack.c.b16 %v3089, %v3077
        %v3702 = vpack.c.b16 %v3090, %v3078
        %v3703 = vpack.c.b16 %v3091, %v3079
        %v3704 = vpack.c.b16 %v3092, %v3080
        %v3705 = vpack.c.b16 %v3093, %v3081
        %v3706 = vpack.c.b16 %v3094, %v3082
        %v3707 = vpack.c.b16 %v3095, %v3083
        %v3708 = vpack.c.b16 %v3096, %v3084
        %v3709 = vpack.c.b16 %v3109, %v3097
        %v3710 = vpack.c.b16 %v3110, %v3098
        %v3711 = vpack.c.b16 %v3111, %v3099
        %v3712 = vpack.c.b16 %v3112, %v3100
        %v3713 = vpack.c.b16 %v3113, %v3101
        %v3714 = vpack.c.b16 %v3114, %v3102
        %v3715 = vpack.c.b16 %v3115, %v3103
        %v3716 = vpack.c.b16 %v3116, %v3104
        %v3717 = vpack.c.b16 %v3117, %v3105
        %v3718 = vpack.c.b16 %v3118, %v3106
        %v3719 = vpack.c.b16 %v3119, %v3107
        %v3720 = vpack.c.b16 %v3120, %v3108
        %v3721 = vpack.c.b16 %v3133, %v3121
        %v3722 = vpack.c.b16 %v3134, %v3122
        %v3723 = vpack.c.b16 %v3135, %v3123
        %v3724 = vpack.c.b16 %v3136, %v3124
        %v3725 = vpack.c.b16 %v3137, %v3125
        %v3726 = vpack.c.b16 %v3138, %v3126
        %v3727 = vpack.c.b16 %v3139, %v3127
        %v3728 = vpack.c.b16 %v3140, %v3128
        %v3729 = vpack.c.b16 %v3141, %v3129
        %v3730 = vpack.c.b16 %v3142, %v3130
        %v3731 = vpack.c.b16 %v3143, %v3131
        %v3732 = vpack.c.b16 %v3144, %v3132
        %v3733 = vpack.c.b16 %v3157, %v3145
        %v3734 = vpack.c.b16 %v3158, %v3146
        %v3735 = vpack.c.b16 %v3159, %v3147
        %v3736 = vpack.c.b16 %v3160, %v3148
        %v3737 = vpack.c.b16 %v3161, %v3149
        %v3738 = vpack.c.b16 %v3162, %v3150
        %v3739 = vpack.c.b16 %v3163, %v3151
        %v3740 = vpack.c.b16 %v3164, %v3152
        %v3741 = vpack.c.b16 %v3165, %v3153
        %v3742 = vpack.c.b16 %v3166, %v3154
        %v3743 = vpack.c.b16 %v3167, %v3155
        %v3744 = vpack.c.b16 %v3168, %v3156
        %4321 = vmatprep.subr.bf16.mxu0 %v3170
        %4322 = vmatpush1.bf16.msra.mxu0 %v3169
        %4323 = vmatprep.subr.bf16.mxu0 %v3182
        %4324 = vmatpush1.bf16.msra.mxu0 %v3181
        %4325 = vmatprep.subr.bf16.mxu0 %v3194
        %4326 = vmatpush1.bf16.msra.mxu0 %v3193
        %4327 = vmatprep.subr.bf16.mxu0 %v3206
        %4328 = vmatpush1.bf16.msra.mxu0 %v3205
        %4329 = vmatprep.subr.bf16.mxu0 %v3218
        %4330 = vmatpush1.bf16.msra.mxu0 %v3217
        %4331 = vmatprep.subr.bf16.mxu0 %v3230
        %4332 = vmatpush1.bf16.msra.mxu0 %v3229
        %4333 = vmatprep.subr.bf16.mxu0 %v3242
        %4334 = vmatpush1.bf16.msra.mxu0 %v3241
        %4335 = vmatprep.subr.bf16.mxu0 %v3254
        %4336 = vmatpush1.bf16.msra.mxu0 %v3253
        %4337 = vmatprep.subr.bf16.mxu0 %v3266
        %4338 = vmatpush1.bf16.msra.mxu0 %v3265
        %4339 = vmatprep.subr.bf16.mxu0 %v3278
        %4340 = vmatpush1.bf16.msra.mxu0 %v3277
        %4341 = vmatprep.subr.bf16.mxu0 %v3290
        %4342 = vmatpush1.bf16.msra.mxu0 %v3289
        %4343 = vmatprep.subr.bf16.mxu0 %v3302
        %4344 = vmatpush1.bf16.msra.mxu0 %v3301
        %4345 = vmatprep.subr.bf16.mxu0 %v3314
        %4346 = vmatpush1.bf16.msra.mxu0 %v3313
        %4347 = vmatprep.subr.bf16.mxu0 %v3326
        %4348 = vmatpush1.bf16.msra.mxu0 %v3325
        %4349 = vmatprep.subr.bf16.mxu0 %v3338
        %4350 = vmatpush1.bf16.msra.mxu0 %v3337
        %4351 = vmatprep.subr.bf16.mxu0 %v3350
        %4352 = vmatpush1.bf16.msra.mxu0 %v3349
        %4353 = vmatprep.mubr.bf16.mxu0 %v778
        %4354 = vmatmul.mubr.bf16.gmra.mrb[0].mxu0 %v777
        %v4355 = vpop.f32.mrb[0].mxu0
        %v4356 = vadd.f32 %v1384, %v4355
        %v4357 = vpop.f32.mrb[0].mxu0
        %v4358 = vadd.f32 %v1388, %v4357
        %v4359 = vpop.f32.mrb[0].mxu0
        %v4360 = vadd.f32 %v1384, %v4359
        %v4361 = vpop.f32.mrb[0].mxu0
        %v4362 = vadd.f32 %v1388, %v4361
        %4363 = vmatprep.mubr.bf16.mxu0 %v784
        %4364 = vmatmul.mubr.bf16.gmra.mrb[0].mxu0 %v783
        %v4365 = vpop.f32.mrb[0].mxu0
        %v4366 = vadd.f32 %v1384, %v4365
        %v4367 = vpop.f32.mrb[0].mxu0
        %v4368 = vadd.f32 %v1388, %v4367
        %v4369 = vpop.f32.mrb[0].mxu0
        %v4370 = vadd.f32 %v1384, %v4369
        %v4371 = vpop.f32.mrb[0].mxu0
        %v4372 = vadd.f32 %v1388, %v4371
        %4373 = vmatprep.mubr.bf16.mxu0 %v790
        %4374 = vmatmul.mubr.bf16.gmra.mrb[0].mxu0 %v789
        %v4375 = vpop.f32.mrb[0].mxu0
        %v4376 = vadd.f32 %v1384, %v4375
        %v4377 = vpop.f32.mrb[0].mxu0
        %v4378 = vadd.f32 %v1388, %v4377
        %v4379 = vpop.f32.mrb[0].mxu0
        %v4380 = vadd.f32 %v1384, %v4379
        %v4381 = vpop.f32.mrb[0].mxu0
        %v4382 = vadd.f32 %v1388, %v4381
        %4383 = vmatprep.mubr.bf16.mxu0 %v796
        %4384 = vmatmul.mubr.bf16.gmra.mrb[0].mxu0 %v795
        %v4385 = vpop.f32.mrb[0].mxu0
        %v4386 = vadd.f32 %v1384, %v4385
        %v4387 = vpop.f32.mrb[0].mxu0
        %v4388 = vadd.f32 %v1388, %v4387
        %v4389 = vpop.f32.mrb[0].mxu0
        %v4390 = vpop.f32.mrb[0].mxu0
        %4391 = vdwg.mxu0
        %4392 = vmatprep.subr.bf16.mxu0 %v3362
        %4393 = vmatpush1.bf16.msra.mxu0 %v3361
        %4394 = vmatprep.subr.bf16.mxu0 %v3374
        %4395 = vmatpush1.bf16.msra.mxu0 %v3373
        %4396 = vmatprep.subr.bf16.mxu0 %v3386
        %4397 = vmatpush1.bf16.msra.mxu0 %v3385
        %4398 = vmatprep.subr.bf16.mxu0 %v3398
        %4399 = vmatpush1.bf16.msra.mxu0 %v3397
        %4400 = vmatprep.subr.bf16.mxu0 %v3410
        %4401 = vmatpush1.bf16.msra.mxu0 %v3409
        %4402 = vmatprep.subr.bf16.mxu0 %v3422
        %4403 = vmatpush1.bf16.msra.mxu0 %v3421
        %4404 = vmatprep.subr.bf16.mxu0 %v3434
        %4405 = vmatpush1.bf16.msra.mxu0 %v3433
        %4406 = vmatprep.subr.bf16.mxu0 %v3446
        %4407 = vmatpush1.bf16.msra.mxu0 %v3445
        %4408 = vmatprep.subr.bf16.mxu0 %v3458
        %4409 = vmatpush1.bf16.msra.mxu0 %v3457
        %4410 = vmatprep.subr.bf16.mxu0 %v3470
        %4411 = vmatpush1.bf16.msra.mxu0 %v3469
        %4412 = vmatprep.subr.bf16.mxu0 %v3482
        %4413 = vmatpush1.bf16.msra.mxu0 %v3481
        %4414 = vmatprep.subr.bf16.mxu0 %v3494
        %4415 = vmatpush1.bf16.msra.mxu0 %v3493
        %4416 = vmatprep.subr.bf16.mxu0 %v3506
        %4417 = vmatpush1.bf16.msra.mxu0 %v3505
        %4418 = vmatprep.subr.bf16.mxu0 %v3518
        %4419 = vmatpush1.bf16.msra.mxu0 %v3517
        %4420 = vmatprep.subr.bf16.mxu0 %v3530
        %4421 = vmatpush1.bf16.msra.mxu0 %v3529
        %4422 = vmatprep.subr.bf16.mxu0 %v3542
        %4423 = vmatpush1.bf16.msra.mxu0 %v3541
        %4424 = vmatprep.mubr.bf16.mxu0 %v780
        %4425 = vmatmul.mubr.bf16.gmra.mrb[0].mxu0 %v779
        %v4426 = vpop.f32.mrb[0].mxu0
        %v4427 = vadd.f32 %v4356, %v4426
        %v4428 = vpop.f32.mrb[0].mxu0
        %v4429 = vadd.f32 %v4358, %v4428
        %v4430 = vpop.f32.mrb[0].mxu0
        %v4431 = vadd.f32 %v4360, %v4430
        %v4432 = vpop.f32.mrb[0].mxu0
        %v4433 = vadd.f32 %v4362, %v4432
        %4434 = vmatprep.mubr.bf16.mxu0 %v786
        %4435 = vmatmul.mubr.bf16.gmra.mrb[0].mxu0 %v785
        %v4436 = vpop.f32.mrb[0].mxu0
        %v4437 = vadd.f32 %v4366, %v4436
        %v4438 = vpop.f32.mrb[0].mxu0
        %v4439 = vadd.f32 %v4368, %v4438
        %v4440 = vpop.f32.mrb[0].mxu0
        %v4441 = vadd.f32 %v4370, %v4440
        %v4442 = vpop.f32.mrb[0].mxu0
        %v4443 = vadd.f32 %v4372, %v4442
        %4444 = vmatprep.mubr.bf16.mxu0 %v792
        %4445 = vmatmul.mubr.bf16.gmra.mrb[0].mxu0 %v791
        %v4446 = vpop.f32.mrb[0].mxu0
        %v4447 = vadd.f32 %v4376, %v4446
        %v4448 = vpop.f32.mrb[0].mxu0
        %v4449 = vadd.f32 %v4378, %v4448
        %v4450 = vpop.f32.mrb[0].mxu0
        %v4451 = vadd.f32 %v4380, %v4450
        %v4452 = vpop.f32.mrb[0].mxu0
        %v4453 = vadd.f32 %v4382, %v4452
        %4454 = vmatprep.mubr.bf16.mxu0 %v798
        %4455 = vmatmul.mubr.bf16.gmra.mrb[0].mxu0 %v797
        %v4456 = vpop.f32.mrb[0].mxu0
        %v4457 = vadd.f32 %v4386, %v4456
        %v4458 = vpop.f32.mrb[0].mxu0
        %v4459 = vadd.f32 %v4388, %v4458
        %v4460 = vpop.f32.mrb[0].mxu0
        %v4461 = vpop.f32.mrb[0].mxu0
        %4462 = vdwg.mxu0
        %4463 = vmatprep.subr.bf16.mxu0 %v3554
        %4464 = vmatpush1.bf16.msra.mxu0 %v3553
        %4465 = vmatprep.subr.bf16.mxu0 %v3566
        %4466 = vmatpush1.bf16.msra.mxu0 %v3565
        %4467 = vmatprep.subr.bf16.mxu0 %v3578
        %4468 = vmatpush1.bf16.msra.mxu0 %v3577
        %4469 = vmatprep.subr.bf16.mxu0 %v3590
        %4470 = vmatpush1.bf16.msra.mxu0 %v3589
        %4471 = vmatprep.subr.bf16.mxu0 %v3602
        %4472 = vmatpush1.bf16.msra.mxu0 %v3601
        %4473 = vmatprep.subr.bf16.mxu0 %v3614
        %4474 = vmatpush1.bf16.msra.mxu0 %v3613
        %4475 = vmatprep.subr.bf16.mxu0 %v3626
        %4476 = vmatpush1.bf16.msra.mxu0 %v3625
        %4477 = vmatprep.subr.bf16.mxu0 %v3638
        %4478 = vmatpush1.bf16.msra.mxu0 %v3637
        %4479 = vmatprep.subr.bf16.mxu0 %v3650
        %4480 = vmatpush1.bf16.msra.mxu0 %v3649
        %4481 = vmatprep.subr.bf16.mxu0 %v3662
        %4482 = vmatpush1.bf16.msra.mxu0 %v3661
        %4483 = vmatprep.subr.bf16.mxu0 %v3674
        %4484 = vmatpush1.bf16.msra.mxu0 %v3673
        %4485 = vmatprep.subr.bf16.mxu0 %v3686
        %4486 = vmatpush1.bf16.msra.mxu0 %v3685
        %4487 = vmatprep.subr.bf16.mxu0 %v3698
        %4488 = vmatpush1.bf16.msra.mxu0 %v3697
        %4489 = vmatprep.subr.bf16.mxu0 %v3710
        %4490 = vmatpush1.bf16.msra.mxu0 %v3709
        %4491 = vmatprep.subr.bf16.mxu0 %v3722
        %4492 = vmatpush1.bf16.msra.mxu0 %v3721
        %4493 = vmatprep.subr.bf16.mxu0 %v3734
        %4494 = vmatpush1.bf16.msra.mxu0 %v3733
        %4495 = vmatprep.mubr.bf16.mxu0 %v782
        %4496 = vmatmul.mubr.bf16.gmra.mrb[0].mxu0 %v781
        %v4497 = vpop.f32.mrb[0].mxu0
        %v4498 = vadd.f32 %v4427, %v4497
        %v4499 = vpop.f32.mrb[0].mxu0
        %v4500 = vadd.f32 %v4429, %v4499
        %v4501 = vpop.f32.mrb[0].mxu0
        %v4502 = vadd.f32 %v4431, %v4501
        %v4503 = vpop.f32.mrb[0].mxu0
        %v4504 = vadd.f32 %v4433, %v4503
        %4505 = vmatprep.mubr.bf16.mxu0 %v788
        %4506 = vmatmul.mubr.bf16.gmra.mrb[0].mxu0 %v787
        %v4507 = vpop.f32.mrb[0].mxu0
        %v4508 = vadd.f32 %v4437, %v4507
        %v4509 = vpop.f32.mrb[0].mxu0
        %v4510 = vadd.f32 %v4439, %v4509
        %v4511 = vpop.f32.mrb[0].mxu0
        %v4512 = vadd.f32 %v4441, %v4511
        %v4513 = vpop.f32.mrb[0].mxu0
        %v4514 = vadd.f32 %v4443, %v4513
        %4515 = vmatprep.mubr.bf16.mxu0 %v794
        %4516 = vmatmul.mubr.bf16.gmra.mrb[0].mxu0 %v793
        %v4517 = vpop.f32.mrb[0].mxu0
        %v4518 = vadd.f32 %v4447, %v4517
        %v4519 = vpop.f32.mrb[0].mxu0
        %v4520 = vadd.f32 %v4449, %v4519
        %v4521 = vpop.f32.mrb[0].mxu0
        %v4522 = vadd.f32 %v4451, %v4521
        %v4523 = vpop.f32.mrb[0].mxu0
        %v4524 = vadd.f32 %v4453, %v4523
        %4525 = vmatprep.mubr.bf16.mxu0 %v800
        %4526 = vmatmul.mubr.bf16.gmra.mrb[0].mxu0 %v799
        %v4527 = vpop.f32.mrb[0].mxu0
        %v4528 = vadd.f32 %v4457, %v4527
        %v4529 = vpop.f32.mrb[0].mxu0
        %v4530 = vadd.f32 %v4459, %v4529
        %v4531 = vpop.f32.mrb[0].mxu0
        %v4532 = vpop.f32.mrb[0].mxu0
        %4533 = vdwg.mxu0
        %4534 = vmatprep.subr.bf16.mxu0 %v3172
        %4535 = vmatpush1.bf16.msra.mxu0 %v3171
        %4536 = vmatprep.subr.bf16.mxu0 %v3184
        %4537 = vmatpush1.bf16.msra.mxu0 %v3183
        %4538 = vmatprep.subr.bf16.mxu0 %v3196
        %4539 = vmatpush1.bf16.msra.mxu0 %v3195
        %4540 = vmatprep.subr.bf16.mxu0 %v3208
        %4541 = vmatpush1.bf16.msra.mxu0 %v3207
        %4542 = vmatprep.subr.bf16.mxu0 %v3220
        %4543 = vmatpush1.bf16.msra.mxu0 %v3219
        %4544 = vmatprep.subr.bf16.mxu0 %v3232
        %4545 = vmatpush1.bf16.msra.mxu0 %v3231
        %4546 = vmatprep.subr.bf16.mxu0 %v3244
        %4547 = vmatpush1.bf16.msra.mxu0 %v3243
        %4548 = vmatprep.subr.bf16.mxu0 %v3256
        %4549 = vmatpush1.bf16.msra.mxu0 %v3255
        %4550 = vmatprep.subr.bf16.mxu0 %v3268
        %4551 = vmatpush1.bf16.msra.mxu0 %v3267
        %4552 = vmatprep.subr.bf16.mxu0 %v3280
        %4553 = vmatpush1.bf16.msra.mxu0 %v3279
        %4554 = vmatprep.subr.bf16.mxu0 %v3292
        %4555 = vmatpush1.bf16.msra.mxu0 %v3291
        %4556 = vmatprep.subr.bf16.mxu0 %v3304
        %4557 = vmatpush1.bf16.msra.mxu0 %v3303
        %4558 = vmatprep.subr.bf16.mxu0 %v3316
        %4559 = vmatpush1.bf16.msra.mxu0 %v3315
        %4560 = vmatprep.subr.bf16.mxu0 %v3328
        %4561 = vmatpush1.bf16.msra.mxu0 %v3327
        %4562 = vmatprep.subr.bf16.mxu0 %v3340
        %4563 = vmatpush1.bf16.msra.mxu0 %v3339
        %4564 = vmatprep.subr.bf16.mxu0 %v3352
        %4565 = vmatpush1.bf16.msra.mxu0 %v3351
        %4566 = vmatprep.mubr.bf16.mxu0 %v778
        %4567 = vmatmul.mubr.bf16.gmra.mrb[0].mxu0 %v777
        %v4568 = vpop.f32.mrb[0].mxu0
        %v4569 = vadd.f32 %v1392, %v4568
        %v4570 = vpop.f32.mrb[0].mxu0
        %v4571 = vadd.f32 %v1396, %v4570
        %v4572 = vpop.f32.mrb[0].mxu0
        %v4573 = vadd.f32 %v1392, %v4572
        %v4574 = vpop.f32.mrb[0].mxu0
        %v4575 = vadd.f32 %v1396, %v4574
        %4576 = vmatprep.mubr.bf16.mxu0 %v784
        %4577 = vmatmul.mubr.bf16.gmra.mrb[0].mxu0 %v783
        %v4578 = vpop.f32.mrb[0].mxu0
        %v4579 = vadd.f32 %v1392, %v4578
        %v4580 = vpop.f32.mrb[0].mxu0
        %v4581 = vadd.f32 %v1396, %v4580
        %v4582 = vpop.f32.mrb[0].mxu0
        %v4583 = vadd.f32 %v1392, %v4582
        %v4584 = vpop.f32.mrb[0].mxu0
        %v4585 = vadd.f32 %v1396, %v4584
        %4586 = vmatprep.mubr.bf16.mxu0 %v790
        %4587 = vmatmul.mubr.bf16.gmra.mrb[0].mxu0 %v789
        %v4588 = vpop.f32.mrb[0].mxu0
        %v4589 = vadd.f32 %v1392, %v4588
        %v4590 = vpop.f32.mrb[0].mxu0
        %v4591 = vadd.f32 %v1396, %v4590
        %v4592 = vpop.f32.mrb[0].mxu0
        %v4593 = vadd.f32 %v1392, %v4592
        %v4594 = vpop.f32.mrb[0].mxu0
        %v4595 = vadd.f32 %v1396, %v4594
        %4596 = vmatprep.mubr.bf16.mxu0 %v796
        %4597 = vmatmul.mubr.bf16.gmra.mrb[0].mxu0 %v795
        %v4598 = vpop.f32.mrb[0].mxu0
        %v4599 = vadd.f32 %v1392, %v4598
        %v4600 = vpop.f32.mrb[0].mxu0
        %v4601 = vadd.f32 %v1396, %v4600
        %v4602 = vpop.f32.mrb[0].mxu0
        %v4603 = vpop.f32.mrb[0].mxu0
        %4604 = vdwg.mxu0
        %4605 = vmatprep.subr.bf16.mxu0 %v3364
        %4606 = vmatpush1.bf16.msra.mxu0 %v3363
        %4607 = vmatprep.subr.bf16.mxu0 %v3376
        %4608 = vmatpush1.bf16.msra.mxu0 %v3375
        %4609 = vmatprep.subr.bf16.mxu0 %v3388
        %4610 = vmatpush1.bf16.msra.mxu0 %v3387
        %4611 = vmatprep.subr.bf16.mxu0 %v3400
        %4612 = vmatpush1.bf16.msra.mxu0 %v3399
        %4613 = vmatprep.subr.bf16.mxu0 %v3412
        %4614 = vmatpush1.bf16.msra.mxu0 %v3411
        %4615 = vmatprep.subr.bf16.mxu0 %v3424
        %4616 = vmatpush1.bf16.msra.mxu0 %v3423
        %4617 = vmatprep.subr.bf16.mxu0 %v3436
        %4618 = vmatpush1.bf16.msra.mxu0 %v3435
        %4619 = vmatprep.subr.bf16.mxu0 %v3448
        %4620 = vmatpush1.bf16.msra.mxu0 %v3447
        %4621 = vmatprep.subr.bf16.mxu0 %v3460
        %4622 = vmatpush1.bf16.msra.mxu0 %v3459
        %4623 = vmatprep.subr.bf16.mxu0 %v3472
        %4624 = vmatpush1.bf16.msra.mxu0 %v3471
        %4625 = vmatprep.subr.bf16.mxu0 %v3484
        %4626 = vmatpush1.bf16.msra.mxu0 %v3483
        %4627 = vmatprep.subr.bf16.mxu0 %v3496
        %4628 = vmatpush1.bf16.msra.mxu0 %v3495
        %4629 = vmatprep.subr.bf16.mxu0 %v3508
        %4630 = vmatpush1.bf16.msra.mxu0 %v3507
        %4631 = vmatprep.subr.bf16.mxu0 %v3520
        %4632 = vmatpush1.bf16.msra.mxu0 %v3519
        %4633 = vmatprep.subr.bf16.mxu0 %v3532
        %4634 = vmatpush1.bf16.msra.mxu0 %v3531
        %4635 = vmatprep.subr.bf16.mxu0 %v3544
        %4636 = vmatpush1.bf16.msra.mxu0 %v3543
        %4637 = vmatprep.mubr.bf16.mxu0 %v780
        %4638 = vmatmul.mubr.bf16.gmra.mrb[0].mxu0 %v779
        %v4639 = vpop.f32.mrb[0].mxu0
        %v4640 = vadd.f32 %v4569, %v4639
        %v4641 = vpop.f32.mrb[0].mxu0
        %v4642 = vadd.f32 %v4571, %v4641
        %v4643 = vpop.f32.mrb[0].mxu0
        %v4644 = vadd.f32 %v4573, %v4643
        %v4645 = vpop.f32.mrb[0].mxu0
        %v4646 = vadd.f32 %v4575, %v4645
        %4647 = vmatprep.mubr.bf16.mxu0 %v786
        %4648 = vmatmul.mubr.bf16.gmra.mrb[0].mxu0 %v785
        %v4649 = vpop.f32.mrb[0].mxu0
        %v4650 = vadd.f32 %v4579, %v4649
        %v4651 = vpop.f32.mrb[0].mxu0
        %v4652 = vadd.f32 %v4581, %v4651
        %v4653 = vpop.f32.mrb[0].mxu0
        %v4654 = vadd.f32 %v4583, %v4653
        %v4655 = vpop.f32.mrb[0].mxu0
        %v4656 = vadd.f32 %v4585, %v4655
        %4657 = vmatprep.mubr.bf16.mxu0 %v792
        %4658 = vmatmul.mubr.bf16.gmra.mrb[0].mxu0 %v791
        %v4659 = vpop.f32.mrb[0].mxu0
        %v4660 = vadd.f32 %v4589, %v4659
        %v4661 = vpop.f32.mrb[0].mxu0
        %v4662 = vadd.f32 %v4591, %v4661
        %v4663 = vpop.f32.mrb[0].mxu0
        %v4664 = vadd.f32 %v4593, %v4663
        %v4665 = vpop.f32.mrb[0].mxu0
        %v4666 = vadd.f32 %v4595, %v4665
        %4667 = vmatprep.mubr.bf16.mxu0 %v798
        %4668 = vmatmul.mubr.bf16.gmra.mrb[0].mxu0 %v797
        %v4669 = vpop.f32.mrb[0].mxu0
        %v4670 = vadd.f32 %v4599, %v4669
        %v4671 = vpop.f32.mrb[0].mxu0
        %v4672 = vadd.f32 %v4601, %v4671
        %v4673 = vpop.f32.mrb[0].mxu0
        %v4674 = vpop.f32.mrb[0].mxu0
        %4675 = vdwg.mxu0
        %4676 = vmatprep.subr.bf16.mxu0 %v3556
        %4677 = vmatpush1.bf16.msra.mxu0 %v3555
        %4678 = vmatprep.subr.bf16.mxu0 %v3568
        %4679 = vmatpush1.bf16.msra.mxu0 %v3567
        %4680 = vmatprep.subr.bf16.mxu0 %v3580
        %4681 = vmatpush1.bf16.msra.mxu0 %v3579
        %4682 = vmatprep.subr.bf16.mxu0 %v3592
        %4683 = vmatpush1.bf16.msra.mxu0 %v3591
        %4684 = vmatprep.subr.bf16.mxu0 %v3604
        %4685 = vmatpush1.bf16.msra.mxu0 %v3603
        %4686 = vmatprep.subr.bf16.mxu0 %v3616
        %4687 = vmatpush1.bf16.msra.mxu0 %v3615
        %4688 = vmatprep.subr.bf16.mxu0 %v3628
        %4689 = vmatpush1.bf16.msra.mxu0 %v3627
        %4690 = vmatprep.subr.bf16.mxu0 %v3640
        %4691 = vmatpush1.bf16.msra.mxu0 %v3639
        %4692 = vmatprep.subr.bf16.mxu0 %v3652
        %4693 = vmatpush1.bf16.msra.mxu0 %v3651
        %4694 = vmatprep.subr.bf16.mxu0 %v3664
        %4695 = vmatpush1.bf16.msra.mxu0 %v3663
        %4696 = vmatprep.subr.bf16.mxu0 %v3676
        %4697 = vmatpush1.bf16.msra.mxu0 %v3675
        %4698 = vmatprep.subr.bf16.mxu0 %v3688
        %4699 = vmatpush1.bf16.msra.mxu0 %v3687
        %4700 = vmatprep.subr.bf16.mxu0 %v3700
        %4701 = vmatpush1.bf16.msra.mxu0 %v3699
        %4702 = vmatprep.subr.bf16.mxu0 %v3712
        %4703 = vmatpush1.bf16.msra.mxu0 %v3711
        %4704 = vmatprep.subr.bf16.mxu0 %v3724
        %4705 = vmatpush1.bf16.msra.mxu0 %v3723
        %4706 = vmatprep.subr.bf16.mxu0 %v3736
        %4707 = vmatpush1.bf16.msra.mxu0 %v3735
        %4708 = vmatprep.mubr.bf16.mxu0 %v782
        %4709 = vmatmul.mubr.bf16.gmra.mrb[0].mxu0 %v781
        %v4710 = vpop.f32.mrb[0].mxu0
        %v4711 = vadd.f32 %v4640, %v4710
        %v4712 = vpop.f32.mrb[0].mxu0
        %v4713 = vadd.f32 %v4642, %v4712
        %v4714 = vpop.f32.mrb[0].mxu0
        %v4715 = vadd.f32 %v4644, %v4714
        %v4716 = vpop.f32.mrb[0].mxu0
        %v4717 = vadd.f32 %v4646, %v4716
        %4718 = vmatprep.mubr.bf16.mxu0 %v788
        %4719 = vmatmul.mubr.bf16.gmra.mrb[0].mxu0 %v787
        %v4720 = vpop.f32.mrb[0].mxu0
        %v4721 = vadd.f32 %v4650, %v4720
        %v4722 = vpop.f32.mrb[0].mxu0
        %v4723 = vadd.f32 %v4652, %v4722
        %v4724 = vpop.f32.mrb[0].mxu0
        %v4725 = vadd.f32 %v4654, %v4724
        %v4726 = vpop.f32.mrb[0].mxu0
        %v4727 = vadd.f32 %v4656, %v4726
        %4728 = vmatprep.mubr.bf16.mxu0 %v794
        %4729 = vmatmul.mubr.bf16.gmra.mrb[0].mxu0 %v793
        %v4730 = vpop.f32.mrb[0].mxu0
        %v4731 = vadd.f32 %v4660, %v4730
        %v4732 = vpop.f32.mrb[0].mxu0
        %v4733 = vadd.f32 %v4662, %v4732
        %v4734 = vpop.f32.mrb[0].mxu0
        %v4735 = vadd.f32 %v4664, %v4734
        %v4736 = vpop.f32.mrb[0].mxu0
        %v4737 = vadd.f32 %v4666, %v4736
        %4738 = vmatprep.mubr.bf16.mxu0 %v800
        %4739 = vmatmul.mubr.bf16.gmra.mrb[0].mxu0 %v799
        %v4740 = vpop.f32.mrb[0].mxu0
        %v4741 = vadd.f32 %v4670, %v4740
        %v4742 = vpop.f32.mrb[0].mxu0
        %v4743 = vadd.f32 %v4672, %v4742
        %v4744 = vpop.f32.mrb[0].mxu0
        %v4745 = vpop.f32.mrb[0].mxu0
        %4746 = vdwg.mxu0
        %4747 = vmatprep.subr.bf16.mxu0 %v3174
        %4748 = vmatpush1.bf16.msra.mxu0 %v3173
        %4749 = vmatprep.subr.bf16.mxu0 %v3186
        %4750 = vmatpush1.bf16.msra.mxu0 %v3185
        %4751 = vmatprep.subr.bf16.mxu0 %v3198
        %4752 = vmatpush1.bf16.msra.mxu0 %v3197
        %4753 = vmatprep.subr.bf16.mxu0 %v3210
        %4754 = vmatpush1.bf16.msra.mxu0 %v3209
        %4755 = vmatprep.subr.bf16.mxu0 %v3222
        %4756 = vmatpush1.bf16.msra.mxu0 %v3221
        %4757 = vmatprep.subr.bf16.mxu0 %v3234
        %4758 = vmatpush1.bf16.msra.mxu0 %v3233
        %4759 = vmatprep.subr.bf16.mxu0 %v3246
        %4760 = vmatpush1.bf16.msra.mxu0 %v3245
        %4761 = vmatprep.subr.bf16.mxu0 %v3258
        %4762 = vmatpush1.bf16.msra.mxu0 %v3257
        %4763 = vmatprep.subr.bf16.mxu0 %v3270
        %4764 = vmatpush1.bf16.msra.mxu0 %v3269
        %4765 = vmatprep.subr.bf16.mxu0 %v3282
        %4766 = vmatpush1.bf16.msra.mxu0 %v3281
        %4767 = vmatprep.subr.bf16.mxu0 %v3294
        %4768 = vmatpush1.bf16.msra.mxu0 %v3293
        %4769 = vmatprep.subr.bf16.mxu0 %v3306
        %4770 = vmatpush1.bf16.msra.mxu0 %v3305
        %4771 = vmatprep.subr.bf16.mxu0 %v3318
        %4772 = vmatpush1.bf16.msra.mxu0 %v3317
        %4773 = vmatprep.subr.bf16.mxu0 %v3330
        %4774 = vmatpush1.bf16.msra.mxu0 %v3329
        %4775 = vmatprep.subr.bf16.mxu0 %v3342
        %4776 = vmatpush1.bf16.msra.mxu0 %v3341
        %4777 = vmatprep.subr.bf16.mxu0 %v3354
        %4778 = vmatpush1.bf16.msra.mxu0 %v3353
        %4779 = vmatprep.mubr.bf16.mxu0 %v778
        %4780 = vmatmul.mubr.bf16.gmra.mrb[0].mxu0 %v777
        %v4781 = vpop.f32.mrb[0].mxu0
        %v4782 = vadd.f32 %v1400, %v4781
        %v4783 = vpop.f32.mrb[0].mxu0
        %v4784 = vadd.f32 %v1404, %v4783
        %v4785 = vpop.f32.mrb[0].mxu0
        %v4786 = vadd.f32 %v1400, %v4785
        %v4787 = vpop.f32.mrb[0].mxu0
        %v4788 = vadd.f32 %v1404, %v4787
        %4789 = vmatprep.mubr.bf16.mxu0 %v784
        %4790 = vmatmul.mubr.bf16.gmra.mrb[0].mxu0 %v783
        %v4791 = vpop.f32.mrb[0].mxu0
        %v4792 = vadd.f32 %v1400, %v4791
        %v4793 = vpop.f32.mrb[0].mxu0
        %v4794 = vadd.f32 %v1404, %v4793
        %v4795 = vpop.f32.mrb[0].mxu0
        %v4796 = vadd.f32 %v1400, %v4795
        %v4797 = vpop.f32.mrb[0].mxu0
        %v4798 = vadd.f32 %v1404, %v4797
        %4799 = vmatprep.mubr.bf16.mxu0 %v790
        %4800 = vmatmul.mubr.bf16.gmra.mrb[0].mxu0 %v789
        %v4801 = vpop.f32.mrb[0].mxu0
        %v4802 = vadd.f32 %v1400, %v4801
        %v4803 = vpop.f32.mrb[0].mxu0
        %v4804 = vadd.f32 %v1404, %v4803
        %v4805 = vpop.f32.mrb[0].mxu0
        %v4806 = vadd.f32 %v1400, %v4805
        %v4807 = vpop.f32.mrb[0].mxu0
        %v4808 = vadd.f32 %v1404, %v4807
        %4809 = vmatprep.mubr.bf16.mxu0 %v796
        %4810 = vmatmul.mubr.bf16.gmra.mrb[0].mxu0 %v795
        %v4811 = vpop.f32.mrb[0].mxu0
        %v4812 = vadd.f32 %v1400, %v4811
        %v4813 = vpop.f32.mrb[0].mxu0
        %v4814 = vadd.f32 %v1404, %v4813
        %v4815 = vpop.f32.mrb[0].mxu0
        %v4816 = vpop.f32.mrb[0].mxu0
        %4817 = vdwg.mxu0
        %4818 = vmatprep.subr.bf16.mxu0 %v3366
        %4819 = vmatpush1.bf16.msra.mxu0 %v3365
        %4820 = vmatprep.subr.bf16.mxu0 %v3378
        %4821 = vmatpush1.bf16.msra.mxu0 %v3377
        %4822 = vmatprep.subr.bf16.mxu0 %v3390
        %4823 = vmatpush1.bf16.msra.mxu0 %v3389
        %4824 = vmatprep.subr.bf16.mxu0 %v3402
        %4825 = vmatpush1.bf16.msra.mxu0 %v3401
        %4826 = vmatprep.subr.bf16.mxu0 %v3414
        %4827 = vmatpush1.bf16.msra.mxu0 %v3413
        %4828 = vmatprep.subr.bf16.mxu0 %v3426
        %4829 = vmatpush1.bf16.msra.mxu0 %v3425
        %4830 = vmatprep.subr.bf16.mxu0 %v3438
        %4831 = vmatpush1.bf16.msra.mxu0 %v3437
        %4832 = vmatprep.subr.bf16.mxu0 %v3450
        %4833 = vmatpush1.bf16.msra.mxu0 %v3449
        %4834 = vmatprep.subr.bf16.mxu0 %v3462
        %4835 = vmatpush1.bf16.msra.mxu0 %v3461
        %4836 = vmatprep.subr.bf16.mxu0 %v3474
        %4837 = vmatpush1.bf16.msra.mxu0 %v3473
        %4838 = vmatprep.subr.bf16.mxu0 %v3486
        %4839 = vmatpush1.bf16.msra.mxu0 %v3485
        %4840 = vmatprep.subr.bf16.mxu0 %v3498
        %4841 = vmatpush1.bf16.msra.mxu0 %v3497
        %4842 = vmatprep.subr.bf16.mxu0 %v3510
        %4843 = vmatpush1.bf16.msra.mxu0 %v3509
        %4844 = vmatprep.subr.bf16.mxu0 %v3522
        %4845 = vmatpush1.bf16.msra.mxu0 %v3521
        %4846 = vmatprep.subr.bf16.mxu0 %v3534
        %4847 = vmatpush1.bf16.msra.mxu0 %v3533
        %4848 = vmatprep.subr.bf16.mxu0 %v3546
        %4849 = vmatpush1.bf16.msra.mxu0 %v3545
        %4850 = vmatprep.mubr.bf16.mxu0 %v780
        %4851 = vmatmul.mubr.bf16.gmra.mrb[0].mxu0 %v779
        %v4852 = vpop.f32.mrb[0].mxu0
        %v4853 = vadd.f32 %v4782, %v4852
        %v4854 = vpop.f32.mrb[0].mxu0
        %v4855 = vadd.f32 %v4784, %v4854
        %v4856 = vpop.f32.mrb[0].mxu0
        %v4857 = vadd.f32 %v4786, %v4856
        %v4858 = vpop.f32.mrb[0].mxu0
        %v4859 = vadd.f32 %v4788, %v4858
        %4860 = vmatprep.mubr.bf16.mxu0 %v786
        %4861 = vmatmul.mubr.bf16.gmra.mrb[0].mxu0 %v785
        %v4862 = vpop.f32.mrb[0].mxu0
        %v4863 = vadd.f32 %v4792, %v4862
        %v4864 = vpop.f32.mrb[0].mxu0
        %v4865 = vadd.f32 %v4794, %v4864
        %v4866 = vpop.f32.mrb[0].mxu0
        %v4867 = vadd.f32 %v4796, %v4866
        %v4868 = vpop.f32.mrb[0].mxu0
        %v4869 = vadd.f32 %v4798, %v4868
        %4870 = vmatprep.mubr.bf16.mxu0 %v792
        %4871 = vmatmul.mubr.bf16.gmra.mrb[0].mxu0 %v791
        %v4872 = vpop.f32.mrb[0].mxu0
        %v4873 = vadd.f32 %v4802, %v4872
        %v4874 = vpop.f32.mrb[0].mxu0
        %v4875 = vadd.f32 %v4804, %v4874
        %v4876 = vpop.f32.mrb[0].mxu0
        %v4877 = vadd.f32 %v4806, %v4876
        %v4878 = vpop.f32.mrb[0].mxu0
        %v4879 = vadd.f32 %v4808, %v4878
        %4880 = vmatprep.mubr.bf16.mxu0 %v798
        %4881 = vmatmul.mubr.bf16.gmra.mrb[0].mxu0 %v797
        %v4882 = vpop.f32.mrb[0].mxu0
        %v4883 = vadd.f32 %v4812, %v4882
        %v4884 = vpop.f32.mrb[0].mxu0
        %v4885 = vadd.f32 %v4814, %v4884
        %v4886 = vpop.f32.mrb[0].mxu0
        %v4887 = vpop.f32.mrb[0].mxu0
        %4888 = vdwg.mxu0
        %4889 = vmatprep.subr.bf16.mxu0 %v3558
        %4890 = vmatpush1.bf16.msra.mxu0 %v3557
        %4891 = vmatprep.subr.bf16.mxu0 %v3570
        %4892 = vmatpush1.bf16.msra.mxu0 %v3569
        %4893 = vmatprep.subr.bf16.mxu0 %v3582
        %4894 = vmatpush1.bf16.msra.mxu0 %v3581
        %4895 = vmatprep.subr.bf16.mxu0 %v3594
        %4896 = vmatpush1.bf16.msra.mxu0 %v3593
        %4897 = vmatprep.subr.bf16.mxu0 %v3606
        %4898 = vmatpush1.bf16.msra.mxu0 %v3605
        %4899 = vmatprep.subr.bf16.mxu0 %v3618
        %4900 = vmatpush1.bf16.msra.mxu0 %v3617
        %4901 = vmatprep.subr.bf16.mxu0 %v3630
        %4902 = vmatpush1.bf16.msra.mxu0 %v3629
        %4903 = vmatprep.subr.bf16.mxu0 %v3642
        %4904 = vmatpush1.bf16.msra.mxu0 %v3641
        %4905 = vmatprep.subr.bf16.mxu0 %v3654
        %4906 = vmatpush1.bf16.msra.mxu0 %v3653
        %4907 = vmatprep.subr.bf16.mxu0 %v3666
        %4908 = vmatpush1.bf16.msra.mxu0 %v3665
        %4909 = vmatprep.subr.bf16.mxu0 %v3678
        %4910 = vmatpush1.bf16.msra.mxu0 %v3677
        %4911 = vmatprep.subr.bf16.mxu0 %v3690
        %4912 = vmatpush1.bf16.msra.mxu0 %v3689
        %4913 = vmatprep.subr.bf16.mxu0 %v3702
        %4914 = vmatpush1.bf16.msra.mxu0 %v3701
        %4915 = vmatprep.subr.bf16.mxu0 %v3714
        %4916 = vmatpush1.bf16.msra.mxu0 %v3713
        %4917 = vmatprep.subr.bf16.mxu0 %v3726
        %4918 = vmatpush1.bf16.msra.mxu0 %v3725
        %4919 = vmatprep.subr.bf16.mxu0 %v3738
        %4920 = vmatpush1.bf16.msra.mxu0 %v3737
        %4921 = vmatprep.mubr.bf16.mxu0 %v782
        %4922 = vmatmul.mubr.bf16.gmra.mrb[0].mxu0 %v781
        %v4923 = vpop.f32.mrb[0].mxu0
        %v4924 = vadd.f32 %v4853, %v4923
        %v4925 = vpop.f32.mrb[0].mxu0
        %v4926 = vadd.f32 %v4855, %v4925
        %v4927 = vpop.f32.mrb[0].mxu0
        %v4928 = vadd.f32 %v4857, %v4927
        %v4929 = vpop.f32.mrb[0].mxu0
        %v4930 = vadd.f32 %v4859, %v4929
        %4931 = vmatprep.mubr.bf16.mxu0 %v788
        %4932 = vmatmul.mubr.bf16.gmra.mrb[0].mxu0 %v787
        %v4933 = vpop.f32.mrb[0].mxu0
        %v4934 = vadd.f32 %v4863, %v4933
        %v4935 = vpop.f32.mrb[0].mxu0
        %v4936 = vadd.f32 %v4865, %v4935
        %v4937 = vpop.f32.mrb[0].mxu0
        %v4938 = vadd.f32 %v4867, %v4937
        %v4939 = vpop.f32.mrb[0].mxu0
        %v4940 = vadd.f32 %v4869, %v4939
        %4941 = vmatprep.mubr.bf16.mxu0 %v794
        %4942 = vmatmul.mubr.bf16.gmra.mrb[0].mxu0 %v793
        %v4943 = vpop.f32.mrb[0].mxu0
        %v4944 = vadd.f32 %v4873, %v4943
        %v4945 = vpop.f32.mrb[0].mxu0
        %v4946 = vadd.f32 %v4875, %v4945
        %v4947 = vpop.f32.mrb[0].mxu0
        %v4948 = vadd.f32 %v4877, %v4947
        %v4949 = vpop.f32.mrb[0].mxu0
        %v4950 = vadd.f32 %v4879, %v4949
        %4951 = vmatprep.mubr.bf16.mxu0 %v800
        %4952 = vmatmul.mubr.bf16.gmra.mrb[0].mxu0 %v799
        %v4953 = vpop.f32.mrb[0].mxu0
        %v4954 = vadd.f32 %v4883, %v4953
        %v4955 = vpop.f32.mrb[0].mxu0
        %v4956 = vadd.f32 %v4885, %v4955
        %v4957 = vpop.f32.mrb[0].mxu0
        %v4958 = vpop.f32.mrb[0].mxu0
        %4959 = vdwg.mxu0
        %4960 = vmatprep.subr.bf16.mxu0 %v3176
        %4961 = vmatpush1.bf16.msra.mxu0 %v3175
        %4962 = vmatprep.subr.bf16.mxu0 %v3188
        %4963 = vmatpush1.bf16.msra.mxu0 %v3187
        %4964 = vmatprep.subr.bf16.mxu0 %v3200
        %4965 = vmatpush1.bf16.msra.mxu0 %v3199
        %4966 = vmatprep.subr.bf16.mxu0 %v3212
        %4967 = vmatpush1.bf16.msra.mxu0 %v3211
        %4968 = vmatprep.subr.bf16.mxu0 %v3224
        %4969 = vmatpush1.bf16.msra.mxu0 %v3223
        %4970 = vmatprep.subr.bf16.mxu0 %v3236
        %4971 = vmatpush1.bf16.msra.mxu0 %v3235
        %4972 = vmatprep.subr.bf16.mxu0 %v3248
        %4973 = vmatpush1.bf16.msra.mxu0 %v3247
        %4974 = vmatprep.subr.bf16.mxu0 %v3260
        %4975 = vmatpush1.bf16.msra.mxu0 %v3259
        %4976 = vmatprep.subr.bf16.mxu0 %v3272
        %4977 = vmatpush1.bf16.msra.mxu0 %v3271
        %4978 = vmatprep.subr.bf16.mxu0 %v3284
        %4979 = vmatpush1.bf16.msra.mxu0 %v3283
        %4980 = vmatprep.subr.bf16.mxu0 %v3296
        %4981 = vmatpush1.bf16.msra.mxu0 %v3295
        %4982 = vmatprep.subr.bf16.mxu0 %v3308
        %4983 = vmatpush1.bf16.msra.mxu0 %v3307
        %4984 = vmatprep.subr.bf16.mxu0 %v3320
        %4985 = vmatpush1.bf16.msra.mxu0 %v3319
        %4986 = vmatprep.subr.bf16.mxu0 %v3332
        %4987 = vmatpush1.bf16.msra.mxu0 %v3331
        %4988 = vmatprep.subr.bf16.mxu0 %v3344
        %4989 = vmatpush1.bf16.msra.mxu0 %v3343
        %4990 = vmatprep.subr.bf16.mxu0 %v3356
        %4991 = vmatpush1.bf16.msra.mxu0 %v3355
        %4992 = vmatprep.mubr.bf16.mxu0 %v778
        %4993 = vmatmul.mubr.bf16.gmra.mrb[0].mxu0 %v777
        %v4994 = vpop.f32.mrb[0].mxu0
        %v4995 = vadd.f32 %v1408, %v4994
        %v4996 = vpop.f32.mrb[0].mxu0
        %v4997 = vadd.f32 %v1412, %v4996
        %v4998 = vpop.f32.mrb[0].mxu0
        %v4999 = vadd.f32 %v1408, %v4998
        %v5000 = vpop.f32.mrb[0].mxu0
        %v5001 = vadd.f32 %v1412, %v5000
        %5002 = vmatprep.mubr.bf16.mxu0 %v784
        %5003 = vmatmul.mubr.bf16.gmra.mrb[0].mxu0 %v783
        %v5004 = vpop.f32.mrb[0].mxu0
        %v5005 = vadd.f32 %v1408, %v5004
        %v5006 = vpop.f32.mrb[0].mxu0
        %v5007 = vadd.f32 %v1412, %v5006
        %v5008 = vpop.f32.mrb[0].mxu0
        %v5009 = vadd.f32 %v1408, %v5008
        %v5010 = vpop.f32.mrb[0].mxu0
        %v5011 = vadd.f32 %v1412, %v5010
        %5012 = vmatprep.mubr.bf16.mxu0 %v790
        %5013 = vmatmul.mubr.bf16.gmra.mrb[0].mxu0 %v789
        %v5014 = vpop.f32.mrb[0].mxu0
        %v5015 = vadd.f32 %v1408, %v5014
        %v5016 = vpop.f32.mrb[0].mxu0
        %v5017 = vadd.f32 %v1412, %v5016
        %v5018 = vpop.f32.mrb[0].mxu0
        %v5019 = vadd.f32 %v1408, %v5018
        %v5020 = vpop.f32.mrb[0].mxu0
        %v5021 = vadd.f32 %v1412, %v5020
        %5022 = vmatprep.mubr.bf16.mxu0 %v796
        %5023 = vmatmul.mubr.bf16.gmra.mrb[0].mxu0 %v795
        %v5024 = vpop.f32.mrb[0].mxu0
        %v5025 = vadd.f32 %v1408, %v5024
        %v5026 = vpop.f32.mrb[0].mxu0
        %v5027 = vadd.f32 %v1412, %v5026
        %v5028 = vpop.f32.mrb[0].mxu0
        %v5029 = vpop.f32.mrb[0].mxu0
        %5030 = vdwg.mxu0
        %5031 = vmatprep.subr.bf16.mxu0 %v3368
        %5032 = vmatpush1.bf16.msra.mxu0 %v3367
        %5033 = vmatprep.subr.bf16.mxu0 %v3380
        %5034 = vmatpush1.bf16.msra.mxu0 %v3379
        %5035 = vmatprep.subr.bf16.mxu0 %v3392
        %5036 = vmatpush1.bf16.msra.mxu0 %v3391
        %5037 = vmatprep.subr.bf16.mxu0 %v3404
        %5038 = vmatpush1.bf16.msra.mxu0 %v3403
        %5039 = vmatprep.subr.bf16.mxu0 %v3416
        %5040 = vmatpush1.bf16.msra.mxu0 %v3415
        %5041 = vmatprep.subr.bf16.mxu0 %v3428
        %5042 = vmatpush1.bf16.msra.mxu0 %v3427
        %5043 = vmatprep.subr.bf16.mxu0 %v3440
        %5044 = vmatpush1.bf16.msra.mxu0 %v3439
        %5045 = vmatprep.subr.bf16.mxu0 %v3452
        %5046 = vmatpush1.bf16.msra.mxu0 %v3451
        %5047 = vmatprep.subr.bf16.mxu0 %v3464
        %5048 = vmatpush1.bf16.msra.mxu0 %v3463
        %5049 = vmatprep.subr.bf16.mxu0 %v3476
        %5050 = vmatpush1.bf16.msra.mxu0 %v3475
        %5051 = vmatprep.subr.bf16.mxu0 %v3488
        %5052 = vmatpush1.bf16.msra.mxu0 %v3487
        %5053 = vmatprep.subr.bf16.mxu0 %v3500
        %5054 = vmatpush1.bf16.msra.mxu0 %v3499
        %5055 = vmatprep.subr.bf16.mxu0 %v3512
        %5056 = vmatpush1.bf16.msra.mxu0 %v3511
        %5057 = vmatprep.subr.bf16.mxu0 %v3524
        %5058 = vmatpush1.bf16.msra.mxu0 %v3523
        %5059 = vmatprep.subr.bf16.mxu0 %v3536
        %5060 = vmatpush1.bf16.msra.mxu0 %v3535
        %5061 = vmatprep.subr.bf16.mxu0 %v3548
        %5062 = vmatpush1.bf16.msra.mxu0 %v3547
        %5063 = vmatprep.mubr.bf16.mxu0 %v780
        %5064 = vmatmul.mubr.bf16.gmra.mrb[0].mxu0 %v779
        %v5065 = vpop.f32.mrb[0].mxu0
        %v5066 = vadd.f32 %v4995, %v5065
        %v5067 = vpop.f32.mrb[0].mxu0
        %v5068 = vadd.f32 %v4997, %v5067
        %v5069 = vpop.f32.mrb[0].mxu0
        %v5070 = vadd.f32 %v4999, %v5069
        %v5071 = vpop.f32.mrb[0].mxu0
        %v5072 = vadd.f32 %v5001, %v5071
        %5073 = vmatprep.mubr.bf16.mxu0 %v786
        %5074 = vmatmul.mubr.bf16.gmra.mrb[0].mxu0 %v785
        %v5075 = vpop.f32.mrb[0].mxu0
        %v5076 = vadd.f32 %v5005, %v5075
        %v5077 = vpop.f32.mrb[0].mxu0
        %v5078 = vadd.f32 %v5007, %v5077
        %v5079 = vpop.f32.mrb[0].mxu0
        %v5080 = vadd.f32 %v5009, %v5079
        %v5081 = vpop.f32.mrb[0].mxu0
        %v5082 = vadd.f32 %v5011, %v5081
        %5083 = vmatprep.mubr.bf16.mxu0 %v792
        %5084 = vmatmul.mubr.bf16.gmra.mrb[0].mxu0 %v791
        %v5085 = vpop.f32.mrb[0].mxu0
        %v5086 = vadd.f32 %v5015, %v5085
        %v5087 = vpop.f32.mrb[0].mxu0
        %v5088 = vadd.f32 %v5017, %v5087
        %v5089 = vpop.f32.mrb[0].mxu0
        %v5090 = vadd.f32 %v5019, %v5089
        %v5091 = vpop.f32.mrb[0].mxu0
        %v5092 = vadd.f32 %v5021, %v5091
        %5093 = vmatprep.mubr.bf16.mxu0 %v798
        %5094 = vmatmul.mubr.bf16.gmra.mrb[0].mxu0 %v797
        %v5095 = vpop.f32.mrb[0].mxu0
        %v5096 = vadd.f32 %v5025, %v5095
        %v5097 = vpop.f32.mrb[0].mxu0
        %v5098 = vadd.f32 %v5027, %v5097
        %v5099 = vpop.f32.mrb[0].mxu0
        %v5100 = vpop.f32.mrb[0].mxu0
        %5101 = vdwg.mxu0
        %5102 = vmatprep.subr.bf16.mxu0 %v3560
        %5103 = vmatpush1.bf16.msra.mxu0 %v3559
        %5104 = vmatprep.subr.bf16.mxu0 %v3572
        %5105 = vmatpush1.bf16.msra.mxu0 %v3571
        %5106 = vmatprep.subr.bf16.mxu0 %v3584
        %5107 = vmatpush1.bf16.msra.mxu0 %v3583
        %5108 = vmatprep.subr.bf16.mxu0 %v3596
        %5109 = vmatpush1.bf16.msra.mxu0 %v3595
        %5110 = vmatprep.subr.bf16.mxu0 %v3608
        %5111 = vmatpush1.bf16.msra.mxu0 %v3607
        %5112 = vmatprep.subr.bf16.mxu0 %v3620
        %5113 = vmatpush1.bf16.msra.mxu0 %v3619
        %5114 = vmatprep.subr.bf16.mxu0 %v3632
        %5115 = vmatpush1.bf16.msra.mxu0 %v3631
        %5116 = vmatprep.subr.bf16.mxu0 %v3644
        %5117 = vmatpush1.bf16.msra.mxu0 %v3643
        %5118 = vmatprep.subr.bf16.mxu0 %v3656
        %5119 = vmatpush1.bf16.msra.mxu0 %v3655
        %5120 = vmatprep.subr.bf16.mxu0 %v3668
        %5121 = vmatpush1.bf16.msra.mxu0 %v3667
        %5122 = vmatprep.subr.bf16.mxu0 %v3680
        %5123 = vmatpush1.bf16.msra.mxu0 %v3679
        %5124 = vmatprep.subr.bf16.mxu0 %v3692
        %5125 = vmatpush1.bf16.msra.mxu0 %v3691
        %5126 = vmatprep.subr.bf16.mxu0 %v3704
        %5127 = vmatpush1.bf16.msra.mxu0 %v3703
        %5128 = vmatprep.subr.bf16.mxu0 %v3716
        %5129 = vmatpush1.bf16.msra.mxu0 %v3715
        %5130 = vmatprep.subr.bf16.mxu0 %v3728
        %5131 = vmatpush1.bf16.msra.mxu0 %v3727
        %5132 = vmatprep.subr.bf16.mxu0 %v3740
        %5133 = vmatpush1.bf16.msra.mxu0 %v3739
        %5134 = vmatprep.mubr.bf16.mxu0 %v782
        %5135 = vmatmul.mubr.bf16.gmra.mrb[0].mxu0 %v781
        %v5136 = vpop.f32.mrb[0].mxu0
        %v5137 = vadd.f32 %v5066, %v5136
        %v5138 = vpop.f32.mrb[0].mxu0
        %v5139 = vadd.f32 %v5068, %v5138
        %v5140 = vpop.f32.mrb[0].mxu0
        %v5141 = vadd.f32 %v5070, %v5140
        %v5142 = vpop.f32.mrb[0].mxu0
        %v5143 = vadd.f32 %v5072, %v5142
        %5144 = vmatprep.mubr.bf16.mxu0 %v788
        %5145 = vmatmul.mubr.bf16.gmra.mrb[0].mxu0 %v787
        %v5146 = vpop.f32.mrb[0].mxu0
        %v5147 = vadd.f32 %v5076, %v5146
        %v5148 = vpop.f32.mrb[0].mxu0
        %v5149 = vadd.f32 %v5078, %v5148
        %v5150 = vpop.f32.mrb[0].mxu0
        %v5151 = vadd.f32 %v5080, %v5150
        %v5152 = vpop.f32.mrb[0].mxu0
        %v5153 = vadd.f32 %v5082, %v5152
        %5154 = vmatprep.mubr.bf16.mxu0 %v794
        %5155 = vmatmul.mubr.bf16.gmra.mrb[0].mxu0 %v793
        %v5156 = vpop.f32.mrb[0].mxu0
        %v5157 = vadd.f32 %v5086, %v5156
        %v5158 = vpop.f32.mrb[0].mxu0
        %v5159 = vadd.f32 %v5088, %v5158
        %v5160 = vpop.f32.mrb[0].mxu0
        %v5161 = vadd.f32 %v5090, %v5160
        %v5162 = vpop.f32.mrb[0].mxu0
        %v5163 = vadd.f32 %v5092, %v5162
        %5164 = vmatprep.mubr.bf16.mxu0 %v800
        %5165 = vmatmul.mubr.bf16.gmra.mrb[0].mxu0 %v799
        %v5166 = vpop.f32.mrb[0].mxu0
        %v5167 = vadd.f32 %v5096, %v5166
        %v5168 = vpop.f32.mrb[0].mxu0
        %v5169 = vadd.f32 %v5098, %v5168
        %v5170 = vpop.f32.mrb[0].mxu0
        %v5171 = vpop.f32.mrb[0].mxu0
        %5172 = vdwg.mxu0
        %5173 = vmatprep.subr.bf16.mxu0 %v3178
        %5174 = vmatpush1.bf16.msra.mxu0 %v3177
        %5175 = vmatprep.subr.bf16.mxu0 %v3190
        %5176 = vmatpush1.bf16.msra.mxu0 %v3189
        %5177 = vmatprep.subr.bf16.mxu0 %v3202
        %5178 = vmatpush1.bf16.msra.mxu0 %v3201
        %5179 = vmatprep.subr.bf16.mxu0 %v3214
        %5180 = vmatpush1.bf16.msra.mxu0 %v3213
        %5181 = vmatprep.subr.bf16.mxu0 %v3226
        %5182 = vmatpush1.bf16.msra.mxu0 %v3225
        %5183 = vmatprep.subr.bf16.mxu0 %v3238
        %5184 = vmatpush1.bf16.msra.mxu0 %v3237
        %5185 = vmatprep.subr.bf16.mxu0 %v3250
        %5186 = vmatpush1.bf16.msra.mxu0 %v3249
        %5187 = vmatprep.subr.bf16.mxu0 %v3262
        %5188 = vmatpush1.bf16.msra.mxu0 %v3261
        %5189 = vmatprep.subr.bf16.mxu0 %v3274
        %5190 = vmatpush1.bf16.msra.mxu0 %v3273
        %5191 = vmatprep.subr.bf16.mxu0 %v3286
        %5192 = vmatpush1.bf16.msra.mxu0 %v3285
        %5193 = vmatprep.subr.bf16.mxu0 %v3298
        %5194 = vmatpush1.bf16.msra.mxu0 %v3297
        %5195 = vmatprep.subr.bf16.mxu0 %v3310
        %5196 = vmatpush1.bf16.msra.mxu0 %v3309
        %5197 = vmatprep.subr.bf16.mxu0 %v3322
        %5198 = vmatpush1.bf16.msra.mxu0 %v3321
        %5199 = vmatprep.subr.bf16.mxu0 %v3334
        %5200 = vmatpush1.bf16.msra.mxu0 %v3333
        %5201 = vmatprep.subr.bf16.mxu0 %v3346
        %5202 = vmatpush1.bf16.msra.mxu0 %v3345
        %5203 = vmatprep.subr.bf16.mxu0 %v3358
        %5204 = vmatpush1.bf16.msra.mxu0 %v3357
        %5205 = vmatprep.mubr.bf16.mxu0 %v778
        %5206 = vmatmul.mubr.bf16.gmra.mrb[0].mxu0 %v777
        %v5207 = vpop.f32.mrb[0].mxu0
        %v5208 = vadd.f32 %v1416, %v5207
        %v5209 = vpop.f32.mrb[0].mxu0
        %v5210 = vadd.f32 %v1420, %v5209
        %v5211 = vpop.f32.mrb[0].mxu0
        %v5212 = vadd.f32 %v1416, %v5211
        %v5213 = vpop.f32.mrb[0].mxu0
        %v5214 = vadd.f32 %v1420, %v5213
        %5215 = vmatprep.mubr.bf16.mxu0 %v784
        %5216 = vmatmul.mubr.bf16.gmra.mrb[0].mxu0 %v783
        %v5217 = vpop.f32.mrb[0].mxu0
        %v5218 = vadd.f32 %v1416, %v5217
        %v5219 = vpop.f32.mrb[0].mxu0
        %v5220 = vadd.f32 %v1420, %v5219
        %v5221 = vpop.f32.mrb[0].mxu0
        %v5222 = vadd.f32 %v1416, %v5221
        %v5223 = vpop.f32.mrb[0].mxu0
        %v5224 = vadd.f32 %v1420, %v5223
        %5225 = vmatprep.mubr.bf16.mxu0 %v790
        %5226 = vmatmul.mubr.bf16.gmra.mrb[0].mxu0 %v789
        %v5227 = vpop.f32.mrb[0].mxu0
        %v5228 = vadd.f32 %v1416, %v5227
        %v5229 = vpop.f32.mrb[0].mxu0
        %v5230 = vadd.f32 %v1420, %v5229
        %v5231 = vpop.f32.mrb[0].mxu0
        %v5232 = vadd.f32 %v1416, %v5231
        %v5233 = vpop.f32.mrb[0].mxu0
        %v5234 = vadd.f32 %v1420, %v5233
        %5235 = vmatprep.mubr.bf16.mxu0 %v796
        %5236 = vmatmul.mubr.bf16.gmra.mrb[0].mxu0 %v795
        %v5237 = vpop.f32.mrb[0].mxu0
        %v5238 = vadd.f32 %v1416, %v5237
        %v5239 = vpop.f32.mrb[0].mxu0
        %v5240 = vadd.f32 %v1420, %v5239
        %v5241 = vpop.f32.mrb[0].mxu0
        %v5242 = vpop.f32.mrb[0].mxu0
        %5243 = vdwg.mxu0
        %5244 = vmatprep.subr.bf16.mxu0 %v3370
        %5245 = vmatpush1.bf16.msra.mxu0 %v3369
        %5246 = vmatprep.subr.bf16.mxu0 %v3382
        %5247 = vmatpush1.bf16.msra.mxu0 %v3381
        %5248 = vmatprep.subr.bf16.mxu0 %v3394
        %5249 = vmatpush1.bf16.msra.mxu0 %v3393
        %5250 = vmatprep.subr.bf16.mxu0 %v3406
        %5251 = vmatpush1.bf16.msra.mxu0 %v3405
        %5252 = vmatprep.subr.bf16.mxu0 %v3418
        %5253 = vmatpush1.bf16.msra.mxu0 %v3417
        %5254 = vmatprep.subr.bf16.mxu0 %v3430
        %5255 = vmatpush1.bf16.msra.mxu0 %v3429
        %5256 = vmatprep.subr.bf16.mxu0 %v3442
        %5257 = vmatpush1.bf16.msra.mxu0 %v3441
        %5258 = vmatprep.subr.bf16.mxu0 %v3454
        %5259 = vmatpush1.bf16.msra.mxu0 %v3453
        %5260 = vmatprep.subr.bf16.mxu0 %v3466
        %5261 = vmatpush1.bf16.msra.mxu0 %v3465
        %5262 = vmatprep.subr.bf16.mxu0 %v3478
        %5263 = vmatpush1.bf16.msra.mxu0 %v3477
        %5264 = vmatprep.subr.bf16.mxu0 %v3490
        %5265 = vmatpush1.bf16.msra.mxu0 %v3489
        %5266 = vmatprep.subr.bf16.mxu0 %v3502
        %5267 = vmatpush1.bf16.msra.mxu0 %v3501
        %5268 = vmatprep.subr.bf16.mxu0 %v3514
        %5269 = vmatpush1.bf16.msra.mxu0 %v3513
        %5270 = vmatprep.subr.bf16.mxu0 %v3526
        %5271 = vmatpush1.bf16.msra.mxu0 %v3525
        %5272 = vmatprep.subr.bf16.mxu0 %v3538
        %5273 = vmatpush1.bf16.msra.mxu0 %v3537
        %5274 = vmatprep.subr.bf16.mxu0 %v3550
        %5275 = vmatpush1.bf16.msra.mxu0 %v3549
        %5276 = vmatprep.mubr.bf16.mxu0 %v780
        %5277 = vmatmul.mubr.bf16.gmra.mrb[0].mxu0 %v779
        %v5278 = vpop.f32.mrb[0].mxu0
        %v5279 = vadd.f32 %v5208, %v5278
        %v5280 = vpop.f32.mrb[0].mxu0
        %v5281 = vadd.f32 %v5210, %v5280
        %v5282 = vpop.f32.mrb[0].mxu0
        %v5283 = vadd.f32 %v5212, %v5282
        %v5284 = vpop.f32.mrb[0].mxu0
        %v5285 = vadd.f32 %v5214, %v5284
        %5286 = vmatprep.mubr.bf16.mxu0 %v786
        %5287 = vmatmul.mubr.bf16.gmra.mrb[0].mxu0 %v785
        %v5288 = vpop.f32.mrb[0].mxu0
        %v5289 = vadd.f32 %v5218, %v5288
        %v5290 = vpop.f32.mrb[0].mxu0
        %v5291 = vadd.f32 %v5220, %v5290
        %v5292 = vpop.f32.mrb[0].mxu0
        %v5293 = vadd.f32 %v5222, %v5292
        %v5294 = vpop.f32.mrb[0].mxu0
        %v5295 = vadd.f32 %v5224, %v5294
        %5296 = vmatprep.mubr.bf16.mxu0 %v792
        %5297 = vmatmul.mubr.bf16.gmra.mrb[0].mxu0 %v791
        %v5298 = vpop.f32.mrb[0].mxu0
        %v5299 = vadd.f32 %v5228, %v5298
        %v5300 = vpop.f32.mrb[0].mxu0
        %v5301 = vadd.f32 %v5230, %v5300
        %v5302 = vpop.f32.mrb[0].mxu0
        %v5303 = vadd.f32 %v5232, %v5302
        %v5304 = vpop.f32.mrb[0].mxu0
        %v5305 = vadd.f32 %v5234, %v5304
        %5306 = vmatprep.mubr.bf16.mxu0 %v798
        %5307 = vmatmul.mubr.bf16.gmra.mrb[0].mxu0 %v797
        %v5308 = vpop.f32.mrb[0].mxu0
        %v5309 = vadd.f32 %v5238, %v5308
        %v5310 = vpop.f32.mrb[0].mxu0
        %v5311 = vadd.f32 %v5240, %v5310
        %v5312 = vpop.f32.mrb[0].mxu0
        %v5313 = vpop.f32.mrb[0].mxu0
        %5314 = vdwg.mxu0
        %5315 = vmatprep.subr.bf16.mxu0 %v3562
        %5316 = vmatpush1.bf16.msra.mxu0 %v3561
        %5317 = vmatprep.subr.bf16.mxu0 %v3574
        %5318 = vmatpush1.bf16.msra.mxu0 %v3573
        %5319 = vmatprep.subr.bf16.mxu0 %v3586
        %5320 = vmatpush1.bf16.msra.mxu0 %v3585
        %5321 = vmatprep.subr.bf16.mxu0 %v3598
        %5322 = vmatpush1.bf16.msra.mxu0 %v3597
        %5323 = vmatprep.subr.bf16.mxu0 %v3610
        %5324 = vmatpush1.bf16.msra.mxu0 %v3609
        %5325 = vmatprep.subr.bf16.mxu0 %v3622
        %5326 = vmatpush1.bf16.msra.mxu0 %v3621
        %5327 = vmatprep.subr.bf16.mxu0 %v3634
        %5328 = vmatpush1.bf16.msra.mxu0 %v3633
        %5329 = vmatprep.subr.bf16.mxu0 %v3646
        %5330 = vmatpush1.bf16.msra.mxu0 %v3645
        %5331 = vmatprep.subr.bf16.mxu0 %v3658
        %5332 = vmatpush1.bf16.msra.mxu0 %v3657
        %5333 = vmatprep.subr.bf16.mxu0 %v3670
        %5334 = vmatpush1.bf16.msra.mxu0 %v3669
        %5335 = vmatprep.subr.bf16.mxu0 %v3682
        %5336 = vmatpush1.bf16.msra.mxu0 %v3681
        %5337 = vmatprep.subr.bf16.mxu0 %v3694
        %5338 = vmatpush1.bf16.msra.mxu0 %v3693
        %5339 = vmatprep.subr.bf16.mxu0 %v3706
        %5340 = vmatpush1.bf16.msra.mxu0 %v3705
        %5341 = vmatprep.subr.bf16.mxu0 %v3718
        %5342 = vmatpush1.bf16.msra.mxu0 %v3717
        %5343 = vmatprep.subr.bf16.mxu0 %v3730
        %5344 = vmatpush1.bf16.msra.mxu0 %v3729
        %5345 = vmatprep.subr.bf16.mxu0 %v3742
        %5346 = vmatpush1.bf16.msra.mxu0 %v3741
        %5347 = vmatprep.mubr.bf16.mxu0 %v782
        %5348 = vmatmul.mubr.bf16.gmra.mrb[0].mxu0 %v781
        %v5349 = vpop.f32.mrb[0].mxu0
        %v5350 = vadd.f32 %v5279, %v5349
        %v5351 = vpop.f32.mrb[0].mxu0
        %v5352 = vadd.f32 %v5281, %v5351
        %v5353 = vpop.f32.mrb[0].mxu0
        %v5354 = vadd.f32 %v5283, %v5353
        %v5355 = vpop.f32.mrb[0].mxu0
        %v5356 = vadd.f32 %v5285, %v5355
        %5357 = vmatprep.mubr.bf16.mxu0 %v788
        %5358 = vmatmul.mubr.bf16.gmra.mrb[0].mxu0 %v787
        %v5359 = vpop.f32.mrb[0].mxu0
        %v5360 = vadd.f32 %v5289, %v5359
        %v5361 = vpop.f32.mrb[0].mxu0
        %v5362 = vadd.f32 %v5291, %v5361
        %v5363 = vpop.f32.mrb[0].mxu0
        %v5364 = vadd.f32 %v5293, %v5363
        %v5365 = vpop.f32.mrb[0].mxu0
        %v5366 = vadd.f32 %v5295, %v5365
        %5367 = vmatprep.mubr.bf16.mxu0 %v794
        %5368 = vmatmul.mubr.bf16.gmra.mrb[0].mxu0 %v793
        %v5369 = vpop.f32.mrb[0].mxu0
        %v5370 = vadd.f32 %v5299, %v5369
        %v5371 = vpop.f32.mrb[0].mxu0
        %v5372 = vadd.f32 %v5301, %v5371
        %v5373 = vpop.f32.mrb[0].mxu0
        %v5374 = vadd.f32 %v5303, %v5373
        %v5375 = vpop.f32.mrb[0].mxu0
        %v5376 = vadd.f32 %v5305, %v5375
        %5377 = vmatprep.mubr.bf16.mxu0 %v800
        %5378 = vmatmul.mubr.bf16.gmra.mrb[0].mxu0 %v799
        %v5379 = vpop.f32.mrb[0].mxu0
        %v5380 = vadd.f32 %v5309, %v5379
        %v5381 = vpop.f32.mrb[0].mxu0
        %v5382 = vadd.f32 %v5311, %v5381
        %v5383 = vpop.f32.mrb[0].mxu0
        %v5384 = vpop.f32.mrb[0].mxu0
        %5385 = vdwg.mxu0
        %5386 = vmatprep.subr.bf16.mxu0 %v3180
        %5387 = vmatpush1.bf16.msra.mxu0 %v3179
        %5388 = vmatprep.subr.bf16.mxu0 %v3192
        %5389 = vmatpush1.bf16.msra.mxu0 %v3191
        %5390 = vmatprep.subr.bf16.mxu0 %v3204
        %5391 = vmatpush1.bf16.msra.mxu0 %v3203
        %5392 = vmatprep.subr.bf16.mxu0 %v3216
        %5393 = vmatpush1.bf16.msra.mxu0 %v3215
        %5394 = vmatprep.subr.bf16.mxu0 %v3228
        %5395 = vmatpush1.bf16.msra.mxu0 %v3227
        %5396 = vmatprep.subr.bf16.mxu0 %v3240
        %5397 = vmatpush1.bf16.msra.mxu0 %v3239
        %5398 = vmatprep.subr.bf16.mxu0 %v3252
        %5399 = vmatpush1.bf16.msra.mxu0 %v3251
        %5400 = vmatprep.subr.bf16.mxu0 %v3264
        %5401 = vmatpush1.bf16.msra.mxu0 %v3263
        %5402 = vmatprep.subr.bf16.mxu0 %v3276
        %5403 = vmatpush1.bf16.msra.mxu0 %v3275
        %5404 = vmatprep.subr.bf16.mxu0 %v3288
        %5405 = vmatpush1.bf16.msra.mxu0 %v3287
        %5406 = vmatprep.subr.bf16.mxu0 %v3300
        %5407 = vmatpush1.bf16.msra.mxu0 %v3299
        %5408 = vmatprep.subr.bf16.mxu0 %v3312
        %5409 = vmatpush1.bf16.msra.mxu0 %v3311
        %5410 = vmatprep.subr.bf16.mxu0 %v3324
        %5411 = vmatpush1.bf16.msra.mxu0 %v3323
        %5412 = vmatprep.subr.bf16.mxu0 %v3336
        %5413 = vmatpush1.bf16.msra.mxu0 %v3335
        %5414 = vmatprep.subr.bf16.mxu0 %v3348
        %5415 = vmatpush1.bf16.msra.mxu0 %v3347
        %5416 = vmatprep.subr.bf16.mxu0 %v3360
        %5417 = vmatpush1.bf16.msra.mxu0 %v3359
        %5418 = vmatprep.mubr.bf16.mxu0 %v778
        %5419 = vmatmul.mubr.bf16.gmra.mrb[0].mxu0 %v777
        %v5420 = vpop.f32.mrb[0].mxu0
        %v5421 = vadd.f32 %v1424, %v5420
        %v5422 = vpop.f32.mrb[0].mxu0
        %v5423 = vadd.f32 %v1428, %v5422
        %v5424 = vpop.f32.mrb[0].mxu0
        %v5425 = vadd.f32 %v1424, %v5424
        %v5426 = vpop.f32.mrb[0].mxu0
        %v5427 = vadd.f32 %v1428, %v5426
        %5428 = vmatprep.mubr.bf16.mxu0 %v784
        %5429 = vmatmul.mubr.bf16.gmra.mrb[0].mxu0 %v783
        %v5430 = vpop.f32.mrb[0].mxu0
        %v5431 = vadd.f32 %v1424, %v5430
        %v5432 = vpop.f32.mrb[0].mxu0
        %v5433 = vadd.f32 %v1428, %v5432
        %v5434 = vpop.f32.mrb[0].mxu0
        %v5435 = vadd.f32 %v1424, %v5434
        %v5436 = vpop.f32.mrb[0].mxu0
        %v5437 = vadd.f32 %v1428, %v5436
        %5438 = vmatprep.mubr.bf16.mxu0 %v790
        %5439 = vmatmul.mubr.bf16.gmra.mrb[0].mxu0 %v789
        %v5440 = vpop.f32.mrb[0].mxu0
        %v5441 = vadd.f32 %v1424, %v5440
        %v5442 = vpop.f32.mrb[0].mxu0
        %v5443 = vadd.f32 %v1428, %v5442
        %v5444 = vpop.f32.mrb[0].mxu0
        %v5445 = vadd.f32 %v1424, %v5444
        %v5446 = vpop.f32.mrb[0].mxu0
        %v5447 = vadd.f32 %v1428, %v5446
        %5448 = vmatprep.mubr.bf16.mxu0 %v796
        %5449 = vmatmul.mubr.bf16.gmra.mrb[0].mxu0 %v795
        %v5450 = vpop.f32.mrb[0].mxu0
        %v5451 = vadd.f32 %v1424, %v5450
        %v5452 = vpop.f32.mrb[0].mxu0
        %v5453 = vadd.f32 %v1428, %v5452
        %v5454 = vpop.f32.mrb[0].mxu0
        %v5455 = vpop.f32.mrb[0].mxu0
        %5456 = vdwg.mxu0
        %5457 = vmatprep.subr.bf16.mxu0 %v3372
        %5458 = vmatpush1.bf16.msra.mxu0 %v3371
        %5459 = vmatprep.subr.bf16.mxu0 %v3384
        %5460 = vmatpush1.bf16.msra.mxu0 %v3383
        %5461 = vmatprep.subr.bf16.mxu0 %v3396
        %5462 = vmatpush1.bf16.msra.mxu0 %v3395
        %5463 = vmatprep.subr.bf16.mxu0 %v3408
        %5464 = vmatpush1.bf16.msra.mxu0 %v3407
        %5465 = vmatprep.subr.bf16.mxu0 %v3420
        %5466 = vmatpush1.bf16.msra.mxu0 %v3419
        %5467 = vmatprep.subr.bf16.mxu0 %v3432
        %5468 = vmatpush1.bf16.msra.mxu0 %v3431
        %5469 = vmatprep.subr.bf16.mxu0 %v3444
        %5470 = vmatpush1.bf16.msra.mxu0 %v3443
        %5471 = vmatprep.subr.bf16.mxu0 %v3456
        %5472 = vmatpush1.bf16.msra.mxu0 %v3455
        %5473 = vmatprep.subr.bf16.mxu0 %v3468
        %5474 = vmatpush1.bf16.msra.mxu0 %v3467
        %5475 = vmatprep.subr.bf16.mxu0 %v3480
        %5476 = vmatpush1.bf16.msra.mxu0 %v3479
        %5477 = vmatprep.subr.bf16.mxu0 %v3492
        %5478 = vmatpush1.bf16.msra.mxu0 %v3491
        %5479 = vmatprep.subr.bf16.mxu0 %v3504
        %5480 = vmatpush1.bf16.msra.mxu0 %v3503
        %5481 = vmatprep.subr.bf16.mxu0 %v3516
        %5482 = vmatpush1.bf16.msra.mxu0 %v3515
        %5483 = vmatprep.subr.bf16.mxu0 %v3528
        %5484 = vmatpush1.bf16.msra.mxu0 %v3527
        %5485 = vmatprep.subr.bf16.mxu0 %v3540
        %5486 = vmatpush1.bf16.msra.mxu0 %v3539
        %5487 = vmatprep.subr.bf16.mxu0 %v3552
        %5488 = vmatpush1.bf16.msra.mxu0 %v3551
        %5489 = vmatprep.mubr.bf16.mxu0 %v780
        %5490 = vmatmul.mubr.bf16.gmra.mrb[0].mxu0 %v779
        %v5491 = vpop.f32.mrb[0].mxu0
        %v5492 = vadd.f32 %v5421, %v5491
        %v5493 = vpop.f32.mrb[0].mxu0
        %v5494 = vadd.f32 %v5423, %v5493
        %v5495 = vpop.f32.mrb[0].mxu0
        %v5496 = vadd.f32 %v5425, %v5495
        %v5497 = vpop.f32.mrb[0].mxu0
        %v5498 = vadd.f32 %v5427, %v5497
        %5499 = vmatprep.mubr.bf16.mxu0 %v786
        %5500 = vmatmul.mubr.bf16.gmra.mrb[0].mxu0 %v785
        %v5501 = vpop.f32.mrb[0].mxu0
        %v5502 = vadd.f32 %v5431, %v5501
        %v5503 = vpop.f32.mrb[0].mxu0
        %v5504 = vadd.f32 %v5433, %v5503
        %v5505 = vpop.f32.mrb[0].mxu0
        %v5506 = vadd.f32 %v5435, %v5505
        %v5507 = vpop.f32.mrb[0].mxu0
        %v5508 = vadd.f32 %v5437, %v5507
        %5509 = vmatprep.mubr.bf16.mxu0 %v792
        %5510 = vmatmul.mubr.bf16.gmra.mrb[0].mxu0 %v791
        %v5511 = vpop.f32.mrb[0].mxu0
        %v5512 = vadd.f32 %v5441, %v5511
        %v5513 = vpop.f32.mrb[0].mxu0
        %v5514 = vadd.f32 %v5443, %v5513
        %v5515 = vpop.f32.mrb[0].mxu0
        %v5516 = vadd.f32 %v5445, %v5515
        %v5517 = vpop.f32.mrb[0].mxu0
        %v5518 = vadd.f32 %v5447, %v5517
        %5519 = vmatprep.mubr.bf16.mxu0 %v798
        %5520 = vmatmul.mubr.bf16.gmra.mrb[0].mxu0 %v797
        %v5521 = vpop.f32.mrb[0].mxu0
        %v5522 = vadd.f32 %v5451, %v5521
        %v5523 = vpop.f32.mrb[0].mxu0
        %v5524 = vadd.f32 %v5453, %v5523
        %v5525 = vpop.f32.mrb[0].mxu0
        %v5526 = vpop.f32.mrb[0].mxu0
        %5527 = vdwg.mxu0
        %5528 = vmatprep.subr.bf16.mxu0 %v3564
        %5529 = vmatpush1.bf16.msra.mxu0 %v3563
        %5530 = vmatprep.subr.bf16.mxu0 %v3576
        %5531 = vmatpush1.bf16.msra.mxu0 %v3575
        %5532 = vmatprep.subr.bf16.mxu0 %v3588
        %5533 = vmatpush1.bf16.msra.mxu0 %v3587
        %5534 = vmatprep.subr.bf16.mxu0 %v3600
        %5535 = vmatpush1.bf16.msra.mxu0 %v3599
        %5536 = vmatprep.subr.bf16.mxu0 %v3612
        %5537 = vmatpush1.bf16.msra.mxu0 %v3611
        %5538 = vmatprep.subr.bf16.mxu0 %v3624
        %5539 = vmatpush1.bf16.msra.mxu0 %v3623
        %5540 = vmatprep.subr.bf16.mxu0 %v3636
        %5541 = vmatpush1.bf16.msra.mxu0 %v3635
        %5542 = vmatprep.subr.bf16.mxu0 %v3648
        %5543 = vmatpush1.bf16.msra.mxu0 %v3647
        %5544 = vmatprep.subr.bf16.mxu0 %v3660
        %5545 = vmatpush1.bf16.msra.mxu0 %v3659
        %5546 = vmatprep.subr.bf16.mxu0 %v3672
        %5547 = vmatpush1.bf16.msra.mxu0 %v3671
        %5548 = vmatprep.subr.bf16.mxu0 %v3684
        %5549 = vmatpush1.bf16.msra.mxu0 %v3683
        %5550 = vmatprep.subr.bf16.mxu0 %v3696
        %5551 = vmatpush1.bf16.msra.mxu0 %v3695
        %5552 = vmatprep.subr.bf16.mxu0 %v3708
        %5553 = vmatpush1.bf16.msra.mxu0 %v3707
        %5554 = vmatprep.subr.bf16.mxu0 %v3720
        %5555 = vmatpush1.bf16.msra.mxu0 %v3719
        %5556 = vmatprep.subr.bf16.mxu0 %v3732
        %5557 = vmatpush1.bf16.msra.mxu0 %v3731
        %5558 = vmatprep.subr.bf16.mxu0 %v3744
        %5559 = vmatpush1.bf16.msra.mxu0 %v3743
        %5560 = vmatprep.mubr.bf16.mxu0 %v782
        %5561 = vmatmul.mubr.bf16.gmra.mrb[0].mxu0 %v781
        %v5562 = vpop.f32.mrb[0].mxu0
        %v5563 = vadd.f32 %v5492, %v5562
        %v5564 = vpop.f32.mrb[0].mxu0
        %v5565 = vadd.f32 %v5494, %v5564
        %v5566 = vpop.f32.mrb[0].mxu0
        %v5567 = vadd.f32 %v5496, %v5566
        %v5568 = vpop.f32.mrb[0].mxu0
        %v5569 = vadd.f32 %v5498, %v5568
        %5570 = vmatprep.mubr.bf16.mxu0 %v788
        %5571 = vmatmul.mubr.bf16.gmra.mrb[0].mxu0 %v787
        %v5572 = vpop.f32.mrb[0].mxu0
        %v5573 = vadd.f32 %v5502, %v5572
        %v5574 = vpop.f32.mrb[0].mxu0
        %v5575 = vadd.f32 %v5504, %v5574
        %v5576 = vpop.f32.mrb[0].mxu0
        %v5577 = vadd.f32 %v5506, %v5576
        %v5578 = vpop.f32.mrb[0].mxu0
        %v5579 = vadd.f32 %v5508, %v5578
        %5580 = vmatprep.mubr.bf16.mxu0 %v794
        %5581 = vmatmul.mubr.bf16.gmra.mrb[0].mxu0 %v793
        %v5582 = vpop.f32.mrb[0].mxu0
        %v5583 = vadd.f32 %v5512, %v5582
        %v5584 = vpop.f32.mrb[0].mxu0
        %v5585 = vadd.f32 %v5514, %v5584
        %v5586 = vpop.f32.mrb[0].mxu0
        %v5587 = vadd.f32 %v5516, %v5586
        %v5588 = vpop.f32.mrb[0].mxu0
        %v5589 = vadd.f32 %v5518, %v5588
        %5590 = vmatprep.mubr.bf16.mxu0 %v800
        %5591 = vmatmul.mubr.bf16.gmra.mrb[0].mxu0 %v799
        %v5592 = vpop.f32.mrb[0].mxu0
        %v5593 = vadd.f32 %v5522, %v5592
        %v5594 = vpop.f32.mrb[0].mxu0
        %v5595 = vadd.f32 %v5524, %v5594
        %v5596 = vpop.f32.mrb[0].mxu0
        %v5597 = vpop.f32.mrb[0].mxu0
        %5598 = vdwg.mxu0
        %5599 = vst [vmem:[%s317] sm:$0xff] %v4498
        %5600 = vst [vmem:[%s317 + $0x8] sm:$0xff] %v4500
        %5601 = vst [vmem:[%s317 + $0x10] sm:$0xff] %v4711
        %5602 = vst [vmem:[%s317 + $0x18] sm:$0xff] %v4713
        %5603 = vst [vmem:[%s317 + $0x20] sm:$0xff] %v4924
        %5604 = vst [vmem:[%s317 + $0x28] sm:$0xff] %v4926
        %5605 = vst [vmem:[%s317 + $0x30] sm:$0xff] %v5137
        %5606 = vst [vmem:[%s317 + $0x38] sm:$0xff] %v5139
        %5607 = vst [vmem:[%s317 + $0x40] sm:$0xff] %v5350
        %5608 = vst [vmem:[%s317 + $0x48] sm:$0xff] %v5352
        %5609 = vst [vmem:[%s317 + $0x50] sm:$0xff] %v5563
        %5610 = vst [vmem:[%s317 + $0x58] sm:$0xff] %v5565
        %5611 = vst [vmem:[%s317 + $0x60] sm:$0xff] %v4502
        %5612 = vst [vmem:[%s317 + $0x68] sm:$0xff] %v4504
        %5613 = vst [vmem:[%s317 + $0x70] sm:$0xff] %v4715
        %5614 = vst [vmem:[%s317 + $0x78] sm:$0xff] %v4717
        %5615 = vst [vmem:[%s317 + $0x80] sm:$0xff] %v4928
        %5616 = vst [vmem:[%s317 + $0x88] sm:$0xff] %v4930
        %5617 = vst [vmem:[%s317 + $0x90] sm:$0xff] %v5141
        %5618 = vst [vmem:[%s317 + $0x98] sm:$0xff] %v5143
        %5619 = vst [vmem:[%s317 + $0xa0] sm:$0xff] %v5354
        %5620 = vst [vmem:[%s317 + $0xa8] sm:$0xff] %v5356
        %5621 = vst [vmem:[%s317 + $0xb0] sm:$0xff] %v5567
        %5622 = vst [vmem:[%s317 + $0xb8] sm:$0xff] %v5569
        %5623 = vst [vmem:[%s317 + $0xc0] sm:$0xff] %v4508
        %5624 = vst [vmem:[%s317 + $0xc8] sm:$0xff] %v4510
        %5625 = vst [vmem:[%s317 + $0xd0] sm:$0xff] %v4721
        %5626 = vst [vmem:[%s317 + $0xd8] sm:$0xff] %v4723
        %5627 = vst [vmem:[%s317 + $0xe0] sm:$0xff] %v4934
        %5628 = vst [vmem:[%s317 + $0xe8] sm:$0xff] %v4936
        %5629 = vst [vmem:[%s317 + $0xf0] sm:$0xff] %v5147
        %5630 = vst [vmem:[%s317 + $0xf8] sm:$0xff] %v5149
        %5631 = vst [vmem:[%s317 + $0x100] sm:$0xff] %v5360
        %5632 = vst [vmem:[%s317 + $0x108] sm:$0xff] %v5362
        %5633 = vst [vmem:[%s317 + $0x110] sm:$0xff] %v5573
        %5634 = vst [vmem:[%s317 + $0x118] sm:$0xff] %v5575
        %5635 = vst [vmem:[%s317 + $0x120] sm:$0xff] %v4512
        %5636 = vst [vmem:[%s317 + $0x128] sm:$0xff] %v4514
        %5637 = vst [vmem:[%s317 + $0x130] sm:$0xff] %v4725
        %5638 = vst [vmem:[%s317 + $0x138] sm:$0xff] %v4727
        %5639 = vst [vmem:[%s317 + $0x140] sm:$0xff] %v4938
        %5640 = vst [vmem:[%s317 + $0x148] sm:$0xff] %v4940
        %5641 = vst [vmem:[%s317 + $0x150] sm:$0xff] %v5151
        %5642 = vst [vmem:[%s317 + $0x158] sm:$0xff] %v5153
        %5643 = vst [vmem:[%s317 + $0x160] sm:$0xff] %v5364
        %5644 = vst [vmem:[%s317 + $0x168] sm:$0xff] %v5366
        %5645 = vst [vmem:[%s317 + $0x170] sm:$0xff] %v5577
        %5646 = vst [vmem:[%s317 + $0x178] sm:$0xff] %v5579
        %5647 = vst [vmem:[%s317 + $0x180] sm:$0xff] %v4518
        %5648 = vst [vmem:[%s317 + $0x188] sm:$0xff] %v4520
        %5649 = vst [vmem:[%s317 + $0x190] sm:$0xff] %v4731
        %5650 = vst [vmem:[%s317 + $0x198] sm:$0xff] %v4733
        %5651 = vst [vmem:[%s317 + $0x1a0] sm:$0xff] %v4944
        %5652 = vst [vmem:[%s317 + $0x1a8] sm:$0xff] %v4946
        %5653 = vst [vmem:[%s317 + $0x1b0] sm:$0xff] %v5157
        %5654 = vst [vmem:[%s317 + $0x1b8] sm:$0xff] %v5159
        %5655 = vst [vmem:[%s317 + $0x1c0] sm:$0xff] %v5370
        %5656 = vst [vmem:[%s317 + $0x1c8] sm:$0xff] %v5372
        %5657 = vst [vmem:[%s317 + $0x1d0] sm:$0xff] %v5583
        %5658 = vst [vmem:[%s317 + $0x1d8] sm:$0xff] %v5585
        %5659 = vst [vmem:[%s317 + $0x1e0] sm:$0xff] %v4522
        %5660 = vst [vmem:[%s317 + $0x1e8] sm:$0xff] %v4524
        %5661 = vst [vmem:[%s317 + $0x1f0] sm:$0xff] %v4735
        %5662 = vst [vmem:[%s317 + $0x1f8] sm:$0xff] %v4737
        %5663 = vst [vmem:[%s317 + $0x200] sm:$0xff] %v4948
        %5664 = vst [vmem:[%s317 + $0x208] sm:$0xff] %v4950
        %5665 = vst [vmem:[%s317 + $0x210] sm:$0xff] %v5161
        %5666 = vst [vmem:[%s317 + $0x218] sm:$0xff] %v5163
        %5667 = vst [vmem:[%s317 + $0x220] sm:$0xff] %v5374
        %5668 = vst [vmem:[%s317 + $0x228] sm:$0xff] %v5376
        %5669 = vst [vmem:[%s317 + $0x230] sm:$0xff] %v5587
        %5670 = vst [vmem:[%s317 + $0x238] sm:$0xff] %v5589
        %5671 = vst [vmem:[%s317 + $0x240] sm:$0x1] %v4528
        %5672 = vst [vmem:[%s317 + $0x248] sm:$0x1] %v4530
        %5673 = vst [vmem:[%s317 + $0x250] sm:$0x1] %v4741
        %5674 = vst [vmem:[%s317 + $0x258] sm:$0x1] %v4743
        %5675 = vst [vmem:[%s317 + $0x260] sm:$0x1] %v4954
        %5676 = vst [vmem:[%s317 + $0x268] sm:$0x1] %v4956
        %5677 = vst [vmem:[%s317 + $0x270] sm:$0x1] %v5167
        %5678 = vst [vmem:[%s317 + $0x278] sm:$0x1] %v5169
        %5679 = vst [vmem:[%s317 + $0x280] sm:$0x1] %v5380
        %5680 = vst [vmem:[%s317 + $0x288] sm:$0x1] %v5382
        %5681 = vst [vmem:[%s317 + $0x290] sm:$0x1] %v5593
        %5682 = vst [vmem:[%s317 + $0x298] sm:$0x1] %v5595
        %s5683 = sand.u32 %s147, 1
        %s5684 = scalar_lea.sflag [#allocation4], %s5683
        %s5685 = sand.u32 %s147, 1
        %s5686 = smul.addr %s5685, 672
        %s5687 = scalar_lea.vmem [#allocation11], %s5686
        // Predicated region
        $region61: #{tpu_custom_call.1} parent=39 // pred_check
          %p5688 = pneg %p157
        $region62: #{tpu_custom_call.1} parent=39 // pred_check_branch
          %5690 = sbr.rel (%p5688) target = $region64
        $region63: #{tpu_custom_call.1} parent=39 // pred_region
          %s5691 = smul.u32 12, %s24
          %s5693 = ssub.s32 10752, 10752
          %5694 = vsyncadd %s5684, %s5693
          %s5695 = smul.addr %s5691, 128
          %s5696 = scalar_lea.hbm %s5, %s5695
          %s5697 = sshll.u32 %s5687, 4
          %s5698 = int_to_ptr.vmem [resolvable:$true] %s5697
          %5703 = dma.vmem_to_hbm [thread:$0]  %s5698, 10752, %s5696, %s5684, 1536, 3072, 96
        $region64: #{tpu_custom_call.1} parent=39 // pred_fallthru
          _
      $region40: #{tpu_custom_call.1} parent=5 // pred_fallthru
        _
      %p5704 = scmp.le.s32.totalorder 2, %s19
      // Predicated region
      $region65: #{tpu_custom_call.1} parent=5 // pred_check
        %p5705 = pneg %p5704
      $region66: #{tpu_custom_call.1} parent=5 // pred_check_branch
        %5707 = sbr.rel (%p5705) target = $region68
      $region67: #{tpu_custom_call.1} parent=5 // pred_region
        %s5708 = ssub.s32 %s19, 2
        // Predicated region
        $region69: #{tpu_custom_call.1} parent=67 // pred_check
          %p5709 = pneg %p163
        $region70: #{tpu_custom_call.1} parent=67 // pred_check_branch
          %5711 = sbr.rel (%p5709) target = $region72
        $region71: #{tpu_custom_call.1} parent=67 // pred_region
          %s5712 = sand.u32 %s148, 1
          %s5713 = scalar_lea.sflag [#allocation4], %s5712
          %s5714 = sand.u32 %s148, 1
          %s5715 = smul.addr %s5714, 672
          %s5716 = scalar_lea.vmem [#allocation11], %s5715
          %5717 = dma.done %s5713, 10752
        $region72: #{tpu_custom_call.1} parent=67 // pred_fallthru
          _
      $region68: #{tpu_custom_call.1} parent=5 // pred_fallthru
        _
    $region6: #{tpu_custom_call.1} parent=1 // loop_footer
      %s23 = sadd.s32 1, %s19
    $region7: #{tpu_custom_call.1} parent=1 // loop_footer_branch
      %18 = sbr.rel target = $region3
    $region8: #{tpu_custom_call.1} parent=1 // loop_exit
      _
    %5718 = vsyncpa [#allocation3], 1
    %s5719 = scalar_lea.sflag [#allocation3], 1
    %5720 = vsyncpa %s5719, 1
    %5721 = vsyncpa [#allocation6], 1
    %5722 = vsyncpa [#allocation9], 1
    %s5723 = scalar_lea.sflag [#allocation9], 1
    %5724 = vsyncpa %s5723, 1
    %5725 = vsyncpa [#allocation4], 1
    %s5726 = scalar_lea.sflag [#allocation4], 1
    %5727 = vsyncpa %s5726, 1

</llo_original>
